<compile_context>
chip_gen: v6e
topology: v6e:2x2x1
jax: 0.10.0
libtpu: 0.0.40
codegen_flags: <defaults>
</compile_context>

<pallas_src>
import jax
import jax.numpy as jnp
from jax.experimental import pallas as pl
from jax.experimental.pallas import tpu as pltpu


# ----------------------------------------------------------------------------
# Pallas kernel: one F-tile of a FlipoutLinear layer
# ----------------------------------------------------------------------------
def _flipout_linear_kernel(xs_ref,                      # (2*Bp, K)  [x ; x*in_sign]
                           wmu_ref, wrho_ref, rw_ref,   # (K, TF)
                           bmu_ref, brho_ref, rb_ref,   # (1, TF)
                           osign_ref,                   # (Bp, TF)
                           o_ref):                      # (Bp, TF)
    def softplus(v):  # stable: max(v,0) + log1p(exp(-|v|))
        return jnp.maximum(v, 0.0) + jnp.log1p(jnp.exp(-jnp.abs(v)))

    # sampled weight / bias (full sampled w used for both paths, like the ref)
    w = wmu_ref[...] + rw_ref[...] * softplus(wrho_ref[...])      # (K, TF)
    b = bmu_ref[...] + rb_ref[...] * softplus(brho_ref[...])      # (1, TF)

    # single stacked MXU pass: [x ; x*in_sign] @ w
    acc = jnp.dot(xs_ref[...], w, preferred_element_type=jnp.float32)  # (2Bp, TF)

    bp = o_ref.shape[0]
    # mean path (+bias)  +  sign-modulated perturbation path
    o_ref[...] = acc[:bp, :] + b + acc[bp:, :] * osign_ref[...]


# ----------------------------------------------------------------------------
# Parameter init: build params ONCE in the (K, F_pad) layout the kernel wants.
# Matches the torch module's initialization (transposed layout is equivalent
# since init is i.i.d.).  Padded columns get mu=0 / rho=-20 (sigma ~ 2e-9).
# ----------------------------------------------------------------------------
def init_flipout_params(key, in_features, out_features):
    f_pad = ((out_features + 127) // 128) * 128
    k1, k2, k3, k4 = jax.random.split(key, 4)
    wmu = jnp.zeros((in_features, f_pad), jnp.float32).at[:, :out_features].set(
        0.01 * jax.random.normal(k1, (in_features, out_features), jnp.float32))
    wrho = jnp.full((in_features, f_pad), -20.0, jnp.float32).at[:, :out_features].set(
        -5.0 + 0.01 * jax.random.normal(k2, (in_features, out_features), jnp.float32))
    bmu = jnp.zeros((1, f_pad), jnp.float32).at[:, :out_features].set(
        0.01 * jax.random.normal(k3, (1, out_features), jnp.float32))
    brho = jnp.full((1, f_pad), -20.0, jnp.float32).at[:, :out_features].set(
        -5.0 + 0.01 * jax.random.normal(k4, (1, out_features), jnp.float32))
    return {"wmu_t": wmu, "wrho_t": wrho, "bmu": bmu, "brho": brho,
            "out_features": out_features}


def params_from_torch_layout(weight_mu, weight_rho, bias_mu, bias_rho):
    """One-time conversion of torch-layout (out,in) params to kernel layout."""
    f_out, k = weight_mu.shape
    f_pad = ((f_out + 127) // 128) * 128
    return {
        "wmu_t": jnp.zeros((k, f_pad), jnp.float32).at[:, :f_out].set(weight_mu.T),
        "wrho_t": jnp.full((k, f_pad), -20.0, jnp.float32).at[:, :f_out].set(weight_rho.T),
        "bmu": jnp.zeros((1, f_pad), jnp.float32).at[:, :f_out].set(bias_mu[None, :]),
        "brho": jnp.full((1, f_pad), -20.0, jnp.float32).at[:, :f_out].set(bias_rho[None, :]),
        "out_features": f_out,
    }


# ----------------------------------------------------------------------------
# Noise sampling (one jax.random draw per forward call, like the torch module)
# ----------------------------------------------------------------------------
def sample_flipout_noise(key, batch, params):
    k, f_pad = params["wmu_t"].shape
    kw, kb, kis, kos = jax.random.split(key, 4)
    r_w = jax.random.normal(kw, (k, f_pad), jnp.float32)
    r_b = jax.random.normal(kb, (1, f_pad), jnp.float32)
    in_sign = jnp.where(jax.random.bernoulli(kis, 0.5, (batch, k)),
                        1.0, -1.0).astype(jnp.float32)
    out_sign = jnp.where(jax.random.bernoulli(kos, 0.5, (batch, f_pad)),
                         1.0, -1.0).astype(jnp.float32)
    return r_w, r_b, in_sign, out_sign


def _pick_tile(f_pad, max_tile):
    t = min(max_tile, f_pad)
    t -= t % 128
    t = max(t, 128)
    while f_pad % t != 0:
        t -= 128
    return t


# ----------------------------------------------------------------------------
# Wrapper: pad batch to 8 sublanes, tile F on a "parallel" grid
# ----------------------------------------------------------------------------
def flipout_linear(x, params, key=None, noise=None, *, max_tile_f=256):
    """FlipoutLinear.forward.  `params` is in kernel layout (see init above)."""
    if noise is None:
        assert key is not None, "pass either `key` or pre-sampled `noise`"
        noise = sample_flipout_noise(key, x.shape[0], params)
    r_w, r_b, in_sign, out_sign = noise

    wmu_t, wrho_t = params["wmu_t"], params["wrho_t"]
    bmu, brho = params["bmu"], params["brho"]
    f_out = params["out_features"]

    b, k = x.shape
    k2, f_pad = wmu_t.shape
    assert k == k2, (k, k2)

    # pad batch to a sublane multiple so slices/stores are full-tile
    b_pad = ((b + 7) // 8) * 8
    x_pad = jnp.zeros((b_pad, k), jnp.float32).at[:b].set(x)
    is_pad = jnp.ones((b_pad, k), jnp.float32).at[:b].set(in_sign)
    os_pad = jnp.ones((b_pad, f_pad), jnp.float32).at[:b].set(out_sign)

    # hoisted input-sign path: stacked operand shared by mean + perturbation
    xs = jnp.concatenate([x_pad, x_pad * is_pad], axis=0)        # (2*b_pad, k)

    tile_f = _pick_tile(f_pad, max_tile_f)
    grid = (f_pad // tile_f,)

    out = pl.pallas_call(
        _flipout_linear_kernel,
        out_shape=jax.ShapeDtypeStruct((b_pad, f_pad), jnp.float32),
        grid_spec=pltpu.PrefetchScalarGridSpec(
            num_scalar_prefetch=0,
            grid=grid,
            in_specs=[
                pl.BlockSpec((2 * b_pad, k), lambda f: (0, 0)),     # xs (resident)
                pl.BlockSpec((k, tile_f), lambda f: (0, f)),        # weight_mu^T
                pl.BlockSpec((k, tile_f), lambda f: (0, f)),        # weight_rho^T
                pl.BlockSpec((k, tile_f), lambda f: (0, f)),        # r_w
                pl.BlockSpec((1, tile_f), lambda f: (0, f)),        # bias_mu
                pl.BlockSpec((1, tile_f), lambda f: (0, f)),        # bias_rho
                pl.BlockSpec((1, tile_f), lambda f: (0, f)),        # r_b
                pl.BlockSpec((b_pad, tile_f), lambda f: (0, f)),    # out_sign
            ],
            out_specs=pl.BlockSpec((b_pad, tile_f), lambda f: (0, f)),
        ),
        compiler_params=pltpu.CompilerParams(
            dimension_semantics=("parallel",),
            vmem_limit_bytes=32 << 20),
    )(xs, wmu_t, wrho_t, r_w, bmu, brho, r_b, os_pad)
    return out[:b, :f_out]


# ----------------------------------------------------------------------------
# Pure-JAX reference (same sampled noise) and KL loss
# ----------------------------------------------------------------------------
def flipout_linear_reference(x, params, noise):
    r_w, r_b, in_sign, out_sign = noise
    f_out = params["out_features"]
    w = params["wmu_t"] + r_w * jax.nn.softplus(params["wrho_t"])
    bias = params["bmu"] + r_b * jax.nn.softplus(params["brho"])
    mean = x @ w + bias
    pert = ((x * in_sign) @ w) * out_sign
    return (mean + pert)[:, :f_out]


# TODO(synk): kl_loss() is a tiny pure parameter reduction (no data path);
#             left to plain XLA rather than a Pallas kernel.
def kl_loss(params, prior_sigma=1.0):
    f_out = params["out_features"]
    wmu, wrho = params["wmu_t"][:, :f_out], params["wrho_t"][:, :f_out]
    bmu, brho = params["bmu"][:, :f_out], params["brho"][:, :f_out]
    ws, bs = jax.nn.softplus(wrho), jax.nn.softplus(brho)
    kl_w = 0.5 * jnp.sum(jnp.log1p(ws ** 2 / prior_sigma ** 2)
                         + wmu ** 2 / prior_sigma ** 2 - 1.0)
    kl_b = 0.5 * jnp.sum(jnp.log1p(bs ** 2 / prior_sigma ** 2)
                         + bmu ** 2 / prior_sigma ** 2 - 1.0)
    return kl_w + kl_b


if __name__ == "__main__":
    root = jax.random.PRNGKey(0)
    kx, kp1, kp2, kn1, kn2 = jax.random.split(root, 5)

    # Small two-layer MLP shapes consistent with the source model (head = 10).
    B, IN1, OUT1, OUT2 = 2, 512, 512, 10
    x = jax.random.normal(kx, (B, IN1), jnp.float32)
    p1 = init_flipout_params(kp1, IN1, OUT1)   # FlipoutLinear(512, 512)
    p2 = init_flipout_params(kp2, OUT1, OUT2)  # FlipoutLinear(512, 10)

    # Sample noise once so kernel and reference see identical randomness.
    n1 = sample_flipout_noise(kn1, B, p1)
    n2 = sample_flipout_noise(kn2, B, p2)

    @jax.jit
    def fwd(x, n1, n2):
        h = flipout_linear(x, p1, noise=n1)
        y = flipout_linear(h, p2, noise=n2)
        return h, y

    h, y = jax.block_until_ready(fwd(x, n1, n2))

    h_ref = flipout_linear_reference(x, p1, n1)
    y_ref = flipout_linear_reference(h_ref, p2, n2)

    assert h.shape == (B, OUT1), h.shape
    assert y.shape == (B, OUT2), y.shape
    assert bool(jnp.all(jnp.isfinite(h))) and bool(jnp.all(jnp.isfinite(y)))
    assert bool(jnp.allclose(h, h_ref, rtol=1e-4, atol=1e-4)), \
        float(jnp.max(jnp.abs(h - h_ref)))
    assert bool(jnp.allclose(y, y_ref, rtol=1e-4, atol=1e-4)), \
        float(jnp.max(jnp.abs(y - y_ref)))
    _ = jax.block_until_ready(kl_loss(p1) + kl_loss(p2))
    print("KERNEL_OK")
</pallas_src>

<mosaic_0001>
module attributes {stable_mosaic.version = 11 : i64} {
  func.func @_flipout_linear_kernel(%arg0: i32, %arg1: memref<16x512xf32, #tpu.memory_space<vmem>>, %arg2: memref<512x256xf32, #tpu.memory_space<vmem>>, %arg3: memref<512x256xf32, #tpu.memory_space<vmem>>, %arg4: memref<512x256xf32, #tpu.memory_space<vmem>>, %arg5: memref<1x256xf32, #tpu.memory_space<vmem>>, %arg6: memref<1x256xf32, #tpu.memory_space<vmem>>, %arg7: memref<1x256xf32, #tpu.memory_space<vmem>>, %arg8: memref<8x256xf32, #tpu.memory_space<vmem>>, %arg9: memref<8x256xf32, #tpu.memory_space<vmem>>) attributes {dimension_semantics = [#tpu.dimension_semantics<parallel>], iteration_bounds = array<i64: 2>, scalar_prefetch = 0 : i64, scratch_operands = 0 : i64, tpu.core_type = #tpu.core_type<tc>, window_params = [{pipeline_mode = #tpu.pipeline_mode<synchronous>, transform_indices = @transform_0, window_bounds = array<i64: 16, 512>}, {transform_indices = @transform_1, window_bounds = array<i64: 512, 256>}, {transform_indices = @transform_2, window_bounds = array<i64: 512, 256>}, {transform_indices = @transform_3, window_bounds = array<i64: 512, 256>}, {transform_indices = @transform_4, window_bounds = array<i64: 1, 256>}, {transform_indices = @transform_5, window_bounds = array<i64: 1, 256>}, {transform_indices = @transform_6, window_bounds = array<i64: 1, 256>}, {transform_indices = @transform_7, window_bounds = array<i64: 8, 256>}, {transform_indices = @transform_8, window_bounds = array<i64: 8, 256>}]} {
    %c0 = arith.constant 0 : index
    %c0_0 = arith.constant 0 : index
    %0 = vector.load %arg2[%c0, %c0_0] : memref<512x256xf32, #tpu.memory_space<vmem>>, vector<512x256xf32>
    %c0_1 = arith.constant 0 : index
    %c0_2 = arith.constant 0 : index
    %1 = vector.load %arg4[%c0_1, %c0_2] : memref<512x256xf32, #tpu.memory_space<vmem>>, vector<512x256xf32>
    %c0_3 = arith.constant 0 : index
    %c0_4 = arith.constant 0 : index
    %2 = vector.load %arg3[%c0_3, %c0_4] : memref<512x256xf32, #tpu.memory_space<vmem>>, vector<512x256xf32>
    %cst = arith.constant 0.000000e+00 : f32
    %3 = vector.broadcast %cst : f32 to vector<512x256xf32>
    %4 = arith.maximumf %2, %3 : vector<512x256xf32>
    %5 = math.absf %2 : vector<512x256xf32>
    %cst_5 = arith.constant 0.000000e+00 : f32
    %6 = vector.broadcast %cst_5 : f32 to vector<512x256xf32>
    %7 = arith.subf %6, %5 : vector<512x256xf32>
    %8 = math.exp %7 : vector<512x256xf32>
    %9 = math.log1p %8 : vector<512x256xf32>
    %10 = arith.addf %4, %9 : vector<512x256xf32>
    %11 = arith.mulf %1, %10 : vector<512x256xf32>
    %12 = arith.addf %0, %11 : vector<512x256xf32>
    %c0_6 = arith.constant 0 : index
    %c0_7 = arith.constant 0 : index
    %13 = vector.load %arg5[%c0_6, %c0_7] : memref<1x256xf32, #tpu.memory_space<vmem>>, vector<1x256xf32>
    %c0_8 = arith.constant 0 : index
    %c0_9 = arith.constant 0 : index
    %14 = vector.load %arg7[%c0_8, %c0_9] : memref<1x256xf32, #tpu.memory_space<vmem>>, vector<1x256xf32>
    %c0_10 = arith.constant 0 : index
    %c0_11 = arith.constant 0 : index
    %15 = vector.load %arg6[%c0_10, %c0_11] : memref<1x256xf32, #tpu.memory_space<vmem>>, vector<1x256xf32>
    %cst_12 = arith.constant 0.000000e+00 : f32
    %16 = vector.broadcast %cst_12 : f32 to vector<1x256xf32>
    %17 = arith.maximumf %15, %16 : vector<1x256xf32>
    %18 = math.absf %15 : vector<1x256xf32>
    %cst_13 = arith.constant 0.000000e+00 : f32
    %19 = vector.broadcast %cst_13 : f32 to vector<1x256xf32>
    %20 = arith.subf %19, %18 : vector<1x256xf32>
    %21 = math.exp %20 : vector<1x256xf32>
    %22 = math.log1p %21 : vector<1x256xf32>
    %23 = arith.addf %17, %22 : vector<1x256xf32>
    %24 = arith.mulf %14, %23 : vector<1x256xf32>
    %25 = arith.addf %13, %24 : vector<1x256xf32>
    %c0_14 = arith.constant 0 : index
    %c0_15 = arith.constant 0 : index
    %26 = vector.load %arg1[%c0_14, %c0_15] : memref<16x512xf32, #tpu.memory_space<vmem>>, vector<16x512xf32>
    %cst_16 = arith.constant dense<0.000000e+00> : vector<16x256xf32>
    %27 = tpu.matmul %26, %12, %cst_16 {dimension_numbers = #tpu.dot_dimension_numbers<[1], [0], [0], [1], [0, 0, 1, 1], [], []>} : vector<16x512xf32>, vector<512x256xf32>, vector<16x256xf32> -> vector<16x256xf32>
    %28 = vector.extract_strided_slice %27 {offsets = [0, 0], sizes = [8, 256], strides = [1, 1]} : vector<16x256xf32> to vector<8x256xf32>
    %29 = vector.broadcast %25 : vector<1x256xf32> to vector<8x256xf32>
    %30 = arith.addf %28, %29 : vector<8x256xf32>
    %31 = vector.extract_strided_slice %27 {offsets = [8, 0], sizes = [8, 256], strides = [1, 1]} : vector<16x256xf32> to vector<8x256xf32>
    %c0_17 = arith.constant 0 : index
    %c0_18 = arith.constant 0 : index
    %32 = vector.load %arg8[%c0_17, %c0_18] : memref<8x256xf32, #tpu.memory_space<vmem>>, vector<8x256xf32>
    %33 = arith.mulf %31, %32 : vector<8x256xf32>
    %34 = arith.addf %30, %33 : vector<8x256xf32>
    %c0_19 = arith.constant 0 : index
    %c0_20 = arith.constant 0 : index
    %35 = vector.load %arg9[%c0_19, %c0_20] : memref<8x256xf32, #tpu.memory_space<vmem>>, vector<8x256xf32>
    tpu.vector_store %arg9[%c0_19, %c0_20], %34 {strides = array<i32>} : memref<8x256xf32, #tpu.memory_space<vmem>>, vector<8x256xf32>,
    return
  }
  func.func @transform_0(%arg0: i32) -> (i32, i32) {
    %c0_i32 = arith.constant 0 : i32
    %c0_i32_0 = arith.constant 0 : i32
    %c0_i32_1 = arith.constant 0 : i32
    return %c0_i32, %c0_i32_0 : i32, i32
  }
  func.func @transform_1(%arg0: i32) -> (i32, i32) {
    %c0_i32 = arith.constant 0 : i32
    %c0_i32_0 = arith.constant 0 : i32
    return %c0_i32, %arg0 : i32, i32
  }
  func.func @transform_2(%arg0: i32) -> (i32, i32) {
    %c0_i32 = arith.constant 0 : i32
    %c0_i32_0 = arith.constant 0 : i32
    return %c0_i32, %arg0 : i32, i32
  }
  func.func @transform_3(%arg0: i32) -> (i32, i32) {
    %c0_i32 = arith.constant 0 : i32
    %c0_i32_0 = arith.constant 0 : i32
    return %c0_i32, %arg0 : i32, i32
  }
  func.func @transform_4(%arg0: i32) -> (i32, i32) {
    %c0_i32 = arith.constant 0 : i32
    %c0_i32_0 = arith.constant 0 : i32
    return %c0_i32, %arg0 : i32, i32
  }
  func.func @transform_5(%arg0: i32) -> (i32, i32) {
    %c0_i32 = arith.constant 0 : i32
    %c0_i32_0 = arith.constant 0 : i32
    return %c0_i32, %arg0 : i32, i32
  }
  func.func @transform_6(%arg0: i32) -> (i32, i32) {
    %c0_i32 = arith.constant 0 : i32
    %c0_i32_0 = arith.constant 0 : i32
    return %c0_i32, %arg0 : i32, i32
  }
  func.func @transform_7(%arg0: i32) -> (i32, i32) {
    %c0_i32 = arith.constant 0 : i32
    %c0_i32_0 = arith.constant 0 : i32
    return %c0_i32, %arg0 : i32, i32
  }
  func.func @transform_8(%arg0: i32) -> (i32, i32) {
    %c0_i32 = arith.constant 0 : i32
    %c0_i32_0 = arith.constant 0 : i32
    return %c0_i32, %arg0 : i32, i32
  }
}

module attributes {stable_mosaic.version = 11 : i64} {
  func.func @_flipout_linear_kernel(%arg0: i32, %arg1: memref<16x512xf32, #tpu.memory_space<vmem>>, %arg2: memref<512x128xf32, #tpu.memory_space<vmem>>, %arg3: memref<512x128xf32, #tpu.memory_space<vmem>>, %arg4: memref<512x128xf32, #tpu.memory_space<vmem>>, %arg5: memref<1x128xf32, #tpu.memory_space<vmem>>, %arg6: memref<1x128xf32, #tpu.memory_space<vmem>>, %arg7: memref<1x128xf32, #tpu.memory_space<vmem>>, %arg8: memref<8x128xf32, #tpu.memory_space<vmem>>, %arg9: memref<8x128xf32, #tpu.memory_space<vmem>>) attributes {dimension_semantics = [#tpu.dimension_semantics<parallel>], iteration_bounds = array<i64: 1>, scalar_prefetch = 0 : i64, scratch_operands = 0 : i64, tpu.core_type = #tpu.core_type<tc>, window_params = [{pipeline_mode = #tpu.pipeline_mode<synchronous>, transform_indices = @transform_0, window_bounds = array<i64: 16, 512>}, {transform_indices = @transform_1, window_bounds = array<i64: 512, 128>}, {transform_indices = @transform_2, window_bounds = array<i64: 512, 128>}, {transform_indices = @transform_3, window_bounds = array<i64: 512, 128>}, {transform_indices = @transform_4, window_bounds = array<i64: 1, 128>}, {transform_indices = @transform_5, window_bounds = array<i64: 1, 128>}, {transform_indices = @transform_6, window_bounds = array<i64: 1, 128>}, {transform_indices = @transform_7, window_bounds = array<i64: 8, 128>}, {transform_indices = @transform_8, window_bounds = array<i64: 8, 128>}]} {
    %c0 = arith.constant 0 : index
    %c0_0 = arith.constant 0 : index
    %0 = vector.load %arg2[%c0, %c0_0] : memref<512x128xf32, #tpu.memory_space<vmem>>, vector<512x128xf32>
    %c0_1 = arith.constant 0 : index
    %c0_2 = arith.constant 0 : index
    %1 = vector.load %arg4[%c0_1, %c0_2] : memref<512x128xf32, #tpu.memory_space<vmem>>, vector<512x128xf32>
    %c0_3 = arith.constant 0 : index
    %c0_4 = arith.constant 0 : index
    %2 = vector.load %arg3[%c0_3, %c0_4] : memref<512x128xf32, #tpu.memory_space<vmem>>, vector<512x128xf32>
    %cst = arith.constant 0.000000e+00 : f32
    %3 = vector.broadcast %cst : f32 to vector<512x128xf32>
    %4 = arith.maximumf %2, %3 : vector<512x128xf32>
    %5 = math.absf %2 : vector<512x128xf32>
    %cst_5 = arith.constant 0.000000e+00 : f32
    %6 = vector.broadcast %cst_5 : f32 to vector<512x128xf32>
    %7 = arith.subf %6, %5 : vector<512x128xf32>
    %8 = math.exp %7 : vector<512x128xf32>
    %9 = math.log1p %8 : vector<512x128xf32>
    %10 = arith.addf %4, %9 : vector<512x128xf32>
    %11 = arith.mulf %1, %10 : vector<512x128xf32>
    %12 = arith.addf %0, %11 : vector<512x128xf32>
    %c0_6 = arith.constant 0 : index
    %c0_7 = arith.constant 0 : index
    %13 = vector.load %arg5[%c0_6, %c0_7] : memref<1x128xf32, #tpu.memory_space<vmem>>, vector<1x128xf32>
    %c0_8 = arith.constant 0 : index
    %c0_9 = arith.constant 0 : index
    %14 = vector.load %arg7[%c0_8, %c0_9] : memref<1x128xf32, #tpu.memory_space<vmem>>, vector<1x128xf32>
    %c0_10 = arith.constant 0 : index
    %c0_11 = arith.constant 0 : index
    %15 = vector.load %arg6[%c0_10, %c0_11] : memref<1x128xf32, #tpu.memory_space<vmem>>, vector<1x128xf32>
    %cst_12 = arith.constant 0.000000e+00 : f32
    %16 = vector.broadcast %cst_12 : f32 to vector<1x128xf32>
    %17 = arith.maximumf %15, %16 : vector<1x128xf32>
    %18 = math.absf %15 : vector<1x128xf32>
    %cst_13 = arith.constant 0.000000e+00 : f32
    %19 = vector.broadcast %cst_13 : f32 to vector<1x128xf32>
    %20 = arith.subf %19, %18 : vector<1x128xf32>
    %21 = math.exp %20 : vector<1x128xf32>
    %22 = math.log1p %21 : vector<1x128xf32>
    %23 = arith.addf %17, %22 : vector<1x128xf32>
    %24 = arith.mulf %14, %23 : vector<1x128xf32>
    %25 = arith.addf %13, %24 : vector<1x128xf32>
    %c0_14 = arith.constant 0 : index
    %c0_15 = arith.constant 0 : index
    %26 = vector.load %arg1[%c0_14, %c0_15] : memref<16x512xf32, #tpu.memory_space<vmem>>, vector<16x512xf32>
    %cst_16 = arith.constant dense<0.000000e+00> : vector<16x128xf32>
    %27 = tpu.matmul %26, %12, %cst_16 {dimension_numbers = #tpu.dot_dimension_numbers<[1], [0], [0], [1], [0, 0, 1, 1], [], []>} : vector<16x512xf32>, vector<512x128xf32>, vector<16x128xf32> -> vector<16x128xf32>
    %28 = vector.extract_strided_slice %27 {offsets = [0, 0], sizes = [8, 128], strides = [1, 1]} : vector<16x128xf32> to vector<8x128xf32>
    %29 = vector.broadcast %25 : vector<1x128xf32> to vector<8x128xf32>
    %30 = arith.addf %28, %29 : vector<8x128xf32>
    %31 = vector.extract_strided_slice %27 {offsets = [8, 0], sizes = [8, 128], strides = [1, 1]} : vector<16x128xf32> to vector<8x128xf32>
    %c0_17 = arith.constant 0 : index
    %c0_18 = arith.constant 0 : index
    %32 = vector.load %arg8[%c0_17, %c0_18] : memref<8x128xf32, #tpu.memory_space<vmem>>, vector<8x128xf32>
    %33 = arith.mulf %31, %32 : vector<8x128xf32>
    %34 = arith.addf %30, %33 : vector<8x128xf32>
    %c0_19 = arith.constant 0 : index
    %c0_20 = arith.constant 0 : index
    %35 = vector.load %arg9[%c0_19, %c0_20] : memref<8x128xf32, #tpu.memory_space<vmem>>, vector<8x128xf32>
    tpu.vector_store %arg9[%c0_19, %c0_20], %34 {strides = array<i32>} : memref<8x128xf32, #tpu.memory_space<vmem>>, vector<8x128xf32>,
    return
  }
  func.func @transform_0(%arg0: i32) -> (i32, i32) {
    %c0_i32 = arith.constant 0 : i32
    %c0_i32_0 = arith.constant 0 : i32
    %c0_i32_1 = arith.constant 0 : i32
    return %c0_i32, %c0_i32_0 : i32, i32
  }
  func.func @transform_1(%arg0: i32) -> (i32, i32) {
    %c0_i32 = arith.constant 0 : i32
    %c0_i32_0 = arith.constant 0 : i32
    return %c0_i32, %arg0 : i32, i32
  }
  func.func @transform_2(%arg0: i32) -> (i32, i32) {
    %c0_i32 = arith.constant 0 : i32
    %c0_i32_0 = arith.constant 0 : i32
    return %c0_i32, %arg0 : i32, i32
  }
  func.func @transform_3(%arg0: i32) -> (i32, i32) {
    %c0_i32 = arith.constant 0 : i32
    %c0_i32_0 = arith.constant 0 : i32
    return %c0_i32, %arg0 : i32, i32
  }
  func.func @transform_4(%arg0: i32) -> (i32, i32) {
    %c0_i32 = arith.constant 0 : i32
    %c0_i32_0 = arith.constant 0 : i32
    return %c0_i32, %arg0 : i32, i32
  }
  func.func @transform_5(%arg0: i32) -> (i32, i32) {
    %c0_i32 = arith.constant 0 : i32
    %c0_i32_0 = arith.constant 0 : i32
    return %c0_i32, %arg0 : i32, i32
  }
  func.func @transform_6(%arg0: i32) -> (i32, i32) {
    %c0_i32 = arith.constant 0 : i32
    %c0_i32_0 = arith.constant 0 : i32
    return %c0_i32, %arg0 : i32, i32
  }
  func.func @transform_7(%arg0: i32) -> (i32, i32) {
    %c0_i32 = arith.constant 0 : i32
    %c0_i32_0 = arith.constant 0 : i32
    return %c0_i32, %arg0 : i32, i32
  }
  func.func @transform_8(%arg0: i32) -> (i32, i32) {
    %c0_i32 = arith.constant 0 : i32
    %c0_i32_0 = arith.constant 0 : i32
    return %c0_i32, %arg0 : i32, i32
  }
}

</mosaic_0001>

<llo_original>
// kernel: fwd.3
$region0: #{fwd.3}
  #allocation0 [shape = 'u32[]', space=smem, size = 0x4, offset = 0x4, fixed_abs, tag = 'smem constant byte address 0x4 - core index']
  #allocation1 [shape = 'u32[144,128]{1,0:T(1,128)}', space=vmem, size = 0x12000, scoped, tag = 'internal scratch']
  %s0 = inlined_call_operand.vmem [shape: f32[16,512], index: 0, kind: input, shape index: {}]
  %s1 = inlined_call_operand.vmem [shape: f32[512,128], index: 1, kind: input, shape index: {}]
  %s2 = inlined_call_operand.vmem [shape: f32[512,128], index: 2, kind: input, shape index: {}]
  %s3 = inlined_call_operand.vmem [shape: f32[512,128], index: 3, kind: input, shape index: {}]
  %s4 = inlined_call_operand.vmem [shape: f32[1,128], index: 4, kind: input, shape index: {}]
  %s5 = inlined_call_operand.vmem [shape: f32[1,128], index: 5, kind: input, shape index: {}]
  %s6 = inlined_call_operand.vmem [shape: f32[1,128], index: 6, kind: input, shape index: {}]
  %s7 = inlined_call_operand.vmem [shape: f32[8,128], index: 7, kind: input, shape index: {}]
  %s8 = inlined_call_operand.vmem [shape: f32[8,128], index: 8, kind: output, shape index: {}]
  %s9 = sld [smem:[#allocation0]]
  $region42: #{fwd.3} parent=0
    _
  %s11 = ssub.s32 1, %s9
  %s12 = scalar_select 0, %s11, %s9
  // Predicated region
  $region2: #{fwd.3} parent=0 // pred_check
    _
  $region3: #{fwd.3} parent=0 // pred_check_branch
    %14 = sbr.rel (0) target = $region5
  $region4: #{fwd.3} parent=0 // pred_region
    _
  $region5: #{fwd.3} parent=0 // pred_fallthru
    _
  // Predicated region
  $region6: #{fwd.3} parent=0 // pred_check
    _
  $region7: #{fwd.3} parent=0 // pred_check_branch
    %16 = sbr.rel (0) target = $region9
  $region8: #{fwd.3} parent=0 // pred_region
    _
  $region9: #{fwd.3} parent=0 // pred_fallthru
    _
  // Predicated region
  $region10: #{fwd.3} parent=0 // pred_check
    _
  $region11: #{fwd.3} parent=0 // pred_check_branch
    %18 = sbr.rel (0) target = $region13
  $region12: #{fwd.3} parent=0 // pred_region
    _
  $region13: #{fwd.3} parent=0 // pred_fallthru
    _
  // Predicated region
  $region14: #{fwd.3} parent=0 // pred_check
    _
  $region15: #{fwd.3} parent=0 // pred_check_branch
    %20 = sbr.rel (0) target = $region17
  $region16: #{fwd.3} parent=0 // pred_region
    _
  $region17: #{fwd.3} parent=0 // pred_fallthru
    _
  // Predicated region
  $region18: #{fwd.3} parent=0 // pred_check
    _
  $region19: #{fwd.3} parent=0 // pred_check_branch
    %22 = sbr.rel (0) target = $region21
  $region20: #{fwd.3} parent=0 // pred_region
    _
  $region21: #{fwd.3} parent=0 // pred_fallthru
    _
  // Predicated region
  $region22: #{fwd.3} parent=0 // pred_check
    _
  $region23: #{fwd.3} parent=0 // pred_check_branch
    %24 = sbr.rel (0) target = $region25
  $region24: #{fwd.3} parent=0 // pred_region
    _
  $region25: #{fwd.3} parent=0 // pred_fallthru
    _
  // Predicated region
  $region26: #{fwd.3} parent=0 // pred_check
    _
  $region27: #{fwd.3} parent=0 // pred_check_branch
    %26 = sbr.rel (0) target = $region29
  $region28: #{fwd.3} parent=0 // pred_region
    _
  $region29: #{fwd.3} parent=0 // pred_fallthru
    _
  // Predicated region
  $region30: #{fwd.3} parent=0 // pred_check
    _
  $region31: #{fwd.3} parent=0 // pred_check_branch
    %28 = sbr.rel (0) target = $region33
  $region32: #{fwd.3} parent=0 // pred_region
    _
  $region33: #{fwd.3} parent=0 // pred_fallthru
    _
  %v29 = vld [vmem:[%s1] sm:$0xff]
  %v30 = vld [vmem:[%s1 + $0x8] sm:$0xff]
  %v31 = vld [vmem:[%s1 + $0x10] sm:$0xff]
  %v32 = vld [vmem:[%s1 + $0x18] sm:$0xff]
  %v33 = vld [vmem:[%s1 + $0x20] sm:$0xff]
  %v34 = vld [vmem:[%s1 + $0x28] sm:$0xff]
  %v35 = vld [vmem:[%s1 + $0x30] sm:$0xff]
  %v36 = vld [vmem:[%s1 + $0x38] sm:$0xff]
  %v37 = vld [vmem:[%s1 + $0x40] sm:$0xff]
  %v38 = vld [vmem:[%s1 + $0x48] sm:$0xff]
  %v39 = vld [vmem:[%s1 + $0x50] sm:$0xff]
  %v40 = vld [vmem:[%s1 + $0x58] sm:$0xff]
  %v41 = vld [vmem:[%s1 + $0x60] sm:$0xff]
  %v42 = vld [vmem:[%s1 + $0x68] sm:$0xff]
  %v43 = vld [vmem:[%s1 + $0x70] sm:$0xff]
  %v44 = vld [vmem:[%s1 + $0x78] sm:$0xff]
  %v45 = vld [vmem:[%s1 + $0x80] sm:$0xff]
  %v46 = vld [vmem:[%s1 + $0x88] sm:$0xff]
  %v47 = vld [vmem:[%s1 + $0x90] sm:$0xff]
  %v48 = vld [vmem:[%s1 + $0x98] sm:$0xff]
  %v49 = vld [vmem:[%s1 + $0xa0] sm:$0xff]
  %v50 = vld [vmem:[%s1 + $0xa8] sm:$0xff]
  %v51 = vld [vmem:[%s1 + $0xb0] sm:$0xff]
  %v52 = vld [vmem:[%s1 + $0xb8] sm:$0xff]
  %v53 = vld [vmem:[%s1 + $0xc0] sm:$0xff]
  %v54 = vld [vmem:[%s1 + $0xc8] sm:$0xff]
  %v55 = vld [vmem:[%s1 + $0xd0] sm:$0xff]
  %v56 = vld [vmem:[%s1 + $0xd8] sm:$0xff]
  %v57 = vld [vmem:[%s1 + $0xe0] sm:$0xff]
  %v58 = vld [vmem:[%s1 + $0xe8] sm:$0xff]
  %v59 = vld [vmem:[%s1 + $0xf0] sm:$0xff]
  %v60 = vld [vmem:[%s1 + $0xf8] sm:$0xff]
  %v61 = vld [vmem:[%s1 + $0x100] sm:$0xff]
  %v62 = vld [vmem:[%s1 + $0x108] sm:$0xff]
  %v63 = vld [vmem:[%s1 + $0x110] sm:$0xff]
  %v64 = vld [vmem:[%s1 + $0x118] sm:$0xff]
  %v65 = vld [vmem:[%s1 + $0x120] sm:$0xff]
  %v66 = vld [vmem:[%s1 + $0x128] sm:$0xff]
  %v67 = vld [vmem:[%s1 + $0x130] sm:$0xff]
  %v68 = vld [vmem:[%s1 + $0x138] sm:$0xff]
  %v69 = vld [vmem:[%s1 + $0x140] sm:$0xff]
  %v70 = vld [vmem:[%s1 + $0x148] sm:$0xff]
  %v71 = vld [vmem:[%s1 + $0x150] sm:$0xff]
  %v72 = vld [vmem:[%s1 + $0x158] sm:$0xff]
  %v73 = vld [vmem:[%s1 + $0x160] sm:$0xff]
  %v74 = vld [vmem:[%s1 + $0x168] sm:$0xff]
  %v75 = vld [vmem:[%s1 + $0x170] sm:$0xff]
  %v76 = vld [vmem:[%s1 + $0x178] sm:$0xff]
  %v77 = vld [vmem:[%s1 + $0x180] sm:$0xff]
  %v78 = vld [vmem:[%s1 + $0x188] sm:$0xff]
  %v79 = vld [vmem:[%s1 + $0x190] sm:$0xff]
  %v80 = vld [vmem:[%s1 + $0x198] sm:$0xff]
  %v81 = vld [vmem:[%s1 + $0x1a0] sm:$0xff]
  %v82 = vld [vmem:[%s1 + $0x1a8] sm:$0xff]
  %v83 = vld [vmem:[%s1 + $0x1b0] sm:$0xff]
  %v84 = vld [vmem:[%s1 + $0x1b8] sm:$0xff]
  %v85 = vld [vmem:[%s1 + $0x1c0] sm:$0xff]
  %v86 = vld [vmem:[%s1 + $0x1c8] sm:$0xff]
  %v87 = vld [vmem:[%s1 + $0x1d0] sm:$0xff]
  %v88 = vld [vmem:[%s1 + $0x1d8] sm:$0xff]
  %v89 = vld [vmem:[%s1 + $0x1e0] sm:$0xff]
  %v90 = vld [vmem:[%s1 + $0x1e8] sm:$0xff]
  %v91 = vld [vmem:[%s1 + $0x1f0] sm:$0xff]
  %v92 = vld [vmem:[%s1 + $0x1f8] sm:$0xff]
  %v93 = vld [vmem:[%s3] sm:$0xff]
  %v94 = vld [vmem:[%s3 + $0x8] sm:$0xff]
  %v95 = vld [vmem:[%s3 + $0x10] sm:$0xff]
  %v96 = vld [vmem:[%s3 + $0x18] sm:$0xff]
  %v97 = vld [vmem:[%s3 + $0x20] sm:$0xff]
  %v98 = vld [vmem:[%s3 + $0x28] sm:$0xff]
  %v99 = vld [vmem:[%s3 + $0x30] sm:$0xff]
  %v100 = vld [vmem:[%s3 + $0x38] sm:$0xff]
  %v101 = vld [vmem:[%s3 + $0x40] sm:$0xff]
  %v102 = vld [vmem:[%s3 + $0x48] sm:$0xff]
  %v103 = vld [vmem:[%s3 + $0x50] sm:$0xff]
  %v104 = vld [vmem:[%s3 + $0x58] sm:$0xff]
  %v105 = vld [vmem:[%s3 + $0x60] sm:$0xff]
  %v106 = vld [vmem:[%s3 + $0x68] sm:$0xff]
  %v107 = vld [vmem:[%s3 + $0x70] sm:$0xff]
  %v108 = vld [vmem:[%s3 + $0x78] sm:$0xff]
  %v109 = vld [vmem:[%s3 + $0x80] sm:$0xff]
  %v110 = vld [vmem:[%s3 + $0x88] sm:$0xff]
  %v111 = vld [vmem:[%s3 + $0x90] sm:$0xff]
  %v112 = vld [vmem:[%s3 + $0x98] sm:$0xff]
  %v113 = vld [vmem:[%s3 + $0xa0] sm:$0xff]
  %v114 = vld [vmem:[%s3 + $0xa8] sm:$0xff]
  %v115 = vld [vmem:[%s3 + $0xb0] sm:$0xff]
  %v116 = vld [vmem:[%s3 + $0xb8] sm:$0xff]
  %v117 = vld [vmem:[%s3 + $0xc0] sm:$0xff]
  %v118 = vld [vmem:[%s3 + $0xc8] sm:$0xff]
  %v119 = vld [vmem:[%s3 + $0xd0] sm:$0xff]
  %v120 = vld [vmem:[%s3 + $0xd8] sm:$0xff]
  %v121 = vld [vmem:[%s3 + $0xe0] sm:$0xff]
  %v122 = vld [vmem:[%s3 + $0xe8] sm:$0xff]
  %v123 = vld [vmem:[%s3 + $0xf0] sm:$0xff]
  %v124 = vld [vmem:[%s3 + $0xf8] sm:$0xff]
  %v125 = vld [vmem:[%s3 + $0x100] sm:$0xff]
  %v126 = vld [vmem:[%s3 + $0x108] sm:$0xff]
  %v127 = vld [vmem:[%s3 + $0x110] sm:$0xff]
  %v128 = vld [vmem:[%s3 + $0x118] sm:$0xff]
  %v129 = vld [vmem:[%s3 + $0x120] sm:$0xff]
  %v130 = vld [vmem:[%s3 + $0x128] sm:$0xff]
  %v131 = vld [vmem:[%s3 + $0x130] sm:$0xff]
  %v132 = vld [vmem:[%s3 + $0x138] sm:$0xff]
  %v133 = vld [vmem:[%s3 + $0x140] sm:$0xff]
  %v134 = vld [vmem:[%s3 + $0x148] sm:$0xff]
  %v135 = vld [vmem:[%s3 + $0x150] sm:$0xff]
  %v136 = vld [vmem:[%s3 + $0x158] sm:$0xff]
  %v137 = vld [vmem:[%s3 + $0x160] sm:$0xff]
  %v138 = vld [vmem:[%s3 + $0x168] sm:$0xff]
  %v139 = vld [vmem:[%s3 + $0x170] sm:$0xff]
  %v140 = vld [vmem:[%s3 + $0x178] sm:$0xff]
  %v141 = vld [vmem:[%s3 + $0x180] sm:$0xff]
  %v142 = vld [vmem:[%s3 + $0x188] sm:$0xff]
  %v143 = vld [vmem:[%s3 + $0x190] sm:$0xff]
  %v144 = vld [vmem:[%s3 + $0x198] sm:$0xff]
  %v145 = vld [vmem:[%s3 + $0x1a0] sm:$0xff]
  %v146 = vld [vmem:[%s3 + $0x1a8] sm:$0xff]
  %v147 = vld [vmem:[%s3 + $0x1b0] sm:$0xff]
  %v148 = vld [vmem:[%s3 + $0x1b8] sm:$0xff]
  %v149 = vld [vmem:[%s3 + $0x1c0] sm:$0xff]
  %v150 = vld [vmem:[%s3 + $0x1c8] sm:$0xff]
  %v151 = vld [vmem:[%s3 + $0x1d0] sm:$0xff]
  %v152 = vld [vmem:[%s3 + $0x1d8] sm:$0xff]
  %v153 = vld [vmem:[%s3 + $0x1e0] sm:$0xff]
  %v154 = vld [vmem:[%s3 + $0x1e8] sm:$0xff]
  %v155 = vld [vmem:[%s3 + $0x1f0] sm:$0xff]
  %v156 = vld [vmem:[%s3 + $0x1f8] sm:$0xff]
  %v157 = vld [vmem:[%s2] sm:$0xff]
  %v158 = vld [vmem:[%s2 + $0x8] sm:$0xff]
  %v159 = vld [vmem:[%s2 + $0x10] sm:$0xff]
  %v160 = vld [vmem:[%s2 + $0x18] sm:$0xff]
  %v161 = vld [vmem:[%s2 + $0x20] sm:$0xff]
  %v162 = vld [vmem:[%s2 + $0x28] sm:$0xff]
  %v163 = vld [vmem:[%s2 + $0x30] sm:$0xff]
  %v164 = vld [vmem:[%s2 + $0x38] sm:$0xff]
  %v165 = vld [vmem:[%s2 + $0x40] sm:$0xff]
  %v166 = vld [vmem:[%s2 + $0x48] sm:$0xff]
  %v167 = vld [vmem:[%s2 + $0x50] sm:$0xff]
  %v168 = vld [vmem:[%s2 + $0x58] sm:$0xff]
  %v169 = vld [vmem:[%s2 + $0x60] sm:$0xff]
  %v170 = vld [vmem:[%s2 + $0x68] sm:$0xff]
  %v171 = vld [vmem:[%s2 + $0x70] sm:$0xff]
  %v172 = vld [vmem:[%s2 + $0x78] sm:$0xff]
  %v173 = vld [vmem:[%s2 + $0x80] sm:$0xff]
  %v174 = vld [vmem:[%s2 + $0x88] sm:$0xff]
  %v175 = vld [vmem:[%s2 + $0x90] sm:$0xff]
  %v176 = vld [vmem:[%s2 + $0x98] sm:$0xff]
  %v177 = vld [vmem:[%s2 + $0xa0] sm:$0xff]
  %v178 = vld [vmem:[%s2 + $0xa8] sm:$0xff]
  %v179 = vld [vmem:[%s2 + $0xb0] sm:$0xff]
  %v180 = vld [vmem:[%s2 + $0xb8] sm:$0xff]
  %v181 = vld [vmem:[%s2 + $0xc0] sm:$0xff]
  %v182 = vld [vmem:[%s2 + $0xc8] sm:$0xff]
  %v183 = vld [vmem:[%s2 + $0xd0] sm:$0xff]
  %v184 = vld [vmem:[%s2 + $0xd8] sm:$0xff]
  %v185 = vld [vmem:[%s2 + $0xe0] sm:$0xff]
  %v186 = vld [vmem:[%s2 + $0xe8] sm:$0xff]
  %v187 = vld [vmem:[%s2 + $0xf0] sm:$0xff]
  %v188 = vld [vmem:[%s2 + $0xf8] sm:$0xff]
  %v189 = vld [vmem:[%s2 + $0x100] sm:$0xff]
  %v190 = vld [vmem:[%s2 + $0x108] sm:$0xff]
  %v191 = vld [vmem:[%s2 + $0x110] sm:$0xff]
  %v192 = vld [vmem:[%s2 + $0x118] sm:$0xff]
  %v193 = vld [vmem:[%s2 + $0x120] sm:$0xff]
  %v194 = vld [vmem:[%s2 + $0x128] sm:$0xff]
  %v195 = vld [vmem:[%s2 + $0x130] sm:$0xff]
  %v196 = vld [vmem:[%s2 + $0x138] sm:$0xff]
  %v197 = vld [vmem:[%s2 + $0x140] sm:$0xff]
  %v198 = vld [vmem:[%s2 + $0x148] sm:$0xff]
  %v199 = vld [vmem:[%s2 + $0x150] sm:$0xff]
  %v200 = vld [vmem:[%s2 + $0x158] sm:$0xff]
  %v201 = vld [vmem:[%s2 + $0x160] sm:$0xff]
  %v202 = vld [vmem:[%s2 + $0x168] sm:$0xff]
  %v203 = vld [vmem:[%s2 + $0x170] sm:$0xff]
  %v204 = vld [vmem:[%s2 + $0x178] sm:$0xff]
  %v205 = vld [vmem:[%s2 + $0x180] sm:$0xff]
  %v206 = vld [vmem:[%s2 + $0x188] sm:$0xff]
  %v207 = vld [vmem:[%s2 + $0x190] sm:$0xff]
  %v208 = vld [vmem:[%s2 + $0x198] sm:$0xff]
  %v209 = vld [vmem:[%s2 + $0x1a0] sm:$0xff]
  %v210 = vld [vmem:[%s2 + $0x1a8] sm:$0xff]
  %v211 = vld [vmem:[%s2 + $0x1b0] sm:$0xff]
  %v212 = vld [vmem:[%s2 + $0x1b8] sm:$0xff]
  %v213 = vld [vmem:[%s2 + $0x1c0] sm:$0xff]
  %v214 = vld [vmem:[%s2 + $0x1c8] sm:$0xff]
  %v215 = vld [vmem:[%s2 + $0x1d0] sm:$0xff]
  %v216 = vld [vmem:[%s2 + $0x1d8] sm:$0xff]
  %v217 = vld [vmem:[%s2 + $0x1e0] sm:$0xff]
  %v218 = vld [vmem:[%s2 + $0x1e8] sm:$0xff]
  %v219 = vld [vmem:[%s2 + $0x1f0] sm:$0xff]
  %v220 = vld [vmem:[%s2 + $0x1f8] sm:$0xff]
  %v221 = vmax.f32 %v157, 0.0
  %v222 = vmax.f32 %v158, 0.0
  %v223 = vmax.f32 %v159, 0.0
  %v224 = vmax.f32 %v160, 0.0
  %v225 = vmax.f32 %v161, 0.0
  %v226 = vmax.f32 %v162, 0.0
  %v227 = vmax.f32 %v163, 0.0
  %v228 = vmax.f32 %v164, 0.0
  %v229 = vmax.f32 %v165, 0.0
  %v230 = vmax.f32 %v166, 0.0
  %v231 = vmax.f32 %v167, 0.0
  %v232 = vmax.f32 %v168, 0.0
  %v233 = vmax.f32 %v169, 0.0
  %v234 = vmax.f32 %v170, 0.0
  %v235 = vmax.f32 %v171, 0.0
  %v236 = vmax.f32 %v172, 0.0
  %v237 = vmax.f32 %v173, 0.0
  %v238 = vmax.f32 %v174, 0.0
  %v239 = vmax.f32 %v175, 0.0
  %v240 = vmax.f32 %v176, 0.0
  %v241 = vmax.f32 %v177, 0.0
  %v242 = vmax.f32 %v178, 0.0
  %v243 = vmax.f32 %v179, 0.0
  %v244 = vmax.f32 %v180, 0.0
  %v245 = vmax.f32 %v181, 0.0
  %v246 = vmax.f32 %v182, 0.0
  %v247 = vmax.f32 %v183, 0.0
  %v248 = vmax.f32 %v184, 0.0
  %v249 = vmax.f32 %v185, 0.0
  %v250 = vmax.f32 %v186, 0.0
  %v251 = vmax.f32 %v187, 0.0
  %v252 = vmax.f32 %v188, 0.0
  %v253 = vmax.f32 %v189, 0.0
  %v254 = vmax.f32 %v190, 0.0
  %v255 = vmax.f32 %v191, 0.0
  %v256 = vmax.f32 %v192, 0.0
  %v257 = vmax.f32 %v193, 0.0
  %v258 = vmax.f32 %v194, 0.0
  %v259 = vmax.f32 %v195, 0.0
  %v260 = vmax.f32 %v196, 0.0
  %v261 = vmax.f32 %v197, 0.0
  %v262 = vmax.f32 %v198, 0.0
  %v263 = vmax.f32 %v199, 0.0
  %v264 = vmax.f32 %v200, 0.0
  %v265 = vmax.f32 %v201, 0.0
  %v266 = vmax.f32 %v202, 0.0
  %v267 = vmax.f32 %v203, 0.0
  %v268 = vmax.f32 %v204, 0.0
  %v269 = vmax.f32 %v205, 0.0
  %v270 = vmax.f32 %v206, 0.0
  %v271 = vmax.f32 %v207, 0.0
  %v272 = vmax.f32 %v208, 0.0
  %v273 = vmax.f32 %v209, 0.0
  %v274 = vmax.f32 %v210, 0.0
  %v275 = vmax.f32 %v211, 0.0
  %v276 = vmax.f32 %v212, 0.0
  %v277 = vmax.f32 %v213, 0.0
  %v278 = vmax.f32 %v214, 0.0
  %v279 = vmax.f32 %v215, 0.0
  %v280 = vmax.f32 %v216, 0.0
  %v281 = vmax.f32 %v217, 0.0
  %v282 = vmax.f32 %v218, 0.0
  %v283 = vmax.f32 %v219, 0.0
  %v284 = vmax.f32 %v220, 0.0
  %v285 = vand.u32 2147483647, %v157
  %v286 = vand.u32 2147483647, %v158
  %v287 = vand.u32 2147483647, %v159
  %v288 = vand.u32 2147483647, %v160
  %v289 = vand.u32 2147483647, %v161
  %v290 = vand.u32 2147483647, %v162
  %v291 = vand.u32 2147483647, %v163
  %v292 = vand.u32 2147483647, %v164
  %v293 = vand.u32 2147483647, %v165
  %v294 = vand.u32 2147483647, %v166
  %v295 = vand.u32 2147483647, %v167
  %v296 = vand.u32 2147483647, %v168
  %v297 = vand.u32 2147483647, %v169
  %v298 = vand.u32 2147483647, %v170
  %v299 = vand.u32 2147483647, %v171
  %v300 = vand.u32 2147483647, %v172
  %v301 = vand.u32 2147483647, %v173
  %v302 = vand.u32 2147483647, %v174
  %v303 = vand.u32 2147483647, %v175
  %v304 = vand.u32 2147483647, %v176
  %v305 = vand.u32 2147483647, %v177
  %v306 = vand.u32 2147483647, %v178
  %v307 = vand.u32 2147483647, %v179
  %v308 = vand.u32 2147483647, %v180
  %v309 = vand.u32 2147483647, %v181
  %v310 = vand.u32 2147483647, %v182
  %v311 = vand.u32 2147483647, %v183
  %v312 = vand.u32 2147483647, %v184
  %v313 = vand.u32 2147483647, %v185
  %v314 = vand.u32 2147483647, %v186
  %v315 = vand.u32 2147483647, %v187
  %v316 = vand.u32 2147483647, %v188
  %v317 = vand.u32 2147483647, %v189
  %v318 = vand.u32 2147483647, %v190
  %v319 = vand.u32 2147483647, %v191
  %v320 = vand.u32 2147483647, %v192
  %v321 = vand.u32 2147483647, %v193
  %v322 = vand.u32 2147483647, %v194
  %v323 = vand.u32 2147483647, %v195
  %v324 = vand.u32 2147483647, %v196
  %v325 = vand.u32 2147483647, %v197
  %v326 = vand.u32 2147483647, %v198
  %v327 = vand.u32 2147483647, %v199
  %v328 = vand.u32 2147483647, %v200
  %v329 = vand.u32 2147483647, %v201
  %v330 = vand.u32 2147483647, %v202
  %v331 = vand.u32 2147483647, %v203
  %v332 = vand.u32 2147483647, %v204
  %v333 = vand.u32 2147483647, %v205
  %v334 = vand.u32 2147483647, %v206
  %v335 = vand.u32 2147483647, %v207
  %v336 = vand.u32 2147483647, %v208
  %v337 = vand.u32 2147483647, %v209
  %v338 = vand.u32 2147483647, %v210
  %v339 = vand.u32 2147483647, %v211
  %v340 = vand.u32 2147483647, %v212
  %v341 = vand.u32 2147483647, %v213
  %v342 = vand.u32 2147483647, %v214
  %v343 = vand.u32 2147483647, %v215
  %v344 = vand.u32 2147483647, %v216
  %v345 = vand.u32 2147483647, %v217
  %v346 = vand.u32 2147483647, %v218
  %v347 = vand.u32 2147483647, %v219
  %v348 = vand.u32 2147483647, %v220
  %v349 = vsub.f32 0.0, %v285
  %v350 = vsub.f32 0.0, %v286
  %v351 = vsub.f32 0.0, %v287
  %v352 = vsub.f32 0.0, %v288
  %v353 = vsub.f32 0.0, %v289
  %v354 = vsub.f32 0.0, %v290
  %v355 = vsub.f32 0.0, %v291
  %v356 = vsub.f32 0.0, %v292
  %v357 = vsub.f32 0.0, %v293
  %v358 = vsub.f32 0.0, %v294
  %v359 = vsub.f32 0.0, %v295
  %v360 = vsub.f32 0.0, %v296
  %v361 = vsub.f32 0.0, %v297
  %v362 = vsub.f32 0.0, %v298
  %v363 = vsub.f32 0.0, %v299
  %v364 = vsub.f32 0.0, %v300
  %v365 = vsub.f32 0.0, %v301
  %v366 = vsub.f32 0.0, %v302
  %v367 = vsub.f32 0.0, %v303
  %v368 = vsub.f32 0.0, %v304
  %v369 = vsub.f32 0.0, %v305
  %v370 = vsub.f32 0.0, %v306
  %v371 = vsub.f32 0.0, %v307
  %v372 = vsub.f32 0.0, %v308
  %v373 = vsub.f32 0.0, %v309
  %v374 = vsub.f32 0.0, %v310
  %v375 = vsub.f32 0.0, %v311
  %v376 = vsub.f32 0.0, %v312
  %v377 = vsub.f32 0.0, %v313
  %v378 = vsub.f32 0.0, %v314
  %v379 = vsub.f32 0.0, %v315
  %v380 = vsub.f32 0.0, %v316
  %v381 = vsub.f32 0.0, %v317
  %v382 = vsub.f32 0.0, %v318
  %v383 = vsub.f32 0.0, %v319
  %v384 = vsub.f32 0.0, %v320
  %v385 = vsub.f32 0.0, %v321
  %v386 = vsub.f32 0.0, %v322
  %v387 = vsub.f32 0.0, %v323
  %v388 = vsub.f32 0.0, %v324
  %v389 = vsub.f32 0.0, %v325
  %v390 = vsub.f32 0.0, %v326
  %v391 = vsub.f32 0.0, %v327
  %v392 = vsub.f32 0.0, %v328
  %v393 = vsub.f32 0.0, %v329
  %v394 = vsub.f32 0.0, %v330
  %v395 = vsub.f32 0.0, %v331
  %v396 = vsub.f32 0.0, %v332
  %v397 = vsub.f32 0.0, %v333
  %v398 = vsub.f32 0.0, %v334
  %v399 = vsub.f32 0.0, %v335
  %v400 = vsub.f32 0.0, %v336
  %v401 = vsub.f32 0.0, %v337
  %v402 = vsub.f32 0.0, %v338
  %v403 = vsub.f32 0.0, %v339
  %v404 = vsub.f32 0.0, %v340
  %v405 = vsub.f32 0.0, %v341
  %v406 = vsub.f32 0.0, %v342
  %v407 = vsub.f32 0.0, %v343
  %v408 = vsub.f32 0.0, %v344
  %v409 = vsub.f32 0.0, %v345
  %v410 = vsub.f32 0.0, %v346
  %v411 = vsub.f32 0.0, %v347
  %v412 = vsub.f32 0.0, %v348
  %v413 = vmul.f32 %v349, 1.442695
  %v414 = vpow.pop %v413
  %v415 = vmul.f32 %v350, 1.442695
  %v416 = vpow.pop %v415
  %v417 = vmul.f32 %v351, 1.442695
  %v418 = vpow.pop %v417
  %v419 = vmul.f32 %v352, 1.442695
  %v420 = vpow.pop %v419
  %v421 = vmul.f32 %v353, 1.442695
  %v422 = vpow.pop %v421
  %v423 = vmul.f32 %v354, 1.442695
  %v424 = vpow.pop %v423
  %v425 = vmul.f32 %v355, 1.442695
  %v426 = vpow.pop %v425
  %v427 = vmul.f32 %v356, 1.442695
  %v428 = vpow.pop %v427
  %v429 = vmul.f32 %v357, 1.442695
  %v430 = vpow.pop %v429
  %v431 = vmul.f32 %v358, 1.442695
  %v432 = vpow.pop %v431
  %v433 = vmul.f32 %v359, 1.442695
  %v434 = vpow.pop %v433
  %v435 = vmul.f32 %v360, 1.442695
  %v436 = vpow.pop %v435
  %v437 = vmul.f32 %v361, 1.442695
  %v438 = vpow.pop %v437
  %v439 = vmul.f32 %v362, 1.442695
  %v440 = vpow.pop %v439
  %v441 = vmul.f32 %v363, 1.442695
  %v442 = vpow.pop %v441
  %v443 = vmul.f32 %v364, 1.442695
  %v444 = vpow.pop %v443
  %v445 = vmul.f32 %v365, 1.442695
  %v446 = vpow.pop %v445
  %v447 = vmul.f32 %v366, 1.442695
  %v448 = vpow.pop %v447
  %v449 = vmul.f32 %v367, 1.442695
  %v450 = vpow.pop %v449
  %v451 = vmul.f32 %v368, 1.442695
  %v452 = vpow.pop %v451
  %v453 = vmul.f32 %v369, 1.442695
  %v454 = vpow.pop %v453
  %v455 = vmul.f32 %v370, 1.442695
  %v456 = vpow.pop %v455
  %v457 = vmul.f32 %v371, 1.442695
  %v458 = vpow.pop %v457
  %v459 = vmul.f32 %v372, 1.442695
  %v460 = vpow.pop %v459
  %v461 = vmul.f32 %v373, 1.442695
  %v462 = vpow.pop %v461
  %v463 = vmul.f32 %v374, 1.442695
  %v464 = vpow.pop %v463
  %v465 = vmul.f32 %v375, 1.442695
  %v466 = vpow.pop %v465
  %v467 = vmul.f32 %v376, 1.442695
  %v468 = vpow.pop %v467
  %v469 = vmul.f32 %v377, 1.442695
  %v470 = vpow.pop %v469
  %v471 = vmul.f32 %v378, 1.442695
  %v472 = vpow.pop %v471
  %v473 = vmul.f32 %v379, 1.442695
  %v474 = vpow.pop %v473
  %v475 = vmul.f32 %v380, 1.442695
  %v476 = vpow.pop %v475
  %v477 = vmul.f32 %v381, 1.442695
  %v478 = vpow.pop %v477
  %v479 = vmul.f32 %v382, 1.442695
  %v480 = vpow.pop %v479
  %v481 = vmul.f32 %v383, 1.442695
  %v482 = vpow.pop %v481
  %v483 = vmul.f32 %v384, 1.442695
  %v484 = vpow.pop %v483
  %v485 = vmul.f32 %v385, 1.442695
  %v486 = vpow.pop %v485
  %v487 = vmul.f32 %v386, 1.442695
  %v488 = vpow.pop %v487
  %v489 = vmul.f32 %v387, 1.442695
  %v490 = vpow.pop %v489
  %v491 = vmul.f32 %v388, 1.442695
  %v492 = vpow.pop %v491
  %v493 = vmul.f32 %v389, 1.442695
  %v494 = vpow.pop %v493
  %v495 = vmul.f32 %v390, 1.442695
  %v496 = vpow.pop %v495
  %v497 = vmul.f32 %v391, 1.442695
  %v498 = vpow.pop %v497
  %v499 = vmul.f32 %v392, 1.442695
  %v500 = vpow.pop %v499
  %v501 = vmul.f32 %v393, 1.442695
  %v502 = vpow.pop %v501
  %v503 = vmul.f32 %v394, 1.442695
  %v504 = vpow.pop %v503
  %v505 = vmul.f32 %v395, 1.442695
  %v506 = vpow.pop %v505
  %v507 = vmul.f32 %v396, 1.442695
  %v508 = vpow.pop %v507
  %v509 = vmul.f32 %v397, 1.442695
  %v510 = vpow.pop %v509
  %v511 = vmul.f32 %v398, 1.442695
  %v512 = vpow.pop %v511
  %v513 = vmul.f32 %v399, 1.442695
  %v514 = vpow.pop %v513
  %v515 = vmul.f32 %v400, 1.442695
  %v516 = vpow.pop %v515
  %v517 = vmul.f32 %v401, 1.442695
  %v518 = vpow.pop %v517
  %v519 = vmul.f32 %v402, 1.442695
  %v520 = vpow.pop %v519
  %v521 = vmul.f32 %v403, 1.442695
  %v522 = vpow.pop %v521
  %v523 = vmul.f32 %v404, 1.442695
  %v524 = vpow.pop %v523
  %v525 = vmul.f32 %v405, 1.442695
  %v526 = vpow.pop %v525
  %v527 = vmul.f32 %v406, 1.442695
  %v528 = vpow.pop %v527
  %v529 = vmul.f32 %v407, 1.442695
  %v530 = vpow.pop %v529
  %v531 = vmul.f32 %v408, 1.442695
  %v532 = vpow.pop %v531
  %v533 = vmul.f32 %v409, 1.442695
  %v534 = vpow.pop %v533
  %v535 = vmul.f32 %v410, 1.442695
  %v536 = vpow.pop %v535
  %v537 = vmul.f32 %v411, 1.442695
  %v538 = vpow.pop %v537
  %v539 = vmul.f32 %v412, 1.442695
  %v540 = vpow.pop %v539
  %v541 = vadd.f32 %v414, 1.0
  %v542 = vlog2.pop %v541
  %v543 = vmul.f32 %v542, 0.6931472
  %v544 = vmul.f32 -0.5, %v414
  %v545 = vadd.f32 %v544, 1.0
  %v546 = vmul.f32 %v545, %v414
  %v547 = vand.u32 2147483647, %v414
  %vm548 = vcmp.lt.f32.partialorder %v547, 0.0004427343
  %v549 = vsel %vm548, %v546, %v543
  %v550 = vadd.f32 %v416, 1.0
  %v551 = vlog2.pop %v550
  %v552 = vmul.f32 %v551, 0.6931472
  %v553 = vmul.f32 -0.5, %v416
  %v554 = vadd.f32 %v553, 1.0
  %v555 = vmul.f32 %v554, %v416
  %v556 = vand.u32 2147483647, %v416
  %vm557 = vcmp.lt.f32.partialorder %v556, 0.0004427343
  %v558 = vsel %vm557, %v555, %v552
  %v559 = vadd.f32 %v418, 1.0
  %v560 = vlog2.pop %v559
  %v561 = vmul.f32 %v560, 0.6931472
  %v562 = vmul.f32 -0.5, %v418
  %v563 = vadd.f32 %v562, 1.0
  %v564 = vmul.f32 %v563, %v418
  %v565 = vand.u32 2147483647, %v418
  %vm566 = vcmp.lt.f32.partialorder %v565, 0.0004427343
  %v567 = vsel %vm566, %v564, %v561
  %v568 = vadd.f32 %v420, 1.0
  %v569 = vlog2.pop %v568
  %v570 = vmul.f32 %v569, 0.6931472
  %v571 = vmul.f32 -0.5, %v420
  %v572 = vadd.f32 %v571, 1.0
  %v573 = vmul.f32 %v572, %v420
  %v574 = vand.u32 2147483647, %v420
  %vm575 = vcmp.lt.f32.partialorder %v574, 0.0004427343
  %v576 = vsel %vm575, %v573, %v570
  %v577 = vadd.f32 %v422, 1.0
  %v578 = vlog2.pop %v577
  %v579 = vmul.f32 %v578, 0.6931472
  %v580 = vmul.f32 -0.5, %v422
  %v581 = vadd.f32 %v580, 1.0
  %v582 = vmul.f32 %v581, %v422
  %v583 = vand.u32 2147483647, %v422
  %vm584 = vcmp.lt.f32.partialorder %v583, 0.0004427343
  %v585 = vsel %vm584, %v582, %v579
  %v586 = vadd.f32 %v424, 1.0
  %v587 = vlog2.pop %v586
  %v588 = vmul.f32 %v587, 0.6931472
  %v589 = vmul.f32 -0.5, %v424
  %v590 = vadd.f32 %v589, 1.0
  %v591 = vmul.f32 %v590, %v424
  %v592 = vand.u32 2147483647, %v424
  %vm593 = vcmp.lt.f32.partialorder %v592, 0.0004427343
  %v594 = vsel %vm593, %v591, %v588
  %v595 = vadd.f32 %v426, 1.0
  %v596 = vlog2.pop %v595
  %v597 = vmul.f32 %v596, 0.6931472
  %v598 = vmul.f32 -0.5, %v426
  %v599 = vadd.f32 %v598, 1.0
  %v600 = vmul.f32 %v599, %v426
  %v601 = vand.u32 2147483647, %v426
  %vm602 = vcmp.lt.f32.partialorder %v601, 0.0004427343
  %v603 = vsel %vm602, %v600, %v597
  %v604 = vadd.f32 %v428, 1.0
  %v605 = vlog2.pop %v604
  %v606 = vmul.f32 %v605, 0.6931472
  %v607 = vmul.f32 -0.5, %v428
  %v608 = vadd.f32 %v607, 1.0
  %v609 = vmul.f32 %v608, %v428
  %v610 = vand.u32 2147483647, %v428
  %vm611 = vcmp.lt.f32.partialorder %v610, 0.0004427343
  %v612 = vsel %vm611, %v609, %v606
  %v613 = vadd.f32 %v430, 1.0
  %v614 = vlog2.pop %v613
  %v615 = vmul.f32 %v614, 0.6931472
  %v616 = vmul.f32 -0.5, %v430
  %v617 = vadd.f32 %v616, 1.0
  %v618 = vmul.f32 %v617, %v430
  %v619 = vand.u32 2147483647, %v430
  %vm620 = vcmp.lt.f32.partialorder %v619, 0.0004427343
  %v621 = vsel %vm620, %v618, %v615
  %v622 = vadd.f32 %v432, 1.0
  %v623 = vlog2.pop %v622
  %v624 = vmul.f32 %v623, 0.6931472
  %v625 = vmul.f32 -0.5, %v432
  %v626 = vadd.f32 %v625, 1.0
  %v627 = vmul.f32 %v626, %v432
  %v628 = vand.u32 2147483647, %v432
  %vm629 = vcmp.lt.f32.partialorder %v628, 0.0004427343
  %v630 = vsel %vm629, %v627, %v624
  %v631 = vadd.f32 %v434, 1.0
  %v632 = vlog2.pop %v631
  %v633 = vmul.f32 %v632, 0.6931472
  %v634 = vmul.f32 -0.5, %v434
  %v635 = vadd.f32 %v634, 1.0
  %v636 = vmul.f32 %v635, %v434
  %v637 = vand.u32 2147483647, %v434
  %vm638 = vcmp.lt.f32.partialorder %v637, 0.0004427343
  %v639 = vsel %vm638, %v636, %v633
  %v640 = vadd.f32 %v436, 1.0
  %v641 = vlog2.pop %v640
  %v642 = vmul.f32 %v641, 0.6931472
  %v643 = vmul.f32 -0.5, %v436
  %v644 = vadd.f32 %v643, 1.0
  %v645 = vmul.f32 %v644, %v436
  %v646 = vand.u32 2147483647, %v436
  %vm647 = vcmp.lt.f32.partialorder %v646, 0.0004427343
  %v648 = vsel %vm647, %v645, %v642
  %v649 = vadd.f32 %v438, 1.0
  %v650 = vlog2.pop %v649
  %v651 = vmul.f32 %v650, 0.6931472
  %v652 = vmul.f32 -0.5, %v438
  %v653 = vadd.f32 %v652, 1.0
  %v654 = vmul.f32 %v653, %v438
  %v655 = vand.u32 2147483647, %v438
  %vm656 = vcmp.lt.f32.partialorder %v655, 0.0004427343
  %v657 = vsel %vm656, %v654, %v651
  %v658 = vadd.f32 %v440, 1.0
  %v659 = vlog2.pop %v658
  %v660 = vmul.f32 %v659, 0.6931472
  %v661 = vmul.f32 -0.5, %v440
  %v662 = vadd.f32 %v661, 1.0
  %v663 = vmul.f32 %v662, %v440
  %v664 = vand.u32 2147483647, %v440
  %vm665 = vcmp.lt.f32.partialorder %v664, 0.0004427343
  %v666 = vsel %vm665, %v663, %v660
  %v667 = vadd.f32 %v442, 1.0
  %v668 = vlog2.pop %v667
  %v669 = vmul.f32 %v668, 0.6931472
  %v670 = vmul.f32 -0.5, %v442
  %v671 = vadd.f32 %v670, 1.0
  %v672 = vmul.f32 %v671, %v442
  %v673 = vand.u32 2147483647, %v442
  %vm674 = vcmp.lt.f32.partialorder %v673, 0.0004427343
  %v675 = vsel %vm674, %v672, %v669
  %v676 = vadd.f32 %v444, 1.0
  %v677 = vlog2.pop %v676
  %v678 = vmul.f32 %v677, 0.6931472
  %v679 = vmul.f32 -0.5, %v444
  %v680 = vadd.f32 %v679, 1.0
  %v681 = vmul.f32 %v680, %v444
  %v682 = vand.u32 2147483647, %v444
  %vm683 = vcmp.lt.f32.partialorder %v682, 0.0004427343
  %v684 = vsel %vm683, %v681, %v678
  %v685 = vadd.f32 %v446, 1.0
  %v686 = vlog2.pop %v685
  %v687 = vmul.f32 %v686, 0.6931472
  %v688 = vmul.f32 -0.5, %v446
  %v689 = vadd.f32 %v688, 1.0
  %v690 = vmul.f32 %v689, %v446
  %v691 = vand.u32 2147483647, %v446
  %vm692 = vcmp.lt.f32.partialorder %v691, 0.0004427343
  %v693 = vsel %vm692, %v690, %v687
  %v694 = vadd.f32 %v448, 1.0
  %v695 = vlog2.pop %v694
  %v696 = vmul.f32 %v695, 0.6931472
  %v697 = vmul.f32 -0.5, %v448
  %v698 = vadd.f32 %v697, 1.0
  %v699 = vmul.f32 %v698, %v448
  %v700 = vand.u32 2147483647, %v448
  %vm701 = vcmp.lt.f32.partialorder %v700, 0.0004427343
  %v702 = vsel %vm701, %v699, %v696
  %v703 = vadd.f32 %v450, 1.0
  %v704 = vlog2.pop %v703
  %v705 = vmul.f32 %v704, 0.6931472
  %v706 = vmul.f32 -0.5, %v450
  %v707 = vadd.f32 %v706, 1.0
  %v708 = vmul.f32 %v707, %v450
  %v709 = vand.u32 2147483647, %v450
  %vm710 = vcmp.lt.f32.partialorder %v709, 0.0004427343
  %v711 = vsel %vm710, %v708, %v705
  %v712 = vadd.f32 %v452, 1.0
  %v713 = vlog2.pop %v712
  %v714 = vmul.f32 %v713, 0.6931472
  %v715 = vmul.f32 -0.5, %v452
  %v716 = vadd.f32 %v715, 1.0
  %v717 = vmul.f32 %v716, %v452
  %v718 = vand.u32 2147483647, %v452
  %vm719 = vcmp.lt.f32.partialorder %v718, 0.0004427343
  %v720 = vsel %vm719, %v717, %v714
  %v721 = vadd.f32 %v454, 1.0
  %v722 = vlog2.pop %v721
  %v723 = vmul.f32 %v722, 0.6931472
  %v724 = vmul.f32 -0.5, %v454
  %v725 = vadd.f32 %v724, 1.0
  %v726 = vmul.f32 %v725, %v454
  %v727 = vand.u32 2147483647, %v454
  %vm728 = vcmp.lt.f32.partialorder %v727, 0.0004427343
  %v729 = vsel %vm728, %v726, %v723
  %v730 = vadd.f32 %v456, 1.0
  %v731 = vlog2.pop %v730
  %v732 = vmul.f32 %v731, 0.6931472
  %v733 = vmul.f32 -0.5, %v456
  %v734 = vadd.f32 %v733, 1.0
  %v735 = vmul.f32 %v734, %v456
  %v736 = vand.u32 2147483647, %v456
  %vm737 = vcmp.lt.f32.partialorder %v736, 0.0004427343
  %v738 = vsel %vm737, %v735, %v732
  %v739 = vadd.f32 %v458, 1.0
  %v740 = vlog2.pop %v739
  %v741 = vmul.f32 %v740, 0.6931472
  %v742 = vmul.f32 -0.5, %v458
  %v743 = vadd.f32 %v742, 1.0
  %v744 = vmul.f32 %v743, %v458
  %v745 = vand.u32 2147483647, %v458
  %vm746 = vcmp.lt.f32.partialorder %v745, 0.0004427343
  %v747 = vsel %vm746, %v744, %v741
  %v748 = vadd.f32 %v460, 1.0
  %v749 = vlog2.pop %v748
  %v750 = vmul.f32 %v749, 0.6931472
  %v751 = vmul.f32 -0.5, %v460
  %v752 = vadd.f32 %v751, 1.0
  %v753 = vmul.f32 %v752, %v460
  %v754 = vand.u32 2147483647, %v460
  %vm755 = vcmp.lt.f32.partialorder %v754, 0.0004427343
  %v756 = vsel %vm755, %v753, %v750
  %v757 = vadd.f32 %v462, 1.0
  %v758 = vlog2.pop %v757
  %v759 = vmul.f32 %v758, 0.6931472
  %v760 = vmul.f32 -0.5, %v462
  %v761 = vadd.f32 %v760, 1.0
  %v762 = vmul.f32 %v761, %v462
  %v763 = vand.u32 2147483647, %v462
  %vm764 = vcmp.lt.f32.partialorder %v763, 0.0004427343
  %v765 = vsel %vm764, %v762, %v759
  %v766 = vadd.f32 %v464, 1.0
  %v767 = vlog2.pop %v766
  %v768 = vmul.f32 %v767, 0.6931472
  %v769 = vmul.f32 -0.5, %v464
  %v770 = vadd.f32 %v769, 1.0
  %v771 = vmul.f32 %v770, %v464
  %v772 = vand.u32 2147483647, %v464
  %vm773 = vcmp.lt.f32.partialorder %v772, 0.0004427343
  %v774 = vsel %vm773, %v771, %v768
  %v775 = vadd.f32 %v466, 1.0
  %v776 = vlog2.pop %v775
  %v777 = vmul.f32 %v776, 0.6931472
  %v778 = vmul.f32 -0.5, %v466
  %v779 = vadd.f32 %v778, 1.0
  %v780 = vmul.f32 %v779, %v466
  %v781 = vand.u32 2147483647, %v466
  %vm782 = vcmp.lt.f32.partialorder %v781, 0.0004427343
  %v783 = vsel %vm782, %v780, %v777
  %v784 = vadd.f32 %v468, 1.0
  %v785 = vlog2.pop %v784
  %v786 = vmul.f32 %v785, 0.6931472
  %v787 = vmul.f32 -0.5, %v468
  %v788 = vadd.f32 %v787, 1.0
  %v789 = vmul.f32 %v788, %v468
  %v790 = vand.u32 2147483647, %v468
  %vm791 = vcmp.lt.f32.partialorder %v790, 0.0004427343
  %v792 = vsel %vm791, %v789, %v786
  %v793 = vadd.f32 %v470, 1.0
  %v794 = vlog2.pop %v793
  %v795 = vmul.f32 %v794, 0.6931472
  %v796 = vmul.f32 -0.5, %v470
  %v797 = vadd.f32 %v796, 1.0
  %v798 = vmul.f32 %v797, %v470
  %v799 = vand.u32 2147483647, %v470
  %vm800 = vcmp.lt.f32.partialorder %v799, 0.0004427343
  %v801 = vsel %vm800, %v798, %v795
  %v802 = vadd.f32 %v472, 1.0
  %v803 = vlog2.pop %v802
  %v804 = vmul.f32 %v803, 0.6931472
  %v805 = vmul.f32 -0.5, %v472
  %v806 = vadd.f32 %v805, 1.0
  %v807 = vmul.f32 %v806, %v472
  %v808 = vand.u32 2147483647, %v472
  %vm809 = vcmp.lt.f32.partialorder %v808, 0.0004427343
  %v810 = vsel %vm809, %v807, %v804
  %v811 = vadd.f32 %v474, 1.0
  %v812 = vlog2.pop %v811
  %v813 = vmul.f32 %v812, 0.6931472
  %v814 = vmul.f32 -0.5, %v474
  %v815 = vadd.f32 %v814, 1.0
  %v816 = vmul.f32 %v815, %v474
  %v817 = vand.u32 2147483647, %v474
  %vm818 = vcmp.lt.f32.partialorder %v817, 0.0004427343
  %v819 = vsel %vm818, %v816, %v813
  %v820 = vadd.f32 %v476, 1.0
  %v821 = vlog2.pop %v820
  %v822 = vmul.f32 %v821, 0.6931472
  %v823 = vmul.f32 -0.5, %v476
  %v824 = vadd.f32 %v823, 1.0
  %v825 = vmul.f32 %v824, %v476
  %v826 = vand.u32 2147483647, %v476
  %vm827 = vcmp.lt.f32.partialorder %v826, 0.0004427343
  %v828 = vsel %vm827, %v825, %v822
  %v829 = vadd.f32 %v478, 1.0
  %v830 = vlog2.pop %v829
  %v831 = vmul.f32 %v830, 0.6931472
  %v832 = vmul.f32 -0.5, %v478
  %v833 = vadd.f32 %v832, 1.0
  %v834 = vmul.f32 %v833, %v478
  %v835 = vand.u32 2147483647, %v478
  %vm836 = vcmp.lt.f32.partialorder %v835, 0.0004427343
  %v837 = vsel %vm836, %v834, %v831
  %v838 = vadd.f32 %v480, 1.0
  %v839 = vlog2.pop %v838
  %v840 = vmul.f32 %v839, 0.6931472
  %v841 = vmul.f32 -0.5, %v480
  %v842 = vadd.f32 %v841, 1.0
  %v843 = vmul.f32 %v842, %v480
  %v844 = vand.u32 2147483647, %v480
  %vm845 = vcmp.lt.f32.partialorder %v844, 0.0004427343
  %v846 = vsel %vm845, %v843, %v840
  %v847 = vadd.f32 %v482, 1.0
  %v848 = vlog2.pop %v847
  %v849 = vmul.f32 %v848, 0.6931472
  %v850 = vmul.f32 -0.5, %v482
  %v851 = vadd.f32 %v850, 1.0
  %v852 = vmul.f32 %v851, %v482
  %v853 = vand.u32 2147483647, %v482
  %vm854 = vcmp.lt.f32.partialorder %v853, 0.0004427343
  %v855 = vsel %vm854, %v852, %v849
  %v856 = vadd.f32 %v484, 1.0
  %v857 = vlog2.pop %v856
  %v858 = vmul.f32 %v857, 0.6931472
  %v859 = vmul.f32 -0.5, %v484
  %v860 = vadd.f32 %v859, 1.0
  %v861 = vmul.f32 %v860, %v484
  %v862 = vand.u32 2147483647, %v484
  %vm863 = vcmp.lt.f32.partialorder %v862, 0.0004427343
  %v864 = vsel %vm863, %v861, %v858
  %v865 = vadd.f32 %v486, 1.0
  %v866 = vlog2.pop %v865
  %v867 = vmul.f32 %v866, 0.6931472
  %v868 = vmul.f32 -0.5, %v486
  %v869 = vadd.f32 %v868, 1.0
  %v870 = vmul.f32 %v869, %v486
  %v871 = vand.u32 2147483647, %v486
  %vm872 = vcmp.lt.f32.partialorder %v871, 0.0004427343
  %v873 = vsel %vm872, %v870, %v867
  %v874 = vadd.f32 %v488, 1.0
  %v875 = vlog2.pop %v874
  %v876 = vmul.f32 %v875, 0.6931472
  %v877 = vmul.f32 -0.5, %v488
  %v878 = vadd.f32 %v877, 1.0
  %v879 = vmul.f32 %v878, %v488
  %v880 = vand.u32 2147483647, %v488
  %vm881 = vcmp.lt.f32.partialorder %v880, 0.0004427343
  %v882 = vsel %vm881, %v879, %v876
  %v883 = vadd.f32 %v490, 1.0
  %v884 = vlog2.pop %v883
  %v885 = vmul.f32 %v884, 0.6931472
  %v886 = vmul.f32 -0.5, %v490
  %v887 = vadd.f32 %v886, 1.0
  %v888 = vmul.f32 %v887, %v490
  %v889 = vand.u32 2147483647, %v490
  %vm890 = vcmp.lt.f32.partialorder %v889, 0.0004427343
  %v891 = vsel %vm890, %v888, %v885
  %v892 = vadd.f32 %v492, 1.0
  %v893 = vlog2.pop %v892
  %v894 = vmul.f32 %v893, 0.6931472
  %v895 = vmul.f32 -0.5, %v492
  %v896 = vadd.f32 %v895, 1.0
  %v897 = vmul.f32 %v896, %v492
  %v898 = vand.u32 2147483647, %v492
  %vm899 = vcmp.lt.f32.partialorder %v898, 0.0004427343
  %v900 = vsel %vm899, %v897, %v894
  %v901 = vadd.f32 %v494, 1.0
  %v902 = vlog2.pop %v901
  %v903 = vmul.f32 %v902, 0.6931472
  %v904 = vmul.f32 -0.5, %v494
  %v905 = vadd.f32 %v904, 1.0
  %v906 = vmul.f32 %v905, %v494
  %v907 = vand.u32 2147483647, %v494
  %vm908 = vcmp.lt.f32.partialorder %v907, 0.0004427343
  %v909 = vsel %vm908, %v906, %v903
  %v910 = vadd.f32 %v496, 1.0
  %v911 = vlog2.pop %v910
  %v912 = vmul.f32 %v911, 0.6931472
  %v913 = vmul.f32 -0.5, %v496
  %v914 = vadd.f32 %v913, 1.0
  %v915 = vmul.f32 %v914, %v496
  %v916 = vand.u32 2147483647, %v496
  %vm917 = vcmp.lt.f32.partialorder %v916, 0.0004427343
  %v918 = vsel %vm917, %v915, %v912
  %v919 = vadd.f32 %v498, 1.0
  %v920 = vlog2.pop %v919
  %v921 = vmul.f32 %v920, 0.6931472
  %v922 = vmul.f32 -0.5, %v498
  %v923 = vadd.f32 %v922, 1.0
  %v924 = vmul.f32 %v923, %v498
  %v925 = vand.u32 2147483647, %v498
  %vm926 = vcmp.lt.f32.partialorder %v925, 0.0004427343
  %v927 = vsel %vm926, %v924, %v921
  %v928 = vadd.f32 %v500, 1.0
  %v929 = vlog2.pop %v928
  %v930 = vmul.f32 %v929, 0.6931472
  %v931 = vmul.f32 -0.5, %v500
  %v932 = vadd.f32 %v931, 1.0
  %v933 = vmul.f32 %v932, %v500
  %v934 = vand.u32 2147483647, %v500
  %vm935 = vcmp.lt.f32.partialorder %v934, 0.0004427343
  %v936 = vsel %vm935, %v933, %v930
  %v937 = vadd.f32 %v502, 1.0
  %v938 = vlog2.pop %v937
  %v939 = vmul.f32 %v938, 0.6931472
  %v940 = vmul.f32 -0.5, %v502
  %v941 = vadd.f32 %v940, 1.0
  %v942 = vmul.f32 %v941, %v502
  %v943 = vand.u32 2147483647, %v502
  %vm944 = vcmp.lt.f32.partialorder %v943, 0.0004427343
  %v945 = vsel %vm944, %v942, %v939
  %v946 = vadd.f32 %v504, 1.0
  %v947 = vlog2.pop %v946
  %v948 = vmul.f32 %v947, 0.6931472
  %v949 = vmul.f32 -0.5, %v504
  %v950 = vadd.f32 %v949, 1.0
  %v951 = vmul.f32 %v950, %v504
  %v952 = vand.u32 2147483647, %v504
  %vm953 = vcmp.lt.f32.partialorder %v952, 0.0004427343
  %v954 = vsel %vm953, %v951, %v948
  %v955 = vadd.f32 %v506, 1.0
  %v956 = vlog2.pop %v955
  %v957 = vmul.f32 %v956, 0.6931472
  %v958 = vmul.f32 -0.5, %v506
  %v959 = vadd.f32 %v958, 1.0
  %v960 = vmul.f32 %v959, %v506
  %v961 = vand.u32 2147483647, %v506
  %vm962 = vcmp.lt.f32.partialorder %v961, 0.0004427343
  %v963 = vsel %vm962, %v960, %v957
  %v964 = vadd.f32 %v508, 1.0
  %v965 = vlog2.pop %v964
  %v966 = vmul.f32 %v965, 0.6931472
  %v967 = vmul.f32 -0.5, %v508
  %v968 = vadd.f32 %v967, 1.0
  %v969 = vmul.f32 %v968, %v508
  %v970 = vand.u32 2147483647, %v508
  %vm971 = vcmp.lt.f32.partialorder %v970, 0.0004427343
  %v972 = vsel %vm971, %v969, %v966
  %v973 = vadd.f32 %v510, 1.0
  %v974 = vlog2.pop %v973
  %v975 = vmul.f32 %v974, 0.6931472
  %v976 = vmul.f32 -0.5, %v510
  %v977 = vadd.f32 %v976, 1.0
  %v978 = vmul.f32 %v977, %v510
  %v979 = vand.u32 2147483647, %v510
  %vm980 = vcmp.lt.f32.partialorder %v979, 0.0004427343
  %v981 = vsel %vm980, %v978, %v975
  %v982 = vadd.f32 %v512, 1.0
  %v983 = vlog2.pop %v982
  %v984 = vmul.f32 %v983, 0.6931472
  %v985 = vmul.f32 -0.5, %v512
  %v986 = vadd.f32 %v985, 1.0
  %v987 = vmul.f32 %v986, %v512
  %v988 = vand.u32 2147483647, %v512
  %vm989 = vcmp.lt.f32.partialorder %v988, 0.0004427343
  %v990 = vsel %vm989, %v987, %v984
  %v991 = vadd.f32 %v514, 1.0
  %v992 = vlog2.pop %v991
  %v993 = vmul.f32 %v992, 0.6931472
  %v994 = vmul.f32 -0.5, %v514
  %v995 = vadd.f32 %v994, 1.0
  %v996 = vmul.f32 %v995, %v514
  %v997 = vand.u32 2147483647, %v514
  %vm998 = vcmp.lt.f32.partialorder %v997, 0.0004427343
  %v999 = vsel %vm998, %v996, %v993
  %v1000 = vadd.f32 %v516, 1.0
  %v1001 = vlog2.pop %v1000
  %v1002 = vmul.f32 %v1001, 0.6931472
  %v1003 = vmul.f32 -0.5, %v516
  %v1004 = vadd.f32 %v1003, 1.0
  %v1005 = vmul.f32 %v1004, %v516
  %v1006 = vand.u32 2147483647, %v516
  %vm1007 = vcmp.lt.f32.partialorder %v1006, 0.0004427343
  %v1008 = vsel %vm1007, %v1005, %v1002
  %v1009 = vadd.f32 %v518, 1.0
  %v1010 = vlog2.pop %v1009
  %v1011 = vmul.f32 %v1010, 0.6931472
  %v1012 = vmul.f32 -0.5, %v518
  %v1013 = vadd.f32 %v1012, 1.0
  %v1014 = vmul.f32 %v1013, %v518
  %v1015 = vand.u32 2147483647, %v518
  %vm1016 = vcmp.lt.f32.partialorder %v1015, 0.0004427343
  %v1017 = vsel %vm1016, %v1014, %v1011
  %v1018 = vadd.f32 %v520, 1.0
  %v1019 = vlog2.pop %v1018
  %v1020 = vmul.f32 %v1019, 0.6931472
  %v1021 = vmul.f32 -0.5, %v520
  %v1022 = vadd.f32 %v1021, 1.0
  %v1023 = vmul.f32 %v1022, %v520
  %v1024 = vand.u32 2147483647, %v520
  %vm1025 = vcmp.lt.f32.partialorder %v1024, 0.0004427343
  %v1026 = vsel %vm1025, %v1023, %v1020
  %v1027 = vadd.f32 %v522, 1.0
  %v1028 = vlog2.pop %v1027
  %v1029 = vmul.f32 %v1028, 0.6931472
  %v1030 = vmul.f32 -0.5, %v522
  %v1031 = vadd.f32 %v1030, 1.0
  %v1032 = vmul.f32 %v1031, %v522
  %v1033 = vand.u32 2147483647, %v522
  %vm1034 = vcmp.lt.f32.partialorder %v1033, 0.0004427343
  %v1035 = vsel %vm1034, %v1032, %v1029
  %v1036 = vadd.f32 %v524, 1.0
  %v1037 = vlog2.pop %v1036
  %v1038 = vmul.f32 %v1037, 0.6931472
  %v1039 = vmul.f32 -0.5, %v524
  %v1040 = vadd.f32 %v1039, 1.0
  %v1041 = vmul.f32 %v1040, %v524
  %v1042 = vand.u32 2147483647, %v524
  %vm1043 = vcmp.lt.f32.partialorder %v1042, 0.0004427343
  %v1044 = vsel %vm1043, %v1041, %v1038
  %v1045 = vadd.f32 %v526, 1.0
  %v1046 = vlog2.pop %v1045
  %v1047 = vmul.f32 %v1046, 0.6931472
  %v1048 = vmul.f32 -0.5, %v526
  %v1049 = vadd.f32 %v1048, 1.0
  %v1050 = vmul.f32 %v1049, %v526
  %v1051 = vand.u32 2147483647, %v526
  %vm1052 = vcmp.lt.f32.partialorder %v1051, 0.0004427343
  %v1053 = vsel %vm1052, %v1050, %v1047
  %v1054 = vadd.f32 %v528, 1.0
  %v1055 = vlog2.pop %v1054
  %v1056 = vmul.f32 %v1055, 0.6931472
  %v1057 = vmul.f32 -0.5, %v528
  %v1058 = vadd.f32 %v1057, 1.0
  %v1059 = vmul.f32 %v1058, %v528
  %v1060 = vand.u32 2147483647, %v528
  %vm1061 = vcmp.lt.f32.partialorder %v1060, 0.0004427343
  %v1062 = vsel %vm1061, %v1059, %v1056
  %v1063 = vadd.f32 %v530, 1.0
  %v1064 = vlog2.pop %v1063
  %v1065 = vmul.f32 %v1064, 0.6931472
  %v1066 = vmul.f32 -0.5, %v530
  %v1067 = vadd.f32 %v1066, 1.0
  %v1068 = vmul.f32 %v1067, %v530
  %v1069 = vand.u32 2147483647, %v530
  %vm1070 = vcmp.lt.f32.partialorder %v1069, 0.0004427343
  %v1071 = vsel %vm1070, %v1068, %v1065
  %v1072 = vadd.f32 %v532, 1.0
  %v1073 = vlog2.pop %v1072
  %v1074 = vmul.f32 %v1073, 0.6931472
  %v1075 = vmul.f32 -0.5, %v532
  %v1076 = vadd.f32 %v1075, 1.0
  %v1077 = vmul.f32 %v1076, %v532
  %v1078 = vand.u32 2147483647, %v532
  %vm1079 = vcmp.lt.f32.partialorder %v1078, 0.0004427343
  %v1080 = vsel %vm1079, %v1077, %v1074
  %v1081 = vadd.f32 %v534, 1.0
  %v1082 = vlog2.pop %v1081
  %v1083 = vmul.f32 %v1082, 0.6931472
  %v1084 = vmul.f32 -0.5, %v534
  %v1085 = vadd.f32 %v1084, 1.0
  %v1086 = vmul.f32 %v1085, %v534
  %v1087 = vand.u32 2147483647, %v534
  %vm1088 = vcmp.lt.f32.partialorder %v1087, 0.0004427343
  %v1089 = vsel %vm1088, %v1086, %v1083
  %v1090 = vadd.f32 %v536, 1.0
  %v1091 = vlog2.pop %v1090
  %v1092 = vmul.f32 %v1091, 0.6931472
  %v1093 = vmul.f32 -0.5, %v536
  %v1094 = vadd.f32 %v1093, 1.0
  %v1095 = vmul.f32 %v1094, %v536
  %v1096 = vand.u32 2147483647, %v536
  %vm1097 = vcmp.lt.f32.partialorder %v1096, 0.0004427343
  %v1098 = vsel %vm1097, %v1095, %v1092
  %v1099 = vadd.f32 %v538, 1.0
  %v1100 = vlog2.pop %v1099
  %v1101 = vmul.f32 %v1100, 0.6931472
  %v1102 = vmul.f32 -0.5, %v538
  %v1103 = vadd.f32 %v1102, 1.0
  %v1104 = vmul.f32 %v1103, %v538
  %v1105 = vand.u32 2147483647, %v538
  %vm1106 = vcmp.lt.f32.partialorder %v1105, 0.0004427343
  %v1107 = vsel %vm1106, %v1104, %v1101
  %v1108 = vadd.f32 %v540, 1.0
  %v1109 = vlog2.pop %v1108
  %v1110 = vmul.f32 %v1109, 0.6931472
  %v1111 = vmul.f32 -0.5, %v540
  %v1112 = vadd.f32 %v1111, 1.0
  %v1113 = vmul.f32 %v1112, %v540
  %v1114 = vand.u32 2147483647, %v540
  %vm1115 = vcmp.lt.f32.partialorder %v1114, 0.0004427343
  %v1116 = vsel %vm1115, %v1113, %v1110
  %v1117 = vadd.f32 %v221, %v549
  %v1118 = vadd.f32 %v222, %v558
  %v1119 = vadd.f32 %v223, %v567
  %v1120 = vadd.f32 %v224, %v576
  %v1121 = vadd.f32 %v225, %v585
  %v1122 = vadd.f32 %v226, %v594
  %v1123 = vadd.f32 %v227, %v603
  %v1124 = vadd.f32 %v228, %v612
  %v1125 = vadd.f32 %v229, %v621
  %v1126 = vadd.f32 %v230, %v630
  %v1127 = vadd.f32 %v231, %v639
  %v1128 = vadd.f32 %v232, %v648
  %v1129 = vadd.f32 %v233, %v657
  %v1130 = vadd.f32 %v234, %v666
  %v1131 = vadd.f32 %v235, %v675
  %v1132 = vadd.f32 %v236, %v684
  %v1133 = vadd.f32 %v237, %v693
  %v1134 = vadd.f32 %v238, %v702
  %v1135 = vadd.f32 %v239, %v711
  %v1136 = vadd.f32 %v240, %v720
  %v1137 = vadd.f32 %v241, %v729
  %v1138 = vadd.f32 %v242, %v738
  %v1139 = vadd.f32 %v243, %v747
  %v1140 = vadd.f32 %v244, %v756
  %v1141 = vadd.f32 %v245, %v765
  %v1142 = vadd.f32 %v246, %v774
  %v1143 = vadd.f32 %v247, %v783
  %v1144 = vadd.f32 %v248, %v792
  %v1145 = vadd.f32 %v249, %v801
  %v1146 = vadd.f32 %v250, %v810
  %v1147 = vadd.f32 %v251, %v819
  %v1148 = vadd.f32 %v252, %v828
  %v1149 = vadd.f32 %v253, %v837
  %v1150 = vadd.f32 %v254, %v846
  %v1151 = vadd.f32 %v255, %v855
  %v1152 = vadd.f32 %v256, %v864
  %v1153 = vadd.f32 %v257, %v873
  %v1154 = vadd.f32 %v258, %v882
  %v1155 = vadd.f32 %v259, %v891
  %v1156 = vadd.f32 %v260, %v900
  %v1157 = vadd.f32 %v261, %v909
  %v1158 = vadd.f32 %v262, %v918
  %v1159 = vadd.f32 %v263, %v927
  %v1160 = vadd.f32 %v264, %v936
  %v1161 = vadd.f32 %v265, %v945
  %v1162 = vadd.f32 %v266, %v954
  %v1163 = vadd.f32 %v267, %v963
  %v1164 = vadd.f32 %v268, %v972
  %v1165 = vadd.f32 %v269, %v981
  %v1166 = vadd.f32 %v270, %v990
  %v1167 = vadd.f32 %v271, %v999
  %v1168 = vadd.f32 %v272, %v1008
  %v1169 = vadd.f32 %v273, %v1017
  %v1170 = vadd.f32 %v274, %v1026
  %v1171 = vadd.f32 %v275, %v1035
  %v1172 = vadd.f32 %v276, %v1044
  %v1173 = vadd.f32 %v277, %v1053
  %v1174 = vadd.f32 %v278, %v1062
  %v1175 = vadd.f32 %v279, %v1071
  %v1176 = vadd.f32 %v280, %v1080
  %v1177 = vadd.f32 %v281, %v1089
  %v1178 = vadd.f32 %v282, %v1098
  %v1179 = vadd.f32 %v283, %v1107
  %v1180 = vadd.f32 %v284, %v1116
  %v1181 = vmul.f32 %v93, %v1117
  %v1182 = vmul.f32 %v94, %v1118
  %v1183 = vmul.f32 %v95, %v1119
  %v1184 = vmul.f32 %v96, %v1120
  %v1185 = vmul.f32 %v97, %v1121
  %v1186 = vmul.f32 %v98, %v1122
  %v1187 = vmul.f32 %v99, %v1123
  %v1188 = vmul.f32 %v100, %v1124
  %v1189 = vmul.f32 %v101, %v1125
  %v1190 = vmul.f32 %v102, %v1126
  %v1191 = vmul.f32 %v103, %v1127
  %v1192 = vmul.f32 %v104, %v1128
  %v1193 = vmul.f32 %v105, %v1129
  %v1194 = vmul.f32 %v106, %v1130
  %v1195 = vmul.f32 %v107, %v1131
  %v1196 = vmul.f32 %v108, %v1132
  %v1197 = vmul.f32 %v109, %v1133
  %v1198 = vmul.f32 %v110, %v1134
  %v1199 = vmul.f32 %v111, %v1135
  %v1200 = vmul.f32 %v112, %v1136
  %v1201 = vmul.f32 %v113, %v1137
  %v1202 = vmul.f32 %v114, %v1138
  %v1203 = vmul.f32 %v115, %v1139
  %v1204 = vmul.f32 %v116, %v1140
  %v1205 = vmul.f32 %v117, %v1141
  %v1206 = vmul.f32 %v118, %v1142
  %v1207 = vmul.f32 %v119, %v1143
  %v1208 = vmul.f32 %v120, %v1144
  %v1209 = vmul.f32 %v121, %v1145
  %v1210 = vmul.f32 %v122, %v1146
  %v1211 = vmul.f32 %v123, %v1147
  %v1212 = vmul.f32 %v124, %v1148
  %v1213 = vmul.f32 %v125, %v1149
  %v1214 = vmul.f32 %v126, %v1150
  %v1215 = vmul.f32 %v127, %v1151
  %v1216 = vmul.f32 %v128, %v1152
  %v1217 = vmul.f32 %v129, %v1153
  %v1218 = vmul.f32 %v130, %v1154
  %v1219 = vmul.f32 %v131, %v1155
  %v1220 = vmul.f32 %v132, %v1156
  %v1221 = vmul.f32 %v133, %v1157
  %v1222 = vmul.f32 %v134, %v1158
  %v1223 = vmul.f32 %v135, %v1159
  %v1224 = vmul.f32 %v136, %v1160
  %v1225 = vmul.f32 %v137, %v1161
  %v1226 = vmul.f32 %v138, %v1162
  %v1227 = vmul.f32 %v139, %v1163
  %v1228 = vmul.f32 %v140, %v1164
  %v1229 = vmul.f32 %v141, %v1165
  %v1230 = vmul.f32 %v142, %v1166
  %v1231 = vmul.f32 %v143, %v1167
  %v1232 = vmul.f32 %v144, %v1168
  %v1233 = vmul.f32 %v145, %v1169
  %v1234 = vmul.f32 %v146, %v1170
  %v1235 = vmul.f32 %v147, %v1171
  %v1236 = vmul.f32 %v148, %v1172
  %v1237 = vmul.f32 %v149, %v1173
  %v1238 = vmul.f32 %v150, %v1174
  %v1239 = vmul.f32 %v151, %v1175
  %v1240 = vmul.f32 %v152, %v1176
  %v1241 = vmul.f32 %v153, %v1177
  %v1242 = vmul.f32 %v154, %v1178
  %v1243 = vmul.f32 %v155, %v1179
  %v1244 = vmul.f32 %v156, %v1180
  %v1245 = vadd.f32 %v29, %v1181
  %v1246 = vadd.f32 %v30, %v1182
  %v1247 = vadd.f32 %v31, %v1183
  %v1248 = vadd.f32 %v32, %v1184
  %v1249 = vadd.f32 %v33, %v1185
  %v1250 = vadd.f32 %v34, %v1186
  %v1251 = vadd.f32 %v35, %v1187
  %v1252 = vadd.f32 %v36, %v1188
  %v1253 = vadd.f32 %v37, %v1189
  %v1254 = vadd.f32 %v38, %v1190
  %v1255 = vadd.f32 %v39, %v1191
  %v1256 = vadd.f32 %v40, %v1192
  %v1257 = vadd.f32 %v41, %v1193
  %v1258 = vadd.f32 %v42, %v1194
  %v1259 = vadd.f32 %v43, %v1195
  %v1260 = vadd.f32 %v44, %v1196
  %v1261 = vadd.f32 %v45, %v1197
  %v1262 = vadd.f32 %v46, %v1198
  %v1263 = vadd.f32 %v47, %v1199
  %v1264 = vadd.f32 %v48, %v1200
  %v1265 = vadd.f32 %v49, %v1201
  %v1266 = vadd.f32 %v50, %v1202
  %v1267 = vadd.f32 %v51, %v1203
  %v1268 = vadd.f32 %v52, %v1204
  %v1269 = vadd.f32 %v53, %v1205
  %v1270 = vadd.f32 %v54, %v1206
  %v1271 = vadd.f32 %v55, %v1207
  %v1272 = vadd.f32 %v56, %v1208
  %v1273 = vadd.f32 %v57, %v1209
  %v1274 = vadd.f32 %v58, %v1210
  %v1275 = vadd.f32 %v59, %v1211
  %v1276 = vadd.f32 %v60, %v1212
  %v1277 = vadd.f32 %v61, %v1213
  %v1278 = vadd.f32 %v62, %v1214
  %v1279 = vadd.f32 %v63, %v1215
  %v1280 = vadd.f32 %v64, %v1216
  %v1281 = vadd.f32 %v65, %v1217
  %v1282 = vadd.f32 %v66, %v1218
  %v1283 = vadd.f32 %v67, %v1219
  %v1284 = vadd.f32 %v68, %v1220
  %v1285 = vadd.f32 %v69, %v1221
  %v1286 = vadd.f32 %v70, %v1222
  %v1287 = vadd.f32 %v71, %v1223
  %v1288 = vadd.f32 %v72, %v1224
  %v1289 = vadd.f32 %v73, %v1225
  %v1290 = vadd.f32 %v74, %v1226
  %v1291 = vadd.f32 %v75, %v1227
  %v1292 = vadd.f32 %v76, %v1228
  %v1293 = vadd.f32 %v77, %v1229
  %v1294 = vadd.f32 %v78, %v1230
  %v1295 = vadd.f32 %v79, %v1231
  %v1296 = vadd.f32 %v80, %v1232
  %v1297 = vadd.f32 %v81, %v1233
  %v1298 = vadd.f32 %v82, %v1234
  %v1299 = vadd.f32 %v83, %v1235
  %v1300 = vadd.f32 %v84, %v1236
  %v1301 = vadd.f32 %v85, %v1237
  %v1302 = vadd.f32 %v86, %v1238
  %v1303 = vadd.f32 %v87, %v1239
  %v1304 = vadd.f32 %v88, %v1240
  %v1305 = vadd.f32 %v89, %v1241
  %v1306 = vadd.f32 %v90, %v1242
  %v1307 = vadd.f32 %v91, %v1243
  %v1308 = vadd.f32 %v92, %v1244
  %v1309 = vld [vmem:[%s4] sm:$0x1]
  %v1310 = vld [vmem:[%s6] sm:$0x1]
  %v1311 = vld [vmem:[%s5] sm:$0x1]
  %v1312 = vmax.f32 %v1311, 0.0
  %v1313 = vand.u32 2147483647, %v1311
  %v1314 = vsub.f32 0.0, %v1313
  %v1315 = vmul.f32 %v1314, 1.442695
  %v1316 = vpow.pop %v1315
  %v1317 = vadd.f32 %v1316, 1.0
  %v1318 = vlog2.pop %v1317
  %v1319 = vmul.f32 %v1318, 0.6931472
  %v1320 = vmul.f32 -0.5, %v1316
  %v1321 = vadd.f32 %v1320, 1.0
  %v1322 = vmul.f32 %v1321, %v1316
  %v1323 = vand.u32 2147483647, %v1316
  %vm1324 = vcmp.lt.f32.partialorder %v1323, 0.0004427343
  %v1325 = vsel %vm1324, %v1322, %v1319
  %v1326 = vadd.f32 %v1312, %v1325
  %v1327 = vmul.f32 %v1310, %v1326
  %v1328 = vadd.f32 %v1309, %v1327
  %v1329 = vld [vmem:[%s0] sm:$0xff]
  %v1330 = vld [vmem:[%s0 + $0x8] sm:$0xff]
  %v1331 = vld [vmem:[%s0 + $0x10] sm:$0xff]
  %v1332 = vld [vmem:[%s0 + $0x18] sm:$0xff]
  %v1333 = vld [vmem:[%s0 + $0x20] sm:$0xff]
  %v1334 = vld [vmem:[%s0 + $0x28] sm:$0xff]
  %v1335 = vld [vmem:[%s0 + $0x30] sm:$0xff]
  %v1336 = vld [vmem:[%s0 + $0x38] sm:$0xff]
  %1337 = vmatprep.subr.mxu0 0.0
  %1338 = vmatpush1.msra.mxu0 %v1260
  %1339 = vmatprep.subr.mxu0 0.0
  %1340 = vmatpush1.msra.mxu0 %v1259
  %1341 = vmatprep.subr.mxu0 0.0
  %1342 = vmatpush1.msra.mxu0 %v1258
  %1343 = vmatprep.subr.mxu0 0.0
  %1344 = vmatpush1.msra.mxu0 %v1257
  %1345 = vmatprep.subr.mxu0 0.0
  %1346 = vmatpush1.msra.mxu0 %v1256
  %1347 = vmatprep.subr.mxu0 0.0
  %1348 = vmatpush1.msra.mxu0 %v1255
  %1349 = vmatprep.subr.mxu0 0.0
  %1350 = vmatpush1.msra.mxu0 %v1254
  %1351 = vmatprep.subr.mxu0 0.0
  %1352 = vmatpush1.msra.mxu0 %v1253
  %1353 = vmatprep.subr.mxu0 0.0
  %1354 = vmatpush1.msra.mxu0 %v1252
  %1355 = vmatprep.subr.mxu0 0.0
  %1356 = vmatpush1.msra.mxu0 %v1251
  %1357 = vmatprep.subr.mxu0 0.0
  %1358 = vmatpush1.msra.mxu0 %v1250
  %1359 = vmatprep.subr.mxu0 0.0
  %1360 = vmatpush1.msra.mxu0 %v1249
  %1361 = vmatprep.subr.mxu0 0.0
  %1362 = vmatpush1.msra.mxu0 %v1248
  %1363 = vmatprep.subr.mxu0 0.0
  %1364 = vmatpush1.msra.mxu0 %v1247
  %1365 = vmatprep.subr.mxu0 0.0
  %1366 = vmatpush1.msra.mxu0 %v1246
  %1367 = vmatprep.subr.mxu0 0.0
  %1368 = vmatpush1.msra.mxu0 %v1245
  %1369 = vmatprep.subr.mxu0 0.0
  %1370 = vmatpush2.msra.mxu0 %v1276
  %1371 = vmatprep.subr.mxu0 0.0
  %1372 = vmatpush2.msra.mxu0 %v1275
  %1373 = vmatprep.subr.mxu0 0.0
  %1374 = vmatpush2.msra.mxu0 %v1274
  %1375 = vmatprep.subr.mxu0 0.0
  %1376 = vmatpush2.msra.mxu0 %v1273
  %1377 = vmatprep.subr.mxu0 0.0
  %1378 = vmatpush2.msra.mxu0 %v1272
  %1379 = vmatprep.subr.mxu0 0.0
  %1380 = vmatpush2.msra.mxu0 %v1271
  %1381 = vmatprep.subr.mxu0 0.0
  %1382 = vmatpush2.msra.mxu0 %v1270
  %1383 = vmatprep.subr.mxu0 0.0
  %1384 = vmatpush2.msra.mxu0 %v1269
  %1385 = vmatprep.subr.mxu0 0.0
  %1386 = vmatpush2.msra.mxu0 %v1268
  %1387 = vmatprep.subr.mxu0 0.0
  %1388 = vmatpush2.msra.mxu0 %v1267
  %1389 = vmatprep.subr.mxu0 0.0
  %1390 = vmatpush2.msra.mxu0 %v1266
  %1391 = vmatprep.subr.mxu0 0.0
  %1392 = vmatpush2.msra.mxu0 %v1265
  %1393 = vmatprep.subr.mxu0 0.0
  %1394 = vmatpush2.msra.mxu0 %v1264
  %1395 = vmatprep.subr.mxu0 0.0
  %1396 = vmatpush2.msra.mxu0 %v1263
  %1397 = vmatprep.subr.mxu0 0.0
  %1398 = vmatpush2.msra.mxu0 %v1262
  %1399 = vmatprep.subr.mxu0 0.0
  %1400 = vmatpush2.msra.mxu0 %v1261
  %1401 = vmatprep.mubr.f32.mxu0 %v1330
  %1402 = vmatmul.mubr.f32.gmra.mxu0 %v1329
  %v1403 = vpop.f32.mrf.mxu0
  %v1404 = vadd.f32 0.0, %v1403
  %v1405 = vpop.f32.mrf.mxu0
  %1406 = vmatprep.mubr.f32.mxu0 %v1334
  %1407 = vmatmul.mubr.f32.gmra.mxu0 %v1333
  %v1408 = vpop.f32.mrf.mxu0
  %v1409 = vadd.f32 0.0, %v1408
  %v1410 = vpop.f32.mrf.mxu0
  %1411 = vdwg.mxu0
  %1412 = vmatprep.subr.mxu0 0.0
  %1413 = vmatpush1.msra.mxu0 %v1292
  %1414 = vmatprep.subr.mxu0 0.0
  %1415 = vmatpush1.msra.mxu0 %v1291
  %1416 = vmatprep.subr.mxu0 0.0
  %1417 = vmatpush1.msra.mxu0 %v1290
  %1418 = vmatprep.subr.mxu0 0.0
  %1419 = vmatpush1.msra.mxu0 %v1289
  %1420 = vmatprep.subr.mxu0 0.0
  %1421 = vmatpush1.msra.mxu0 %v1288
  %1422 = vmatprep.subr.mxu0 0.0
  %1423 = vmatpush1.msra.mxu0 %v1287
  %1424 = vmatprep.subr.mxu0 0.0
  %1425 = vmatpush1.msra.mxu0 %v1286
  %1426 = vmatprep.subr.mxu0 0.0
  %1427 = vmatpush1.msra.mxu0 %v1285
  %1428 = vmatprep.subr.mxu0 0.0
  %1429 = vmatpush1.msra.mxu0 %v1284
  %1430 = vmatprep.subr.mxu0 0.0
  %1431 = vmatpush1.msra.mxu0 %v1283
  %1432 = vmatprep.subr.mxu0 0.0
  %1433 = vmatpush1.msra.mxu0 %v1282
  %1434 = vmatprep.subr.mxu0 0.0
  %1435 = vmatpush1.msra.mxu0 %v1281
  %1436 = vmatprep.subr.mxu0 0.0
  %1437 = vmatpush1.msra.mxu0 %v1280
  %1438 = vmatprep.subr.mxu0 0.0
  %1439 = vmatpush1.msra.mxu0 %v1279
  %1440 = vmatprep.subr.mxu0 0.0
  %1441 = vmatpush1.msra.mxu0 %v1278
  %1442 = vmatprep.subr.mxu0 0.0
  %1443 = vmatpush1.msra.mxu0 %v1277
  %1444 = vmatprep.subr.mxu0 0.0
  %1445 = vmatpush2.msra.mxu0 %v1308
  %1446 = vmatprep.subr.mxu0 0.0
  %1447 = vmatpush2.msra.mxu0 %v1307
  %1448 = vmatprep.subr.mxu0 0.0
  %1449 = vmatpush2.msra.mxu0 %v1306
  %1450 = vmatprep.subr.mxu0 0.0
  %1451 = vmatpush2.msra.mxu0 %v1305
  %1452 = vmatprep.subr.mxu0 0.0
  %1453 = vmatpush2.msra.mxu0 %v1304
  %1454 = vmatprep.subr.mxu0 0.0
  %1455 = vmatpush2.msra.mxu0 %v1303
  %1456 = vmatprep.subr.mxu0 0.0
  %1457 = vmatpush2.msra.mxu0 %v1302
  %1458 = vmatprep.subr.mxu0 0.0
  %1459 = vmatpush2.msra.mxu0 %v1301
  %1460 = vmatprep.subr.mxu0 0.0
  %1461 = vmatpush2.msra.mxu0 %v1300
  %1462 = vmatprep.subr.mxu0 0.0
  %1463 = vmatpush2.msra.mxu0 %v1299
  %1464 = vmatprep.subr.mxu0 0.0
  %1465 = vmatpush2.msra.mxu0 %v1298
  %1466 = vmatprep.subr.mxu0 0.0
  %1467 = vmatpush2.msra.mxu0 %v1297
  %1468 = vmatprep.subr.mxu0 0.0
  %1469 = vmatpush2.msra.mxu0 %v1296
  %1470 = vmatprep.subr.mxu0 0.0
  %1471 = vmatpush2.msra.mxu0 %v1295
  %1472 = vmatprep.subr.mxu0 0.0
  %1473 = vmatpush2.msra.mxu0 %v1294
  %1474 = vmatprep.subr.mxu0 0.0
  %1475 = vmatpush2.msra.mxu0 %v1293
  %1476 = vmatprep.mubr.f32.mxu0 %v1332
  %1477 = vmatmul.mubr.f32.gmra.mxu0 %v1331
  %v1478 = vpop.f32.mrf.mxu0
  %v1479 = vadd.f32 %v1404, %v1478
  %v1480 = vpop.f32.mrf.mxu0
  %1481 = vmatprep.mubr.f32.mxu0 %v1336
  %1482 = vmatmul.mubr.f32.gmra.mxu0 %v1335
  %v1483 = vpop.f32.mrf.mxu0
  %v1484 = vadd.f32 %v1409, %v1483
  %v1485 = vpop.f32.mrf.mxu0
  %1486 = vdwg.mxu0
  %v1488 = vlaneseq
  %v1489 = vshrl.u32 %v1488, 7
  %v1490 = vsub.s32 0, %v1489
  %v1491 = vrot.slane %v1328, %v1490
  %v1493 = vadd.f32 %v1479, %v1491
  %v1494 = vld [vmem:[%s7] sm:$0xff]
  %v1495 = vmul.f32 %v1484, %v1494
  %v1496 = vadd.f32 %v1493, %v1495
  %1497 = vst [vmem:[%s8] sm:$0xff] %v1496
  // Predicated region
  $region34: #{fwd.3} parent=0 // pred_check
    _
  $region35: #{fwd.3} parent=0 // pred_check_branch
    %1499 = sbr.rel (0) target = $region37
  $region36: #{fwd.3} parent=0 // pred_region
    _
  $region37: #{fwd.3} parent=0 // pred_fallthru
    _
  // Predicated region
  $region38: #{fwd.3} parent=0 // pred_check
    _
  $region39: #{fwd.3} parent=0 // pred_check_branch
    %1501 = sbr.rel (0) target = $region41
  $region40: #{fwd.3} parent=0 // pred_region
    _
  $region41: #{fwd.3} parent=0 // pred_fallthru
    _

// kernel: fwd.2
$region0: #{fwd.2}
  #allocation0 [shape = 'u32[]', space=smem, size = 0x4, offset = 0x4, fixed_abs, tag = 'smem constant byte address 0x4 - core index']
  #allocation1 [shape = 'u32[144,128]{1,0:T(1,128)}', space=vmem, size = 0x12000, scoped, tag = 'internal scratch']
  %s0 = inlined_call_operand.vmem [shape: f32[16,512], index: 0, kind: input, shape index: {}]
  %s1 = inlined_call_operand.hbm [shape: f32[512,512], index: 1, kind: input, shape index: {}]
  %s2 = inlined_call_operand.hbm [shape: f32[512,512], index: 2, kind: input, shape index: {}]
  %s3 = inlined_call_operand.hbm [shape: f32[512,512], index: 3, kind: input, shape index: {}]
  %s4 = inlined_call_operand.vmem [shape: f32[1,512], index: 4, kind: input, shape index: {}]
  %s5 = inlined_call_operand.vmem [shape: f32[1,512], index: 5, kind: input, shape index: {}]
  %s6 = inlined_call_operand.vmem [shape: f32[1,512], index: 6, kind: input, shape index: {}]
  %s7 = inlined_call_operand.vmem [shape: f32[8,512], index: 7, kind: input, shape index: {}]
  %s8 = inlined_call_operand.vmem [shape: f32[8,512], index: 8, kind: output, shape index: {}]
  %s9 = sld [smem:[#allocation0]]
  $region77: #{fwd.2} parent=0
    _
  %s11 = ssub.s32 1, %s9
  %s12 = scalar_select 0, %s11, %s9
  $region1: #{fwd.2} parent=0
    #allocation2 [shape = 'u8[1048576]{0}', space=vmem, size = 0x100000, scoped, tag = 'input window, operand 1']
    #allocation3 [shape = 's32[2]{0}', space=sflag, size = 0x8, scoped, tag = 'scoped memory for fwd.2']
    #allocation4 [shape = 'u8[1048576]{0}', space=vmem, size = 0x100000, scoped, tag = 'input window, operand 2']
    #allocation5 [shape = 's32[2]{0}', space=sflag, size = 0x8, scoped, tag = 'scoped memory for fwd.2']
    #allocation6 [shape = 'u8[1048576]{0}', space=vmem, size = 0x100000, scoped, tag = 'input window, operand 3']
    %13 = vsyncpa [#allocation3], 0
    %s14 = scalar_lea.sflag [#allocation3], 1
    %15 = vsyncpa %s14, 0
    %16 = vsyncpa [#allocation5], 0
    %s17 = scalar_lea.sflag [#allocation5], 1
    %18 = vsyncpa %s17, 0
    loop: start=0, step=1, limit=4
    $region2: #{fwd.2} parent=1 // loop_pre_header
      _
    $region3: #{fwd.2} parent=1 // loop_header
      %s20 = sphi 0, %s24
      %p21 = scmp.ge.s32.totalorder %s20, 4
      %s28 = sphi 0, %s28
      %s30 = sphi 0, %s28
      %s31 = sphi 0, %s30
      %s45 = sphi 0, %s31
      %s51 = sphi 0, %s53
      %s54 = sphi 0, %s51
      %s55 = sphi 0, %s54
      %s71 = sphi 0, %s55
      %s77 = sphi 0, %s79
      %s80 = sphi 0, %s77
      %s81 = sphi 0, %s80
      %s97 = sphi 0, %s81
      %s103 = sphi 0, %s105
      %s106 = sphi 0, %s103
      %s107 = sphi 0, %s106
      %s123 = sphi 0, %s107
      %s129 = sphi 0, %s131
      %s132 = sphi 0, %s129
      %s133 = sphi 0, %s132
      %s149 = sphi 0, %s133
      %s155 = sphi 0, %s157
      %s158 = sphi 0, %s155
      %s159 = sphi 0, %s158
      %s175 = sphi 0, %s159
      %s181 = sphi 0, %s183
      %s184 = sphi 0, %s181
      %s185 = sphi 0, %s184
      %s201 = sphi 0, %s185
      %s207 = sphi 0, %s209
      %s210 = sphi 0, %s207
      %s211 = sphi 0, %s210
      %s227 = sphi 0, %s211
      %s233 = sphi 0, %s235
      %s236 = sphi 0, %s233
      %s237 = sphi 0, %s236
      %s253 = sphi 0, %s237
    $region4: #{fwd.2} parent=1 // loop_header_branch
      %23 = sbr.rel (%p21) target = $region8
    $region5: #{fwd.2} parent=1 // loop_body
      %s25 = ssub.s32 %s20, 1
      %s26 = ssub.s32 %s20, 2
      %s27 = sadd.s32 %s20, 1
      %s29 = sadd.s32 %s28, 1
      %p32 = scmp.eq.s32.totalorder %s20, 1
      %p33 = scmp.ne.s32.totalorder %s28, %s30
      %p34 = scmp.eq.s32.totalorder %s20, 0
      %p35 = por %p33, %p34
      %p36 = scmp.ne.s32.totalorder %s28, %s30
      %p37 = scmp.eq.s32.totalorder %s25, 1
      %p38 = por %p36, %p37
      %p39 = scmp.ne.s32.totalorder %s30, %s31
      %p40 = scmp.eq.s32.totalorder %s25, 0
      %p41 = por %p39, %p40
      %p42 = scmp.ne.s32.totalorder %s30, %s31
      %p43 = scmp.eq.s32.totalorder %s26, 1
      %p44 = por %p42, %p43
      %p46 = scmp.ne.s32.totalorder %s31, %s45
      %p47 = scmp.eq.s32.totalorder %s26, 0
      %p48 = por %p46, %p47
      %s49 = ssub.s32 %s20, %s27
      %p50 = scmp.eq.s32.totalorder %s49, 0
      %s52 = sadd.s32 %s51, 1
      %s53 = scalar_select %p50, %s51, %s52
      %p56 = pneg %p50
      %p57 = scmp.eq.s32.totalorder %s20, 1
      %p58 = por %p56, %p57
      %p59 = scmp.ne.s32.totalorder %s51, %s54
      %p60 = scmp.eq.s32.totalorder %s20, 0
      %p61 = por %p59, %p60
      %p62 = scmp.ne.s32.totalorder %s51, %s54
      %p63 = scmp.eq.s32.totalorder %s25, 1
      %p64 = por %p62, %p63
      %p65 = scmp.ne.s32.totalorder %s54, %s55
      %p66 = scmp.eq.s32.totalorder %s25, 0
      %p67 = por %p65, %p66
      %p68 = scmp.ne.s32.totalorder %s54, %s55
      %p69 = scmp.eq.s32.totalorder %s26, 1
      %p70 = por %p68, %p69
      %p72 = scmp.ne.s32.totalorder %s55, %s71
      %p73 = scmp.eq.s32.totalorder %s26, 0
      %p74 = por %p72, %p73
      %s75 = ssub.s32 %s20, %s27
      %p76 = scmp.eq.s32.totalorder %s75, 0
      %s78 = sadd.s32 %s77, 1
      %s79 = scalar_select %p76, %s77, %s78
      %p82 = pneg %p76
      %p83 = scmp.eq.s32.totalorder %s20, 1
      %p84 = por %p82, %p83
      %p85 = scmp.ne.s32.totalorder %s77, %s80
      %p86 = scmp.eq.s32.totalorder %s20, 0
      %p87 = por %p85, %p86
      %p88 = scmp.ne.s32.totalorder %s77, %s80
      %p89 = scmp.eq.s32.totalorder %s25, 1
      %p90 = por %p88, %p89
      %p91 = scmp.ne.s32.totalorder %s80, %s81
      %p92 = scmp.eq.s32.totalorder %s25, 0
      %p93 = por %p91, %p92
      %p94 = scmp.ne.s32.totalorder %s80, %s81
      %p95 = scmp.eq.s32.totalorder %s26, 1
      %p96 = por %p94, %p95
      %p98 = scmp.ne.s32.totalorder %s81, %s97
      %p99 = scmp.eq.s32.totalorder %s26, 0
      %p100 = por %p98, %p99
      %s101 = ssub.s32 %s20, %s27
      %p102 = scmp.eq.s32.totalorder %s101, 0
      %s104 = sadd.s32 %s103, 1
      %s105 = scalar_select %p102, %s103, %s104
      %p108 = pneg %p102
      %p109 = scmp.eq.s32.totalorder %s20, 1
      %p110 = por %p108, %p109
      %p111 = scmp.ne.s32.totalorder %s103, %s106
      %p112 = scmp.eq.s32.totalorder %s20, 0
      %p113 = por %p111, %p112
      %p114 = scmp.ne.s32.totalorder %s103, %s106
      %p115 = scmp.eq.s32.totalorder %s25, 1
      %p116 = por %p114, %p115
      %p117 = scmp.ne.s32.totalorder %s106, %s107
      %p118 = scmp.eq.s32.totalorder %s25, 0
      %p119 = por %p117, %p118
      %p120 = scmp.ne.s32.totalorder %s106, %s107
      %p121 = scmp.eq.s32.totalorder %s26, 1
      %p122 = por %p120, %p121
      %p124 = scmp.ne.s32.totalorder %s107, %s123
      %p125 = scmp.eq.s32.totalorder %s26, 0
      %p126 = por %p124, %p125
      %s127 = ssub.s32 %s20, %s27
      %p128 = scmp.eq.s32.totalorder %s127, 0
      %s130 = sadd.s32 %s129, 1
      %s131 = scalar_select %p128, %s129, %s130
      %p134 = pneg %p128
      %p135 = scmp.eq.s32.totalorder %s20, 1
      %p136 = por %p134, %p135
      %p137 = scmp.ne.s32.totalorder %s129, %s132
      %p138 = scmp.eq.s32.totalorder %s20, 0
      %p139 = por %p137, %p138
      %p140 = scmp.ne.s32.totalorder %s129, %s132
      %p141 = scmp.eq.s32.totalorder %s25, 1
      %p142 = por %p140, %p141
      %p143 = scmp.ne.s32.totalorder %s132, %s133
      %p144 = scmp.eq.s32.totalorder %s25, 0
      %p145 = por %p143, %p144
      %p146 = scmp.ne.s32.totalorder %s132, %s133
      %p147 = scmp.eq.s32.totalorder %s26, 1
      %p148 = por %p146, %p147
      %p150 = scmp.ne.s32.totalorder %s133, %s149
      %p151 = scmp.eq.s32.totalorder %s26, 0
      %p152 = por %p150, %p151
      %s153 = ssub.s32 %s20, %s27
      %p154 = scmp.eq.s32.totalorder %s153, 0
      %s156 = sadd.s32 %s155, 1
      %s157 = scalar_select %p154, %s155, %s156
      %p160 = pneg %p154
      %p161 = scmp.eq.s32.totalorder %s20, 1
      %p162 = por %p160, %p161
      %p163 = scmp.ne.s32.totalorder %s155, %s158
      %p164 = scmp.eq.s32.totalorder %s20, 0
      %p165 = por %p163, %p164
      %p166 = scmp.ne.s32.totalorder %s155, %s158
      %p167 = scmp.eq.s32.totalorder %s25, 1
      %p168 = por %p166, %p167
      %p169 = scmp.ne.s32.totalorder %s158, %s159
      %p170 = scmp.eq.s32.totalorder %s25, 0
      %p171 = por %p169, %p170
      %p172 = scmp.ne.s32.totalorder %s158, %s159
      %p173 = scmp.eq.s32.totalorder %s26, 1
      %p174 = por %p172, %p173
      %p176 = scmp.ne.s32.totalorder %s159, %s175
      %p177 = scmp.eq.s32.totalorder %s26, 0
      %p178 = por %p176, %p177
      %s179 = ssub.s32 %s20, %s27
      %p180 = scmp.eq.s32.totalorder %s179, 0
      %s182 = sadd.s32 %s181, 1
      %s183 = scalar_select %p180, %s181, %s182
      %p186 = pneg %p180
      %p187 = scmp.eq.s32.totalorder %s20, 1
      %p188 = por %p186, %p187
      %p189 = scmp.ne.s32.totalorder %s181, %s184
      %p190 = scmp.eq.s32.totalorder %s20, 0
      %p191 = por %p189, %p190
      %p192 = scmp.ne.s32.totalorder %s181, %s184
      %p193 = scmp.eq.s32.totalorder %s25, 1
      %p194 = por %p192, %p193
      %p195 = scmp.ne.s32.totalorder %s184, %s185
      %p196 = scmp.eq.s32.totalorder %s25, 0
      %p197 = por %p195, %p196
      %p198 = scmp.ne.s32.totalorder %s184, %s185
      %p199 = scmp.eq.s32.totalorder %s26, 1
      %p200 = por %p198, %p199
      %p202 = scmp.ne.s32.totalorder %s185, %s201
      %p203 = scmp.eq.s32.totalorder %s26, 0
      %p204 = por %p202, %p203
      %s205 = ssub.s32 %s20, %s27
      %p206 = scmp.eq.s32.totalorder %s205, 0
      %s208 = sadd.s32 %s207, 1
      %s209 = scalar_select %p206, %s207, %s208
      %p212 = pneg %p206
      %p213 = scmp.eq.s32.totalorder %s20, 1
      %p214 = por %p212, %p213
      %p215 = scmp.ne.s32.totalorder %s207, %s210
      %p216 = scmp.eq.s32.totalorder %s20, 0
      %p217 = por %p215, %p216
      %p218 = scmp.ne.s32.totalorder %s207, %s210
      %p219 = scmp.eq.s32.totalorder %s25, 1
      %p220 = por %p218, %p219
      %p221 = scmp.ne.s32.totalorder %s210, %s211
      %p222 = scmp.eq.s32.totalorder %s25, 0
      %p223 = por %p221, %p222
      %p224 = scmp.ne.s32.totalorder %s210, %s211
      %p225 = scmp.eq.s32.totalorder %s26, 1
      %p226 = por %p224, %p225
      %p228 = scmp.ne.s32.totalorder %s211, %s227
      %p229 = scmp.eq.s32.totalorder %s26, 0
      %p230 = por %p228, %p229
      %s231 = ssub.s32 %s20, %s27
      %p232 = scmp.eq.s32.totalorder %s231, 0
      %s234 = sadd.s32 %s233, 1
      %s235 = scalar_select %p232, %s233, %s234
      %p238 = pneg %p232
      %p239 = scmp.eq.s32.totalorder %s20, 1
      %p240 = por %p238, %p239
      %p241 = scmp.ne.s32.totalorder %s233, %s236
      %p242 = scmp.eq.s32.totalorder %s20, 0
      %p243 = por %p241, %p242
      %p244 = scmp.ne.s32.totalorder %s233, %s236
      %p245 = scmp.eq.s32.totalorder %s25, 1
      %p246 = por %p244, %p245
      %p247 = scmp.ne.s32.totalorder %s236, %s237
      %p248 = scmp.eq.s32.totalorder %s25, 0
      %p249 = por %p247, %p248
      %p250 = scmp.ne.s32.totalorder %s236, %s237
      %p251 = scmp.eq.s32.totalorder %s26, 1
      %p252 = por %p250, %p251
      %p254 = scmp.ne.s32.totalorder %s237, %s253
      %p255 = scmp.eq.s32.totalorder %s26, 0
      %p256 = por %p254, %p255
      %p257 = scmp.le.s32.totalorder 1, %s20
      %p258 = scmp.lt.s32.totalorder %s20, 3
      %p259 = pnand %p257, %p258
      %p260 = pneg %p259
      // Predicated region
      $region9: #{fwd.2} parent=5 // pred_check
        _
      $region10: #{fwd.2} parent=5 // pred_check_branch
        %262 = sbr.rel (%p259) target = $region12
      $region11: #{fwd.2} parent=5 // pred_region
        %s263 = ssub.s32 %s20, 1
        // Predicated region
        $region13: #{fwd.2} parent=11 // pred_check
          %p264 = pneg %p41
        $region14: #{fwd.2} parent=11 // pred_check_branch
          %266 = sbr.rel (%p264) target = $region16
        $region15: #{fwd.2} parent=11 // pred_region
          _
        $region16: #{fwd.2} parent=11 // pred_fallthru
          _
      $region12: #{fwd.2} parent=5 // pred_fallthru
        _
      %p267 = scmp.lt.s32.totalorder %s20, 2
      // Predicated region
      $region17: #{fwd.2} parent=5 // pred_check
        %p268 = pneg %p267
      $region18: #{fwd.2} parent=5 // pred_check_branch
        %270 = sbr.rel (%p268) target = $region20
      $region19: #{fwd.2} parent=5 // pred_region
        // Predicated region
        $region21: #{fwd.2} parent=19 // pred_check
          %p271 = pneg %p61
        $region22: #{fwd.2} parent=19 // pred_check_branch
          %273 = sbr.rel (%p271) target = $region24
        $region23: #{fwd.2} parent=19 // pred_region
          %s274 = sand.u32 %s51, 1
          %s275 = scalar_lea.sflag [#allocation3], %s274
          %s276 = sand.u32 %s51, 1
          %s277 = smul.addr %s276, 1024
          %s278 = scalar_lea.vmem [#allocation2], %s277
          %s279 = smul.u32 2, %s20
          %s281 = ssub.s32 16384, 16384
          %282 = vsyncadd %s275, %s281
          %s283 = smul.addr %s279, 128
          %s284 = scalar_lea.hbm %s1, %s283
          %s285 = sshll.u32 %s278, 4
          %s286 = int_to_ptr.vmem [resolvable:$true] %s285
          %291 = dma.hbm_to_vmem [thread:$0]  %s284, 16384, %s286, %s275, 512, 256, 16
        $region24: #{fwd.2} parent=19 // pred_fallthru
          _
        // Predicated region
        $region25: #{fwd.2} parent=19 // pred_check
          %p292 = pneg %p87
        $region26: #{fwd.2} parent=19 // pred_check_branch
          %294 = sbr.rel (%p292) target = $region28
        $region27: #{fwd.2} parent=19 // pred_region
          %s295 = sand.u32 %s20, 1
          %s296 = scalar_lea.sflag [#allocation5], %s295
          %s297 = sand.u32 %s77, 1
          %s298 = smul.addr %s297, 1024
          %s299 = scalar_lea.vmem [#allocation4], %s298
          %s300 = smul.u32 2, %s20
          %s302 = ssub.s32 16384, 16384
          %303 = vsyncadd %s296, %s302
          %s304 = smul.addr %s300, 128
          %s305 = scalar_lea.hbm %s2, %s304
          %s306 = sshll.u32 %s299, 4
          %s307 = int_to_ptr.vmem [resolvable:$true] %s306
          %312 = dma.hbm_to_vmem [thread:$0]  %s305, 16384, %s307, %s296, 512, 256, 16
        $region28: #{fwd.2} parent=19 // pred_fallthru
          _
        // Predicated region
        $region29: #{fwd.2} parent=19 // pred_check
          %p313 = pneg %p113
        $region30: #{fwd.2} parent=19 // pred_check_branch
          %315 = sbr.rel (%p313) target = $region32
        $region31: #{fwd.2} parent=19 // pred_region
          %s316 = sand.u32 %s20, 1
          %s317 = scalar_lea.sflag [#allocation5], %s316
          %s318 = sand.u32 %s103, 1
          %s319 = smul.addr %s318, 1024
          %s320 = scalar_lea.vmem [#allocation6], %s319
          %s321 = smul.u32 2, %s20
          %s323 = ssub.s32 16384, 16384
          %324 = vsyncadd %s317, %s323
          %s325 = smul.addr %s321, 128
          %s326 = scalar_lea.hbm %s3, %s325
          %s327 = sshll.u32 %s320, 4
          %s328 = int_to_ptr.vmem [resolvable:$true] %s327
          %333 = dma.hbm_to_vmem [thread:$0]  %s326, 16384, %s328, %s317, 512, 256, 16
        $region32: #{fwd.2} parent=19 // pred_fallthru
          _
        // Predicated region
        $region33: #{fwd.2} parent=19 // pred_check
          %p334 = pneg %p139
        $region34: #{fwd.2} parent=19 // pred_check_branch
          %336 = sbr.rel (%p334) target = $region36
        $region35: #{fwd.2} parent=19 // pred_region
          %s337 = smul.u32 2, %s20
          %p338 = scmp.lt.s32.totalorder %s337, 3
          %s339 = scalar_select %p338, %s337, 3
          %s340 = scalar_lea.vmem %s4, %s339
          %s341 = smul.u32 2, %s20
        $region36: #{fwd.2} parent=19 // pred_fallthru
          _
        // Predicated region
        $region37: #{fwd.2} parent=19 // pred_check
          %p342 = pneg %p165
        $region38: #{fwd.2} parent=19 // pred_check_branch
          %344 = sbr.rel (%p342) target = $region40
        $region39: #{fwd.2} parent=19 // pred_region
          %s345 = smul.u32 2, %s20
          %p346 = scmp.lt.s32.totalorder %s345, 3
          %s347 = scalar_select %p346, %s345, 3
          %s348 = scalar_lea.vmem %s5, %s347
          %s349 = smul.u32 2, %s20
        $region40: #{fwd.2} parent=19 // pred_fallthru
          _
        // Predicated region
        $region41: #{fwd.2} parent=19 // pred_check
          %p350 = pneg %p191
        $region42: #{fwd.2} parent=19 // pred_check_branch
          %352 = sbr.rel (%p350) target = $region44
        $region43: #{fwd.2} parent=19 // pred_region
          %s353 = smul.u32 2, %s20
          %p354 = scmp.lt.s32.totalorder %s353, 3
          %s355 = scalar_select %p354, %s353, 3
          %s356 = scalar_lea.vmem %s6, %s355
          %s357 = smul.u32 2, %s20
        $region44: #{fwd.2} parent=19 // pred_fallthru
          _
        // Predicated region
        $region45: #{fwd.2} parent=19 // pred_check
          %p358 = pneg %p217
        $region46: #{fwd.2} parent=19 // pred_check_branch
          %360 = sbr.rel (%p358) target = $region48
        $region47: #{fwd.2} parent=19 // pred_region
          %s361 = smul.u32 2, %s20
          %p362 = scmp.lt.s32.totalorder %s361, 3
          %s363 = scalar_select %p362, %s361, 3
          %s364 = smul.addr %s363, 8
          %s365 = scalar_lea.vmem %s7, %s364
          %s366 = smul.u32 2, %s20
        $region48: #{fwd.2} parent=19 // pred_fallthru
          _
      $region20: #{fwd.2} parent=5 // pred_fallthru
        _
      %p367 = scmp.le.s32.totalorder 1, %s20
      %p368 = scmp.lt.s32.totalorder %s20, 3
      %p369 = pnand %p367, %p368
      %p370 = pneg %p369
      // Predicated region
      $region49: #{fwd.2} parent=5 // pred_check
        _
      $region50: #{fwd.2} parent=5 // pred_check_branch
        %372 = sbr.rel (%p369) target = $region52
      $region51: #{fwd.2} parent=5 // pred_region
        %s373 = ssub.s32 %s20, 1
        %s374 = sand.u32 %s54, 1
        %s375 = scalar_lea.sflag [#allocation3], %s374
        %s376 = sand.u32 %s54, 1
        %s377 = smul.addr %s376, 1024
        %s378 = scalar_lea.vmem [#allocation2], %s377
        // Predicated region
        $region53: #{fwd.2} parent=51 // pred_check
          %p379 = pneg %p67
        $region54: #{fwd.2} parent=51 // pred_check_branch
          %381 = sbr.rel (%p379) target = $region56
        $region55: #{fwd.2} parent=51 // pred_region
          %382 = dma.done %s375, 16384
        $region56: #{fwd.2} parent=51 // pred_fallthru
          _
        %s383 = sand.u32 %s25, 1
        %s384 = scalar_lea.sflag [#allocation5], %s383
        %s385 = sand.u32 %s80, 1
        %s386 = smul.addr %s385, 1024
        %s387 = scalar_lea.vmem [#allocation4], %s386
        // Predicated region
        $region57: #{fwd.2} parent=51 // pred_check
          %p388 = pneg %p93
        $region58: #{fwd.2} parent=51 // pred_check_branch
          %390 = sbr.rel (%p388) target = $region60
        $region59: #{fwd.2} parent=51 // pred_region
          %391 = dma.done %s384, 16384
        $region60: #{fwd.2} parent=51 // pred_fallthru
          _
        %s392 = sand.u32 %s25, 1
        %s393 = scalar_lea.sflag [#allocation5], %s392
        %s394 = sand.u32 %s106, 1
        %s395 = smul.addr %s394, 1024
        %s396 = scalar_lea.vmem [#allocation6], %s395
        // Predicated region
        $region61: #{fwd.2} parent=51 // pred_check
          %p397 = pneg %p119
        $region62: #{fwd.2} parent=51 // pred_check_branch
          %399 = sbr.rel (%p397) target = $region64
        $region63: #{fwd.2} parent=51 // pred_region
          %400 = dma.done %s393, 16384
        $region64: #{fwd.2} parent=51 // pred_fallthru
          _
        %p401 = pneg %p41
        %p402 = pneg %p38
        %s403 = sand.u32 %s54, 1
        %s404 = scalar_lea.sflag [#allocation3], %s403
        %s405 = sand.u32 %s54, 1
        %s406 = smul.addr %s405, 1024
        %s407 = scalar_lea.vmem [#allocation2], %s406
        %p408 = pneg %p67
        %p409 = pneg %p64
        %s410 = sand.u32 %s25, 1
        %s411 = scalar_lea.sflag [#allocation5], %s410
        %s412 = sand.u32 %s80, 1
        %s413 = smul.addr %s412, 1024
        %s414 = scalar_lea.vmem [#allocation4], %s413
        %p415 = pneg %p93
        %p416 = pneg %p90
        %s417 = sand.u32 %s25, 1
        %s418 = scalar_lea.sflag [#allocation5], %s417
        %s419 = sand.u32 %s106, 1
        %s420 = smul.addr %s419, 1024
        %s421 = scalar_lea.vmem [#allocation6], %s420
        %p422 = pneg %p119
        %p423 = pneg %p116
        %s424 = smul.u32 2, %s25
        %p425 = scmp.lt.s32.totalorder %s424, 3
        %s426 = scalar_select %p425, %s424, 3
        %s427 = scalar_lea.vmem %s4, %s426
        %p428 = pneg %p145
        %p429 = pneg %p142
        %s430 = smul.u32 2, %s25
        %p431 = scmp.lt.s32.totalorder %s430, 3
        %s432 = scalar_select %p431, %s430, 3
        %s433 = scalar_lea.vmem %s5, %s432
        %p434 = pneg %p171
        %p435 = pneg %p168
        %s436 = smul.u32 2, %s25
        %p437 = scmp.lt.s32.totalorder %s436, 3
        %s438 = scalar_select %p437, %s436, 3
        %s439 = scalar_lea.vmem %s6, %s438
        %p440 = pneg %p197
        %p441 = pneg %p194
        %s442 = smul.u32 2, %s25
        %p443 = scmp.lt.s32.totalorder %s442, 3
        %s444 = scalar_select %p443, %s442, 3
        %s445 = smul.addr %s444, 8
        %s446 = scalar_lea.vmem %s7, %s445
        %p447 = pneg %p223
        %p448 = pneg %p220
        %p449 = pneg %p249
        %p450 = pneg %p246
        %s451 = smul.u32 2, %s25
        %p452 = scmp.lt.s32.totalorder %s451, 3
        %s453 = scalar_select %p452, %s451, 3
        %s454 = smul.addr %s453, 8
        %s455 = scalar_lea.vmem %s8, %s454
        %s456 = smul.u32 2, %s25
        %s457 = smul.u32 2, %s25
        %s458 = smul.u32 2, %s25
        %s459 = smul.u32 2, %s25
        %p460 = scmp.lt.s32.totalorder %s459, 3
        %s461 = scalar_select %p460, %s459, 3
        %s462 = scalar_lea.vmem %s4, %s461
        %s463 = smul.u32 2, %s25
        %s464 = smul.u32 2, %s25
        %p465 = scmp.lt.s32.totalorder %s464, 3
        %s466 = scalar_select %p465, %s464, 3
        %s467 = scalar_lea.vmem %s5, %s466
        %s468 = smul.u32 2, %s25
        %s469 = smul.u32 2, %s25
        %p470 = scmp.lt.s32.totalorder %s469, 3
        %s471 = scalar_select %p470, %s469, 3
        %s472 = scalar_lea.vmem %s6, %s471
        %s473 = smul.u32 2, %s25
        %s474 = smul.u32 2, %s25
        %p475 = scmp.lt.s32.totalorder %s474, 3
        %s476 = scalar_select %p475, %s474, 3
        %s477 = smul.addr %s476, 8
        %s478 = scalar_lea.vmem %s7, %s477
        %s479 = smul.u32 2, %s25
        %s480 = smul.u32 2, %s25
        %p481 = scmp.lt.s32.totalorder %s480, 3
        %s482 = scalar_select %p481, %s480, 3
        %s483 = smul.addr %s482, 8
        %s484 = scalar_lea.vmem %s8, %s483
        %s485 = smul.u32 2, %s25
        %v486 = vld [vmem:[%s378] sm:$0xff]
        %v487 = vld [vmem:[%s378 + $0x8] sm:$0xff]
        %v488 = vld [vmem:[%s378 + $0x10] sm:$0xff]
        %v489 = vld [vmem:[%s378 + $0x18] sm:$0xff]
        %v490 = vld [vmem:[%s378 + $0x20] sm:$0xff]
        %v491 = vld [vmem:[%s378 + $0x28] sm:$0xff]
        %v492 = vld [vmem:[%s378 + $0x30] sm:$0xff]
        %v493 = vld [vmem:[%s378 + $0x38] sm:$0xff]
        %v494 = vld [vmem:[%s378 + $0x40] sm:$0xff]
        %v495 = vld [vmem:[%s378 + $0x48] sm:$0xff]
        %v496 = vld [vmem:[%s378 + $0x50] sm:$0xff]
        %v497 = vld [vmem:[%s378 + $0x58] sm:$0xff]
        %v498 = vld [vmem:[%s378 + $0x60] sm:$0xff]
        %v499 = vld [vmem:[%s378 + $0x68] sm:$0xff]
        %v500 = vld [vmem:[%s378 + $0x70] sm:$0xff]
        %v501 = vld [vmem:[%s378 + $0x78] sm:$0xff]
        %v502 = vld [vmem:[%s378 + $0x80] sm:$0xff]
        %v503 = vld [vmem:[%s378 + $0x88] sm:$0xff]
        %v504 = vld [vmem:[%s378 + $0x90] sm:$0xff]
        %v505 = vld [vmem:[%s378 + $0x98] sm:$0xff]
        %v506 = vld [vmem:[%s378 + $0xa0] sm:$0xff]
        %v507 = vld [vmem:[%s378 + $0xa8] sm:$0xff]
        %v508 = vld [vmem:[%s378 + $0xb0] sm:$0xff]
        %v509 = vld [vmem:[%s378 + $0xb8] sm:$0xff]
        %v510 = vld [vmem:[%s378 + $0xc0] sm:$0xff]
        %v511 = vld [vmem:[%s378 + $0xc8] sm:$0xff]
        %v512 = vld [vmem:[%s378 + $0xd0] sm:$0xff]
        %v513 = vld [vmem:[%s378 + $0xd8] sm:$0xff]
        %v514 = vld [vmem:[%s378 + $0xe0] sm:$0xff]
        %v515 = vld [vmem:[%s378 + $0xe8] sm:$0xff]
        %v516 = vld [vmem:[%s378 + $0xf0] sm:$0xff]
        %v517 = vld [vmem:[%s378 + $0xf8] sm:$0xff]
        %v518 = vld [vmem:[%s378 + $0x100] sm:$0xff]
        %v519 = vld [vmem:[%s378 + $0x108] sm:$0xff]
        %v520 = vld [vmem:[%s378 + $0x110] sm:$0xff]
        %v521 = vld [vmem:[%s378 + $0x118] sm:$0xff]
        %v522 = vld [vmem:[%s378 + $0x120] sm:$0xff]
        %v523 = vld [vmem:[%s378 + $0x128] sm:$0xff]
        %v524 = vld [vmem:[%s378 + $0x130] sm:$0xff]
        %v525 = vld [vmem:[%s378 + $0x138] sm:$0xff]
        %v526 = vld [vmem:[%s378 + $0x140] sm:$0xff]
        %v527 = vld [vmem:[%s378 + $0x148] sm:$0xff]
        %v528 = vld [vmem:[%s378 + $0x150] sm:$0xff]
        %v529 = vld [vmem:[%s378 + $0x158] sm:$0xff]
        %v530 = vld [vmem:[%s378 + $0x160] sm:$0xff]
        %v531 = vld [vmem:[%s378 + $0x168] sm:$0xff]
        %v532 = vld [vmem:[%s378 + $0x170] sm:$0xff]
        %v533 = vld [vmem:[%s378 + $0x178] sm:$0xff]
        %v534 = vld [vmem:[%s378 + $0x180] sm:$0xff]
        %v535 = vld [vmem:[%s378 + $0x188] sm:$0xff]
        %v536 = vld [vmem:[%s378 + $0x190] sm:$0xff]
        %v537 = vld [vmem:[%s378 + $0x198] sm:$0xff]
        %v538 = vld [vmem:[%s378 + $0x1a0] sm:$0xff]
        %v539 = vld [vmem:[%s378 + $0x1a8] sm:$0xff]
        %v540 = vld [vmem:[%s378 + $0x1b0] sm:$0xff]
        %v541 = vld [vmem:[%s378 + $0x1b8] sm:$0xff]
        %v542 = vld [vmem:[%s378 + $0x1c0] sm:$0xff]
        %v543 = vld [vmem:[%s378 + $0x1c8] sm:$0xff]
        %v544 = vld [vmem:[%s378 + $0x1d0] sm:$0xff]
        %v545 = vld [vmem:[%s378 + $0x1d8] sm:$0xff]
        %v546 = vld [vmem:[%s378 + $0x1e0] sm:$0xff]
        %v547 = vld [vmem:[%s378 + $0x1e8] sm:$0xff]
        %v548 = vld [vmem:[%s378 + $0x1f0] sm:$0xff]
        %v549 = vld [vmem:[%s378 + $0x1f8] sm:$0xff]
        %v550 = vld [vmem:[%s378 + $0x200] sm:$0xff]
        %v551 = vld [vmem:[%s378 + $0x208] sm:$0xff]
        %v552 = vld [vmem:[%s378 + $0x210] sm:$0xff]
        %v553 = vld [vmem:[%s378 + $0x218] sm:$0xff]
        %v554 = vld [vmem:[%s378 + $0x220] sm:$0xff]
        %v555 = vld [vmem:[%s378 + $0x228] sm:$0xff]
        %v556 = vld [vmem:[%s378 + $0x230] sm:$0xff]
        %v557 = vld [vmem:[%s378 + $0x238] sm:$0xff]
        %v558 = vld [vmem:[%s378 + $0x240] sm:$0xff]
        %v559 = vld [vmem:[%s378 + $0x248] sm:$0xff]
        %v560 = vld [vmem:[%s378 + $0x250] sm:$0xff]
        %v561 = vld [vmem:[%s378 + $0x258] sm:$0xff]
        %v562 = vld [vmem:[%s378 + $0x260] sm:$0xff]
        %v563 = vld [vmem:[%s378 + $0x268] sm:$0xff]
        %v564 = vld [vmem:[%s378 + $0x270] sm:$0xff]
        %v565 = vld [vmem:[%s378 + $0x278] sm:$0xff]
        %v566 = vld [vmem:[%s378 + $0x280] sm:$0xff]
        %v567 = vld [vmem:[%s378 + $0x288] sm:$0xff]
        %v568 = vld [vmem:[%s378 + $0x290] sm:$0xff]
        %v569 = vld [vmem:[%s378 + $0x298] sm:$0xff]
        %v570 = vld [vmem:[%s378 + $0x2a0] sm:$0xff]
        %v571 = vld [vmem:[%s378 + $0x2a8] sm:$0xff]
        %v572 = vld [vmem:[%s378 + $0x2b0] sm:$0xff]
        %v573 = vld [vmem:[%s378 + $0x2b8] sm:$0xff]
        %v574 = vld [vmem:[%s378 + $0x2c0] sm:$0xff]
        %v575 = vld [vmem:[%s378 + $0x2c8] sm:$0xff]
        %v576 = vld [vmem:[%s378 + $0x2d0] sm:$0xff]
        %v577 = vld [vmem:[%s378 + $0x2d8] sm:$0xff]
        %v578 = vld [vmem:[%s378 + $0x2e0] sm:$0xff]
        %v579 = vld [vmem:[%s378 + $0x2e8] sm:$0xff]
        %v580 = vld [vmem:[%s378 + $0x2f0] sm:$0xff]
        %v581 = vld [vmem:[%s378 + $0x2f8] sm:$0xff]
        %v582 = vld [vmem:[%s378 + $0x300] sm:$0xff]
        %v583 = vld [vmem:[%s378 + $0x308] sm:$0xff]
        %v584 = vld [vmem:[%s378 + $0x310] sm:$0xff]
        %v585 = vld [vmem:[%s378 + $0x318] sm:$0xff]
        %v586 = vld [vmem:[%s378 + $0x320] sm:$0xff]
        %v587 = vld [vmem:[%s378 + $0x328] sm:$0xff]
        %v588 = vld [vmem:[%s378 + $0x330] sm:$0xff]
        %v589 = vld [vmem:[%s378 + $0x338] sm:$0xff]
        %v590 = vld [vmem:[%s378 + $0x340] sm:$0xff]
        %v591 = vld [vmem:[%s378 + $0x348] sm:$0xff]
        %v592 = vld [vmem:[%s378 + $0x350] sm:$0xff]
        %v593 = vld [vmem:[%s378 + $0x358] sm:$0xff]
        %v594 = vld [vmem:[%s378 + $0x360] sm:$0xff]
        %v595 = vld [vmem:[%s378 + $0x368] sm:$0xff]
        %v596 = vld [vmem:[%s378 + $0x370] sm:$0xff]
        %v597 = vld [vmem:[%s378 + $0x378] sm:$0xff]
        %v598 = vld [vmem:[%s378 + $0x380] sm:$0xff]
        %v599 = vld [vmem:[%s378 + $0x388] sm:$0xff]
        %v600 = vld [vmem:[%s378 + $0x390] sm:$0xff]
        %v601 = vld [vmem:[%s378 + $0x398] sm:$0xff]
        %v602 = vld [vmem:[%s378 + $0x3a0] sm:$0xff]
        %v603 = vld [vmem:[%s378 + $0x3a8] sm:$0xff]
        %v604 = vld [vmem:[%s378 + $0x3b0] sm:$0xff]
        %v605 = vld [vmem:[%s378 + $0x3b8] sm:$0xff]
        %v606 = vld [vmem:[%s378 + $0x3c0] sm:$0xff]
        %v607 = vld [vmem:[%s378 + $0x3c8] sm:$0xff]
        %v608 = vld [vmem:[%s378 + $0x3d0] sm:$0xff]
        %v609 = vld [vmem:[%s378 + $0x3d8] sm:$0xff]
        %v610 = vld [vmem:[%s378 + $0x3e0] sm:$0xff]
        %v611 = vld [vmem:[%s378 + $0x3e8] sm:$0xff]
        %v612 = vld [vmem:[%s378 + $0x3f0] sm:$0xff]
        %v613 = vld [vmem:[%s378 + $0x3f8] sm:$0xff]
        %v614 = vld [vmem:[%s396] sm:$0xff]
        %v615 = vld [vmem:[%s396 + $0x8] sm:$0xff]
        %v616 = vld [vmem:[%s396 + $0x10] sm:$0xff]
        %v617 = vld [vmem:[%s396 + $0x18] sm:$0xff]
        %v618 = vld [vmem:[%s396 + $0x20] sm:$0xff]
        %v619 = vld [vmem:[%s396 + $0x28] sm:$0xff]
        %v620 = vld [vmem:[%s396 + $0x30] sm:$0xff]
        %v621 = vld [vmem:[%s396 + $0x38] sm:$0xff]
        %v622 = vld [vmem:[%s396 + $0x40] sm:$0xff]
        %v623 = vld [vmem:[%s396 + $0x48] sm:$0xff]
        %v624 = vld [vmem:[%s396 + $0x50] sm:$0xff]
        %v625 = vld [vmem:[%s396 + $0x58] sm:$0xff]
        %v626 = vld [vmem:[%s396 + $0x60] sm:$0xff]
        %v627 = vld [vmem:[%s396 + $0x68] sm:$0xff]
        %v628 = vld [vmem:[%s396 + $0x70] sm:$0xff]
        %v629 = vld [vmem:[%s396 + $0x78] sm:$0xff]
        %v630 = vld [vmem:[%s396 + $0x80] sm:$0xff]
        %v631 = vld [vmem:[%s396 + $0x88] sm:$0xff]
        %v632 = vld [vmem:[%s396 + $0x90] sm:$0xff]
        %v633 = vld [vmem:[%s396 + $0x98] sm:$0xff]
        %v634 = vld [vmem:[%s396 + $0xa0] sm:$0xff]
        %v635 = vld [vmem:[%s396 + $0xa8] sm:$0xff]
        %v636 = vld [vmem:[%s396 + $0xb0] sm:$0xff]
        %v637 = vld [vmem:[%s396 + $0xb8] sm:$0xff]
        %v638 = vld [vmem:[%s396 + $0xc0] sm:$0xff]
        %v639 = vld [vmem:[%s396 + $0xc8] sm:$0xff]
        %v640 = vld [vmem:[%s396 + $0xd0] sm:$0xff]
        %v641 = vld [vmem:[%s396 + $0xd8] sm:$0xff]
        %v642 = vld [vmem:[%s396 + $0xe0] sm:$0xff]
        %v643 = vld [vmem:[%s396 + $0xe8] sm:$0xff]
        %v644 = vld [vmem:[%s396 + $0xf0] sm:$0xff]
        %v645 = vld [vmem:[%s396 + $0xf8] sm:$0xff]
        %v646 = vld [vmem:[%s396 + $0x100] sm:$0xff]
        %v647 = vld [vmem:[%s396 + $0x108] sm:$0xff]
        %v648 = vld [vmem:[%s396 + $0x110] sm:$0xff]
        %v649 = vld [vmem:[%s396 + $0x118] sm:$0xff]
        %v650 = vld [vmem:[%s396 + $0x120] sm:$0xff]
        %v651 = vld [vmem:[%s396 + $0x128] sm:$0xff]
        %v652 = vld [vmem:[%s396 + $0x130] sm:$0xff]
        %v653 = vld [vmem:[%s396 + $0x138] sm:$0xff]
        %v654 = vld [vmem:[%s396 + $0x140] sm:$0xff]
        %v655 = vld [vmem:[%s396 + $0x148] sm:$0xff]
        %v656 = vld [vmem:[%s396 + $0x150] sm:$0xff]
        %v657 = vld [vmem:[%s396 + $0x158] sm:$0xff]
        %v658 = vld [vmem:[%s396 + $0x160] sm:$0xff]
        %v659 = vld [vmem:[%s396 + $0x168] sm:$0xff]
        %v660 = vld [vmem:[%s396 + $0x170] sm:$0xff]
        %v661 = vld [vmem:[%s396 + $0x178] sm:$0xff]
        %v662 = vld [vmem:[%s396 + $0x180] sm:$0xff]
        %v663 = vld [vmem:[%s396 + $0x188] sm:$0xff]
        %v664 = vld [vmem:[%s396 + $0x190] sm:$0xff]
        %v665 = vld [vmem:[%s396 + $0x198] sm:$0xff]
        %v666 = vld [vmem:[%s396 + $0x1a0] sm:$0xff]
        %v667 = vld [vmem:[%s396 + $0x1a8] sm:$0xff]
        %v668 = vld [vmem:[%s396 + $0x1b0] sm:$0xff]
        %v669 = vld [vmem:[%s396 + $0x1b8] sm:$0xff]
        %v670 = vld [vmem:[%s396 + $0x1c0] sm:$0xff]
        %v671 = vld [vmem:[%s396 + $0x1c8] sm:$0xff]
        %v672 = vld [vmem:[%s396 + $0x1d0] sm:$0xff]
        %v673 = vld [vmem:[%s396 + $0x1d8] sm:$0xff]
        %v674 = vld [vmem:[%s396 + $0x1e0] sm:$0xff]
        %v675 = vld [vmem:[%s396 + $0x1e8] sm:$0xff]
        %v676 = vld [vmem:[%s396 + $0x1f0] sm:$0xff]
        %v677 = vld [vmem:[%s396 + $0x1f8] sm:$0xff]
        %v678 = vld [vmem:[%s396 + $0x200] sm:$0xff]
        %v679 = vld [vmem:[%s396 + $0x208] sm:$0xff]
        %v680 = vld [vmem:[%s396 + $0x210] sm:$0xff]
        %v681 = vld [vmem:[%s396 + $0x218] sm:$0xff]
        %v682 = vld [vmem:[%s396 + $0x220] sm:$0xff]
        %v683 = vld [vmem:[%s396 + $0x228] sm:$0xff]
        %v684 = vld [vmem:[%s396 + $0x230] sm:$0xff]
        %v685 = vld [vmem:[%s396 + $0x238] sm:$0xff]
        %v686 = vld [vmem:[%s396 + $0x240] sm:$0xff]
        %v687 = vld [vmem:[%s396 + $0x248] sm:$0xff]
        %v688 = vld [vmem:[%s396 + $0x250] sm:$0xff]
        %v689 = vld [vmem:[%s396 + $0x258] sm:$0xff]
        %v690 = vld [vmem:[%s396 + $0x260] sm:$0xff]
        %v691 = vld [vmem:[%s396 + $0x268] sm:$0xff]
        %v692 = vld [vmem:[%s396 + $0x270] sm:$0xff]
        %v693 = vld [vmem:[%s396 + $0x278] sm:$0xff]
        %v694 = vld [vmem:[%s396 + $0x280] sm:$0xff]
        %v695 = vld [vmem:[%s396 + $0x288] sm:$0xff]
        %v696 = vld [vmem:[%s396 + $0x290] sm:$0xff]
        %v697 = vld [vmem:[%s396 + $0x298] sm:$0xff]
        %v698 = vld [vmem:[%s396 + $0x2a0] sm:$0xff]
        %v699 = vld [vmem:[%s396 + $0x2a8] sm:$0xff]
        %v700 = vld [vmem:[%s396 + $0x2b0] sm:$0xff]
        %v701 = vld [vmem:[%s396 + $0x2b8] sm:$0xff]
        %v702 = vld [vmem:[%s396 + $0x2c0] sm:$0xff]
        %v703 = vld [vmem:[%s396 + $0x2c8] sm:$0xff]
        %v704 = vld [vmem:[%s396 + $0x2d0] sm:$0xff]
        %v705 = vld [vmem:[%s396 + $0x2d8] sm:$0xff]
        %v706 = vld [vmem:[%s396 + $0x2e0] sm:$0xff]
        %v707 = vld [vmem:[%s396 + $0x2e8] sm:$0xff]
        %v708 = vld [vmem:[%s396 + $0x2f0] sm:$0xff]
        %v709 = vld [vmem:[%s396 + $0x2f8] sm:$0xff]
        %v710 = vld [vmem:[%s396 + $0x300] sm:$0xff]
        %v711 = vld [vmem:[%s396 + $0x308] sm:$0xff]
        %v712 = vld [vmem:[%s396 + $0x310] sm:$0xff]
        %v713 = vld [vmem:[%s396 + $0x318] sm:$0xff]
        %v714 = vld [vmem:[%s396 + $0x320] sm:$0xff]
        %v715 = vld [vmem:[%s396 + $0x328] sm:$0xff]
        %v716 = vld [vmem:[%s396 + $0x330] sm:$0xff]
        %v717 = vld [vmem:[%s396 + $0x338] sm:$0xff]
        %v718 = vld [vmem:[%s396 + $0x340] sm:$0xff]
        %v719 = vld [vmem:[%s396 + $0x348] sm:$0xff]
        %v720 = vld [vmem:[%s396 + $0x350] sm:$0xff]
        %v721 = vld [vmem:[%s396 + $0x358] sm:$0xff]
        %v722 = vld [vmem:[%s396 + $0x360] sm:$0xff]
        %v723 = vld [vmem:[%s396 + $0x368] sm:$0xff]
        %v724 = vld [vmem:[%s396 + $0x370] sm:$0xff]
        %v725 = vld [vmem:[%s396 + $0x378] sm:$0xff]
        %v726 = vld [vmem:[%s396 + $0x380] sm:$0xff]
        %v727 = vld [vmem:[%s396 + $0x388] sm:$0xff]
        %v728 = vld [vmem:[%s396 + $0x390] sm:$0xff]
        %v729 = vld [vmem:[%s396 + $0x398] sm:$0xff]
        %v730 = vld [vmem:[%s396 + $0x3a0] sm:$0xff]
        %v731 = vld [vmem:[%s396 + $0x3a8] sm:$0xff]
        %v732 = vld [vmem:[%s396 + $0x3b0] sm:$0xff]
        %v733 = vld [vmem:[%s396 + $0x3b8] sm:$0xff]
        %v734 = vld [vmem:[%s396 + $0x3c0] sm:$0xff]
        %v735 = vld [vmem:[%s396 + $0x3c8] sm:$0xff]
        %v736 = vld [vmem:[%s396 + $0x3d0] sm:$0xff]
        %v737 = vld [vmem:[%s396 + $0x3d8] sm:$0xff]
        %v738 = vld [vmem:[%s396 + $0x3e0] sm:$0xff]
        %v739 = vld [vmem:[%s396 + $0x3e8] sm:$0xff]
        %v740 = vld [vmem:[%s396 + $0x3f0] sm:$0xff]
        %v741 = vld [vmem:[%s396 + $0x3f8] sm:$0xff]
        %v742 = vld [vmem:[%s387] sm:$0xff]
        %v743 = vld [vmem:[%s387 + $0x8] sm:$0xff]
        %v744 = vld [vmem:[%s387 + $0x10] sm:$0xff]
        %v745 = vld [vmem:[%s387 + $0x18] sm:$0xff]
        %v746 = vld [vmem:[%s387 + $0x20] sm:$0xff]
        %v747 = vld [vmem:[%s387 + $0x28] sm:$0xff]
        %v748 = vld [vmem:[%s387 + $0x30] sm:$0xff]
        %v749 = vld [vmem:[%s387 + $0x38] sm:$0xff]
        %v750 = vld [vmem:[%s387 + $0x40] sm:$0xff]
        %v751 = vld [vmem:[%s387 + $0x48] sm:$0xff]
        %v752 = vld [vmem:[%s387 + $0x50] sm:$0xff]
        %v753 = vld [vmem:[%s387 + $0x58] sm:$0xff]
        %v754 = vld [vmem:[%s387 + $0x60] sm:$0xff]
        %v755 = vld [vmem:[%s387 + $0x68] sm:$0xff]
        %v756 = vld [vmem:[%s387 + $0x70] sm:$0xff]
        %v757 = vld [vmem:[%s387 + $0x78] sm:$0xff]
        %v758 = vld [vmem:[%s387 + $0x80] sm:$0xff]
        %v759 = vld [vmem:[%s387 + $0x88] sm:$0xff]
        %v760 = vld [vmem:[%s387 + $0x90] sm:$0xff]
        %v761 = vld [vmem:[%s387 + $0x98] sm:$0xff]
        %v762 = vld [vmem:[%s387 + $0xa0] sm:$0xff]
        %v763 = vld [vmem:[%s387 + $0xa8] sm:$0xff]
        %v764 = vld [vmem:[%s387 + $0xb0] sm:$0xff]
        %v765 = vld [vmem:[%s387 + $0xb8] sm:$0xff]
        %v766 = vld [vmem:[%s387 + $0xc0] sm:$0xff]
        %v767 = vld [vmem:[%s387 + $0xc8] sm:$0xff]
        %v768 = vld [vmem:[%s387 + $0xd0] sm:$0xff]
        %v769 = vld [vmem:[%s387 + $0xd8] sm:$0xff]
        %v770 = vld [vmem:[%s387 + $0xe0] sm:$0xff]
        %v771 = vld [vmem:[%s387 + $0xe8] sm:$0xff]
        %v772 = vld [vmem:[%s387 + $0xf0] sm:$0xff]
        %v773 = vld [vmem:[%s387 + $0xf8] sm:$0xff]
        %v774 = vld [vmem:[%s387 + $0x100] sm:$0xff]
        %v775 = vld [vmem:[%s387 + $0x108] sm:$0xff]
        %v776 = vld [vmem:[%s387 + $0x110] sm:$0xff]
        %v777 = vld [vmem:[%s387 + $0x118] sm:$0xff]
        %v778 = vld [vmem:[%s387 + $0x120] sm:$0xff]
        %v779 = vld [vmem:[%s387 + $0x128] sm:$0xff]
        %v780 = vld [vmem:[%s387 + $0x130] sm:$0xff]
        %v781 = vld [vmem:[%s387 + $0x138] sm:$0xff]
        %v782 = vld [vmem:[%s387 + $0x140] sm:$0xff]
        %v783 = vld [vmem:[%s387 + $0x148] sm:$0xff]
        %v784 = vld [vmem:[%s387 + $0x150] sm:$0xff]
        %v785 = vld [vmem:[%s387 + $0x158] sm:$0xff]
        %v786 = vld [vmem:[%s387 + $0x160] sm:$0xff]
        %v787 = vld [vmem:[%s387 + $0x168] sm:$0xff]
        %v788 = vld [vmem:[%s387 + $0x170] sm:$0xff]
        %v789 = vld [vmem:[%s387 + $0x178] sm:$0xff]
        %v790 = vld [vmem:[%s387 + $0x180] sm:$0xff]
        %v791 = vld [vmem:[%s387 + $0x188] sm:$0xff]
        %v792 = vld [vmem:[%s387 + $0x190] sm:$0xff]
        %v793 = vld [vmem:[%s387 + $0x198] sm:$0xff]
        %v794 = vld [vmem:[%s387 + $0x1a0] sm:$0xff]
        %v795 = vld [vmem:[%s387 + $0x1a8] sm:$0xff]
        %v796 = vld [vmem:[%s387 + $0x1b0] sm:$0xff]
        %v797 = vld [vmem:[%s387 + $0x1b8] sm:$0xff]
        %v798 = vld [vmem:[%s387 + $0x1c0] sm:$0xff]
        %v799 = vld [vmem:[%s387 + $0x1c8] sm:$0xff]
        %v800 = vld [vmem:[%s387 + $0x1d0] sm:$0xff]
        %v801 = vld [vmem:[%s387 + $0x1d8] sm:$0xff]
        %v802 = vld [vmem:[%s387 + $0x1e0] sm:$0xff]
        %v803 = vld [vmem:[%s387 + $0x1e8] sm:$0xff]
        %v804 = vld [vmem:[%s387 + $0x1f0] sm:$0xff]
        %v805 = vld [vmem:[%s387 + $0x1f8] sm:$0xff]
        %v806 = vld [vmem:[%s387 + $0x200] sm:$0xff]
        %v807 = vld [vmem:[%s387 + $0x208] sm:$0xff]
        %v808 = vld [vmem:[%s387 + $0x210] sm:$0xff]
        %v809 = vld [vmem:[%s387 + $0x218] sm:$0xff]
        %v810 = vld [vmem:[%s387 + $0x220] sm:$0xff]
        %v811 = vld [vmem:[%s387 + $0x228] sm:$0xff]
        %v812 = vld [vmem:[%s387 + $0x230] sm:$0xff]
        %v813 = vld [vmem:[%s387 + $0x238] sm:$0xff]
        %v814 = vld [vmem:[%s387 + $0x240] sm:$0xff]
        %v815 = vld [vmem:[%s387 + $0x248] sm:$0xff]
        %v816 = vld [vmem:[%s387 + $0x250] sm:$0xff]
        %v817 = vld [vmem:[%s387 + $0x258] sm:$0xff]
        %v818 = vld [vmem:[%s387 + $0x260] sm:$0xff]
        %v819 = vld [vmem:[%s387 + $0x268] sm:$0xff]
        %v820 = vld [vmem:[%s387 + $0x270] sm:$0xff]
        %v821 = vld [vmem:[%s387 + $0x278] sm:$0xff]
        %v822 = vld [vmem:[%s387 + $0x280] sm:$0xff]
        %v823 = vld [vmem:[%s387 + $0x288] sm:$0xff]
        %v824 = vld [vmem:[%s387 + $0x290] sm:$0xff]
        %v825 = vld [vmem:[%s387 + $0x298] sm:$0xff]
        %v826 = vld [vmem:[%s387 + $0x2a0] sm:$0xff]
        %v827 = vld [vmem:[%s387 + $0x2a8] sm:$0xff]
        %v828 = vld [vmem:[%s387 + $0x2b0] sm:$0xff]
        %v829 = vld [vmem:[%s387 + $0x2b8] sm:$0xff]
        %v830 = vld [vmem:[%s387 + $0x2c0] sm:$0xff]
        %v831 = vld [vmem:[%s387 + $0x2c8] sm:$0xff]
        %v832 = vld [vmem:[%s387 + $0x2d0] sm:$0xff]
        %v833 = vld [vmem:[%s387 + $0x2d8] sm:$0xff]
        %v834 = vld [vmem:[%s387 + $0x2e0] sm:$0xff]
        %v835 = vld [vmem:[%s387 + $0x2e8] sm:$0xff]
        %v836 = vld [vmem:[%s387 + $0x2f0] sm:$0xff]
        %v837 = vld [vmem:[%s387 + $0x2f8] sm:$0xff]
        %v838 = vld [vmem:[%s387 + $0x300] sm:$0xff]
        %v839 = vld [vmem:[%s387 + $0x308] sm:$0xff]
        %v840 = vld [vmem:[%s387 + $0x310] sm:$0xff]
        %v841 = vld [vmem:[%s387 + $0x318] sm:$0xff]
        %v842 = vld [vmem:[%s387 + $0x320] sm:$0xff]
        %v843 = vld [vmem:[%s387 + $0x328] sm:$0xff]
        %v844 = vld [vmem:[%s387 + $0x330] sm:$0xff]
        %v845 = vld [vmem:[%s387 + $0x338] sm:$0xff]
        %v846 = vld [vmem:[%s387 + $0x340] sm:$0xff]
        %v847 = vld [vmem:[%s387 + $0x348] sm:$0xff]
        %v848 = vld [vmem:[%s387 + $0x350] sm:$0xff]
        %v849 = vld [vmem:[%s387 + $0x358] sm:$0xff]
        %v850 = vld [vmem:[%s387 + $0x360] sm:$0xff]
        %v851 = vld [vmem:[%s387 + $0x368] sm:$0xff]
        %v852 = vld [vmem:[%s387 + $0x370] sm:$0xff]
        %v853 = vld [vmem:[%s387 + $0x378] sm:$0xff]
        %v854 = vld [vmem:[%s387 + $0x380] sm:$0xff]
        %v855 = vld [vmem:[%s387 + $0x388] sm:$0xff]
        %v856 = vld [vmem:[%s387 + $0x390] sm:$0xff]
        %v857 = vld [vmem:[%s387 + $0x398] sm:$0xff]
        %v858 = vld [vmem:[%s387 + $0x3a0] sm:$0xff]
        %v859 = vld [vmem:[%s387 + $0x3a8] sm:$0xff]
        %v860 = vld [vmem:[%s387 + $0x3b0] sm:$0xff]
        %v861 = vld [vmem:[%s387 + $0x3b8] sm:$0xff]
        %v862 = vld [vmem:[%s387 + $0x3c0] sm:$0xff]
        %v863 = vld [vmem:[%s387 + $0x3c8] sm:$0xff]
        %v864 = vld [vmem:[%s387 + $0x3d0] sm:$0xff]
        %v865 = vld [vmem:[%s387 + $0x3d8] sm:$0xff]
        %v866 = vld [vmem:[%s387 + $0x3e0] sm:$0xff]
        %v867 = vld [vmem:[%s387 + $0x3e8] sm:$0xff]
        %v868 = vld [vmem:[%s387 + $0x3f0] sm:$0xff]
        %v869 = vld [vmem:[%s387 + $0x3f8] sm:$0xff]
        %v870 = vmax.f32 %v742, 0.0
        %v871 = vmax.f32 %v743, 0.0
        %v872 = vmax.f32 %v744, 0.0
        %v873 = vmax.f32 %v745, 0.0
        %v874 = vmax.f32 %v746, 0.0
        %v875 = vmax.f32 %v747, 0.0
        %v876 = vmax.f32 %v748, 0.0
        %v877 = vmax.f32 %v749, 0.0
        %v878 = vmax.f32 %v750, 0.0
        %v879 = vmax.f32 %v751, 0.0
        %v880 = vmax.f32 %v752, 0.0
        %v881 = vmax.f32 %v753, 0.0
        %v882 = vmax.f32 %v754, 0.0
        %v883 = vmax.f32 %v755, 0.0
        %v884 = vmax.f32 %v756, 0.0
        %v885 = vmax.f32 %v757, 0.0
        %v886 = vmax.f32 %v758, 0.0
        %v887 = vmax.f32 %v759, 0.0
        %v888 = vmax.f32 %v760, 0.0
        %v889 = vmax.f32 %v761, 0.0
        %v890 = vmax.f32 %v762, 0.0
        %v891 = vmax.f32 %v763, 0.0
        %v892 = vmax.f32 %v764, 0.0
        %v893 = vmax.f32 %v765, 0.0
        %v894 = vmax.f32 %v766, 0.0
        %v895 = vmax.f32 %v767, 0.0
        %v896 = vmax.f32 %v768, 0.0
        %v897 = vmax.f32 %v769, 0.0
        %v898 = vmax.f32 %v770, 0.0
        %v899 = vmax.f32 %v771, 0.0
        %v900 = vmax.f32 %v772, 0.0
        %v901 = vmax.f32 %v773, 0.0
        %v902 = vmax.f32 %v774, 0.0
        %v903 = vmax.f32 %v775, 0.0
        %v904 = vmax.f32 %v776, 0.0
        %v905 = vmax.f32 %v777, 0.0
        %v906 = vmax.f32 %v778, 0.0
        %v907 = vmax.f32 %v779, 0.0
        %v908 = vmax.f32 %v780, 0.0
        %v909 = vmax.f32 %v781, 0.0
        %v910 = vmax.f32 %v782, 0.0
        %v911 = vmax.f32 %v783, 0.0
        %v912 = vmax.f32 %v784, 0.0
        %v913 = vmax.f32 %v785, 0.0
        %v914 = vmax.f32 %v786, 0.0
        %v915 = vmax.f32 %v787, 0.0
        %v916 = vmax.f32 %v788, 0.0
        %v917 = vmax.f32 %v789, 0.0
        %v918 = vmax.f32 %v790, 0.0
        %v919 = vmax.f32 %v791, 0.0
        %v920 = vmax.f32 %v792, 0.0
        %v921 = vmax.f32 %v793, 0.0
        %v922 = vmax.f32 %v794, 0.0
        %v923 = vmax.f32 %v795, 0.0
        %v924 = vmax.f32 %v796, 0.0
        %v925 = vmax.f32 %v797, 0.0
        %v926 = vmax.f32 %v798, 0.0
        %v927 = vmax.f32 %v799, 0.0
        %v928 = vmax.f32 %v800, 0.0
        %v929 = vmax.f32 %v801, 0.0
        %v930 = vmax.f32 %v802, 0.0
        %v931 = vmax.f32 %v803, 0.0
        %v932 = vmax.f32 %v804, 0.0
        %v933 = vmax.f32 %v805, 0.0
        %v934 = vmax.f32 %v806, 0.0
        %v935 = vmax.f32 %v807, 0.0
        %v936 = vmax.f32 %v808, 0.0
        %v937 = vmax.f32 %v809, 0.0
        %v938 = vmax.f32 %v810, 0.0
        %v939 = vmax.f32 %v811, 0.0
        %v940 = vmax.f32 %v812, 0.0
        %v941 = vmax.f32 %v813, 0.0
        %v942 = vmax.f32 %v814, 0.0
        %v943 = vmax.f32 %v815, 0.0
        %v944 = vmax.f32 %v816, 0.0
        %v945 = vmax.f32 %v817, 0.0
        %v946 = vmax.f32 %v818, 0.0
        %v947 = vmax.f32 %v819, 0.0
        %v948 = vmax.f32 %v820, 0.0
        %v949 = vmax.f32 %v821, 0.0
        %v950 = vmax.f32 %v822, 0.0
        %v951 = vmax.f32 %v823, 0.0
        %v952 = vmax.f32 %v824, 0.0
        %v953 = vmax.f32 %v825, 0.0
        %v954 = vmax.f32 %v826, 0.0
        %v955 = vmax.f32 %v827, 0.0
        %v956 = vmax.f32 %v828, 0.0
        %v957 = vmax.f32 %v829, 0.0
        %v958 = vmax.f32 %v830, 0.0
        %v959 = vmax.f32 %v831, 0.0
        %v960 = vmax.f32 %v832, 0.0
        %v961 = vmax.f32 %v833, 0.0
        %v962 = vmax.f32 %v834, 0.0
        %v963 = vmax.f32 %v835, 0.0
        %v964 = vmax.f32 %v836, 0.0
        %v965 = vmax.f32 %v837, 0.0
        %v966 = vmax.f32 %v838, 0.0
        %v967 = vmax.f32 %v839, 0.0
        %v968 = vmax.f32 %v840, 0.0
        %v969 = vmax.f32 %v841, 0.0
        %v970 = vmax.f32 %v842, 0.0
        %v971 = vmax.f32 %v843, 0.0
        %v972 = vmax.f32 %v844, 0.0
        %v973 = vmax.f32 %v845, 0.0
        %v974 = vmax.f32 %v846, 0.0
        %v975 = vmax.f32 %v847, 0.0
        %v976 = vmax.f32 %v848, 0.0
        %v977 = vmax.f32 %v849, 0.0
        %v978 = vmax.f32 %v850, 0.0
        %v979 = vmax.f32 %v851, 0.0
        %v980 = vmax.f32 %v852, 0.0
        %v981 = vmax.f32 %v853, 0.0
        %v982 = vmax.f32 %v854, 0.0
        %v983 = vmax.f32 %v855, 0.0
        %v984 = vmax.f32 %v856, 0.0
        %v985 = vmax.f32 %v857, 0.0
        %v986 = vmax.f32 %v858, 0.0
        %v987 = vmax.f32 %v859, 0.0
        %v988 = vmax.f32 %v860, 0.0
        %v989 = vmax.f32 %v861, 0.0
        %v990 = vmax.f32 %v862, 0.0
        %v991 = vmax.f32 %v863, 0.0
        %v992 = vmax.f32 %v864, 0.0
        %v993 = vmax.f32 %v865, 0.0
        %v994 = vmax.f32 %v866, 0.0
        %v995 = vmax.f32 %v867, 0.0
        %v996 = vmax.f32 %v868, 0.0
        %v997 = vmax.f32 %v869, 0.0
        %v998 = vand.u32 2147483647, %v742
        %v999 = vand.u32 2147483647, %v743
        %v1000 = vand.u32 2147483647, %v744
        %v1001 = vand.u32 2147483647, %v745
        %v1002 = vand.u32 2147483647, %v746
        %v1003 = vand.u32 2147483647, %v747
        %v1004 = vand.u32 2147483647, %v748
        %v1005 = vand.u32 2147483647, %v749
        %v1006 = vand.u32 2147483647, %v750
        %v1007 = vand.u32 2147483647, %v751
        %v1008 = vand.u32 2147483647, %v752
        %v1009 = vand.u32 2147483647, %v753
        %v1010 = vand.u32 2147483647, %v754
        %v1011 = vand.u32 2147483647, %v755
        %v1012 = vand.u32 2147483647, %v756
        %v1013 = vand.u32 2147483647, %v757
        %v1014 = vand.u32 2147483647, %v758
        %v1015 = vand.u32 2147483647, %v759
        %v1016 = vand.u32 2147483647, %v760
        %v1017 = vand.u32 2147483647, %v761
        %v1018 = vand.u32 2147483647, %v762
        %v1019 = vand.u32 2147483647, %v763
        %v1020 = vand.u32 2147483647, %v764
        %v1021 = vand.u32 2147483647, %v765
        %v1022 = vand.u32 2147483647, %v766
        %v1023 = vand.u32 2147483647, %v767
        %v1024 = vand.u32 2147483647, %v768
        %v1025 = vand.u32 2147483647, %v769
        %v1026 = vand.u32 2147483647, %v770
        %v1027 = vand.u32 2147483647, %v771
        %v1028 = vand.u32 2147483647, %v772
        %v1029 = vand.u32 2147483647, %v773
        %v1030 = vand.u32 2147483647, %v774
        %v1031 = vand.u32 2147483647, %v775
        %v1032 = vand.u32 2147483647, %v776
        %v1033 = vand.u32 2147483647, %v777
        %v1034 = vand.u32 2147483647, %v778
        %v1035 = vand.u32 2147483647, %v779
        %v1036 = vand.u32 2147483647, %v780
        %v1037 = vand.u32 2147483647, %v781
        %v1038 = vand.u32 2147483647, %v782
        %v1039 = vand.u32 2147483647, %v783
        %v1040 = vand.u32 2147483647, %v784
        %v1041 = vand.u32 2147483647, %v785
        %v1042 = vand.u32 2147483647, %v786
        %v1043 = vand.u32 2147483647, %v787
        %v1044 = vand.u32 2147483647, %v788
        %v1045 = vand.u32 2147483647, %v789
        %v1046 = vand.u32 2147483647, %v790
        %v1047 = vand.u32 2147483647, %v791
        %v1048 = vand.u32 2147483647, %v792
        %v1049 = vand.u32 2147483647, %v793
        %v1050 = vand.u32 2147483647, %v794
        %v1051 = vand.u32 2147483647, %v795
        %v1052 = vand.u32 2147483647, %v796
        %v1053 = vand.u32 2147483647, %v797
        %v1054 = vand.u32 2147483647, %v798
        %v1055 = vand.u32 2147483647, %v799
        %v1056 = vand.u32 2147483647, %v800
        %v1057 = vand.u32 2147483647, %v801
        %v1058 = vand.u32 2147483647, %v802
        %v1059 = vand.u32 2147483647, %v803
        %v1060 = vand.u32 2147483647, %v804
        %v1061 = vand.u32 2147483647, %v805
        %v1062 = vand.u32 2147483647, %v806
        %v1063 = vand.u32 2147483647, %v807
        %v1064 = vand.u32 2147483647, %v808
        %v1065 = vand.u32 2147483647, %v809
        %v1066 = vand.u32 2147483647, %v810
        %v1067 = vand.u32 2147483647, %v811
        %v1068 = vand.u32 2147483647, %v812
        %v1069 = vand.u32 2147483647, %v813
        %v1070 = vand.u32 2147483647, %v814
        %v1071 = vand.u32 2147483647, %v815
        %v1072 = vand.u32 2147483647, %v816
        %v1073 = vand.u32 2147483647, %v817
        %v1074 = vand.u32 2147483647, %v818
        %v1075 = vand.u32 2147483647, %v819
        %v1076 = vand.u32 2147483647, %v820
        %v1077 = vand.u32 2147483647, %v821
        %v1078 = vand.u32 2147483647, %v822
        %v1079 = vand.u32 2147483647, %v823
        %v1080 = vand.u32 2147483647, %v824
        %v1081 = vand.u32 2147483647, %v825
        %v1082 = vand.u32 2147483647, %v826
        %v1083 = vand.u32 2147483647, %v827
        %v1084 = vand.u32 2147483647, %v828
        %v1085 = vand.u32 2147483647, %v829
        %v1086 = vand.u32 2147483647, %v830
        %v1087 = vand.u32 2147483647, %v831
        %v1088 = vand.u32 2147483647, %v832
        %v1089 = vand.u32 2147483647, %v833
        %v1090 = vand.u32 2147483647, %v834
        %v1091 = vand.u32 2147483647, %v835
        %v1092 = vand.u32 2147483647, %v836
        %v1093 = vand.u32 2147483647, %v837
        %v1094 = vand.u32 2147483647, %v838
        %v1095 = vand.u32 2147483647, %v839
        %v1096 = vand.u32 2147483647, %v840
        %v1097 = vand.u32 2147483647, %v841
        %v1098 = vand.u32 2147483647, %v842
        %v1099 = vand.u32 2147483647, %v843
        %v1100 = vand.u32 2147483647, %v844
        %v1101 = vand.u32 2147483647, %v845
        %v1102 = vand.u32 2147483647, %v846
        %v1103 = vand.u32 2147483647, %v847
        %v1104 = vand.u32 2147483647, %v848
        %v1105 = vand.u32 2147483647, %v849
        %v1106 = vand.u32 2147483647, %v850
        %v1107 = vand.u32 2147483647, %v851
        %v1108 = vand.u32 2147483647, %v852
        %v1109 = vand.u32 2147483647, %v853
        %v1110 = vand.u32 2147483647, %v854
        %v1111 = vand.u32 2147483647, %v855
        %v1112 = vand.u32 2147483647, %v856
        %v1113 = vand.u32 2147483647, %v857
        %v1114 = vand.u32 2147483647, %v858
        %v1115 = vand.u32 2147483647, %v859
        %v1116 = vand.u32 2147483647, %v860
        %v1117 = vand.u32 2147483647, %v861
        %v1118 = vand.u32 2147483647, %v862
        %v1119 = vand.u32 2147483647, %v863
        %v1120 = vand.u32 2147483647, %v864
        %v1121 = vand.u32 2147483647, %v865
        %v1122 = vand.u32 2147483647, %v866
        %v1123 = vand.u32 2147483647, %v867
        %v1124 = vand.u32 2147483647, %v868
        %v1125 = vand.u32 2147483647, %v869
        %v1126 = vsub.f32 0.0, %v998
        %v1127 = vsub.f32 0.0, %v999
        %v1128 = vsub.f32 0.0, %v1000
        %v1129 = vsub.f32 0.0, %v1001
        %v1130 = vsub.f32 0.0, %v1002
        %v1131 = vsub.f32 0.0, %v1003
        %v1132 = vsub.f32 0.0, %v1004
        %v1133 = vsub.f32 0.0, %v1005
        %v1134 = vsub.f32 0.0, %v1006
        %v1135 = vsub.f32 0.0, %v1007
        %v1136 = vsub.f32 0.0, %v1008
        %v1137 = vsub.f32 0.0, %v1009
        %v1138 = vsub.f32 0.0, %v1010
        %v1139 = vsub.f32 0.0, %v1011
        %v1140 = vsub.f32 0.0, %v1012
        %v1141 = vsub.f32 0.0, %v1013
        %v1142 = vsub.f32 0.0, %v1014
        %v1143 = vsub.f32 0.0, %v1015
        %v1144 = vsub.f32 0.0, %v1016
        %v1145 = vsub.f32 0.0, %v1017
        %v1146 = vsub.f32 0.0, %v1018
        %v1147 = vsub.f32 0.0, %v1019
        %v1148 = vsub.f32 0.0, %v1020
        %v1149 = vsub.f32 0.0, %v1021
        %v1150 = vsub.f32 0.0, %v1022
        %v1151 = vsub.f32 0.0, %v1023
        %v1152 = vsub.f32 0.0, %v1024
        %v1153 = vsub.f32 0.0, %v1025
        %v1154 = vsub.f32 0.0, %v1026
        %v1155 = vsub.f32 0.0, %v1027
        %v1156 = vsub.f32 0.0, %v1028
        %v1157 = vsub.f32 0.0, %v1029
        %v1158 = vsub.f32 0.0, %v1030
        %v1159 = vsub.f32 0.0, %v1031
        %v1160 = vsub.f32 0.0, %v1032
        %v1161 = vsub.f32 0.0, %v1033
        %v1162 = vsub.f32 0.0, %v1034
        %v1163 = vsub.f32 0.0, %v1035
        %v1164 = vsub.f32 0.0, %v1036
        %v1165 = vsub.f32 0.0, %v1037
        %v1166 = vsub.f32 0.0, %v1038
        %v1167 = vsub.f32 0.0, %v1039
        %v1168 = vsub.f32 0.0, %v1040
        %v1169 = vsub.f32 0.0, %v1041
        %v1170 = vsub.f32 0.0, %v1042
        %v1171 = vsub.f32 0.0, %v1043
        %v1172 = vsub.f32 0.0, %v1044
        %v1173 = vsub.f32 0.0, %v1045
        %v1174 = vsub.f32 0.0, %v1046
        %v1175 = vsub.f32 0.0, %v1047
        %v1176 = vsub.f32 0.0, %v1048
        %v1177 = vsub.f32 0.0, %v1049
        %v1178 = vsub.f32 0.0, %v1050
        %v1179 = vsub.f32 0.0, %v1051
        %v1180 = vsub.f32 0.0, %v1052
        %v1181 = vsub.f32 0.0, %v1053
        %v1182 = vsub.f32 0.0, %v1054
        %v1183 = vsub.f32 0.0, %v1055
        %v1184 = vsub.f32 0.0, %v1056
        %v1185 = vsub.f32 0.0, %v1057
        %v1186 = vsub.f32 0.0, %v1058
        %v1187 = vsub.f32 0.0, %v1059
        %v1188 = vsub.f32 0.0, %v1060
        %v1189 = vsub.f32 0.0, %v1061
        %v1190 = vsub.f32 0.0, %v1062
        %v1191 = vsub.f32 0.0, %v1063
        %v1192 = vsub.f32 0.0, %v1064
        %v1193 = vsub.f32 0.0, %v1065
        %v1194 = vsub.f32 0.0, %v1066
        %v1195 = vsub.f32 0.0, %v1067
        %v1196 = vsub.f32 0.0, %v1068
        %v1197 = vsub.f32 0.0, %v1069
        %v1198 = vsub.f32 0.0, %v1070
        %v1199 = vsub.f32 0.0, %v1071
        %v1200 = vsub.f32 0.0, %v1072
        %v1201 = vsub.f32 0.0, %v1073
        %v1202 = vsub.f32 0.0, %v1074
        %v1203 = vsub.f32 0.0, %v1075
        %v1204 = vsub.f32 0.0, %v1076
        %v1205 = vsub.f32 0.0, %v1077
        %v1206 = vsub.f32 0.0, %v1078
        %v1207 = vsub.f32 0.0, %v1079
        %v1208 = vsub.f32 0.0, %v1080
        %v1209 = vsub.f32 0.0, %v1081
        %v1210 = vsub.f32 0.0, %v1082
        %v1211 = vsub.f32 0.0, %v1083
        %v1212 = vsub.f32 0.0, %v1084
        %v1213 = vsub.f32 0.0, %v1085
        %v1214 = vsub.f32 0.0, %v1086
        %v1215 = vsub.f32 0.0, %v1087
        %v1216 = vsub.f32 0.0, %v1088
        %v1217 = vsub.f32 0.0, %v1089
        %v1218 = vsub.f32 0.0, %v1090
        %v1219 = vsub.f32 0.0, %v1091
        %v1220 = vsub.f32 0.0, %v1092
        %v1221 = vsub.f32 0.0, %v1093
        %v1222 = vsub.f32 0.0, %v1094
        %v1223 = vsub.f32 0.0, %v1095
        %v1224 = vsub.f32 0.0, %v1096
        %v1225 = vsub.f32 0.0, %v1097
        %v1226 = vsub.f32 0.0, %v1098
        %v1227 = vsub.f32 0.0, %v1099
        %v1228 = vsub.f32 0.0, %v1100
        %v1229 = vsub.f32 0.0, %v1101
        %v1230 = vsub.f32 0.0, %v1102
        %v1231 = vsub.f32 0.0, %v1103
        %v1232 = vsub.f32 0.0, %v1104
        %v1233 = vsub.f32 0.0, %v1105
        %v1234 = vsub.f32 0.0, %v1106
        %v1235 = vsub.f32 0.0, %v1107
        %v1236 = vsub.f32 0.0, %v1108
        %v1237 = vsub.f32 0.0, %v1109
        %v1238 = vsub.f32 0.0, %v1110
        %v1239 = vsub.f32 0.0, %v1111
        %v1240 = vsub.f32 0.0, %v1112
        %v1241 = vsub.f32 0.0, %v1113
        %v1242 = vsub.f32 0.0, %v1114
        %v1243 = vsub.f32 0.0, %v1115
        %v1244 = vsub.f32 0.0, %v1116
        %v1245 = vsub.f32 0.0, %v1117
        %v1246 = vsub.f32 0.0, %v1118
        %v1247 = vsub.f32 0.0, %v1119
        %v1248 = vsub.f32 0.0, %v1120
        %v1249 = vsub.f32 0.0, %v1121
        %v1250 = vsub.f32 0.0, %v1122
        %v1251 = vsub.f32 0.0, %v1123
        %v1252 = vsub.f32 0.0, %v1124
        %v1253 = vsub.f32 0.0, %v1125
        %v1254 = vmul.f32 %v1126, 1.442695
        %v1255 = vpow.pop %v1254
        %v1256 = vmul.f32 %v1127, 1.442695
        %v1257 = vpow.pop %v1256
        %v1258 = vmul.f32 %v1128, 1.442695
        %v1259 = vpow.pop %v1258
        %v1260 = vmul.f32 %v1129, 1.442695
        %v1261 = vpow.pop %v1260
        %v1262 = vmul.f32 %v1130, 1.442695
        %v1263 = vpow.pop %v1262
        %v1264 = vmul.f32 %v1131, 1.442695
        %v1265 = vpow.pop %v1264
        %v1266 = vmul.f32 %v1132, 1.442695
        %v1267 = vpow.pop %v1266
        %v1268 = vmul.f32 %v1133, 1.442695
        %v1269 = vpow.pop %v1268
        %v1270 = vmul.f32 %v1134, 1.442695
        %v1271 = vpow.pop %v1270
        %v1272 = vmul.f32 %v1135, 1.442695
        %v1273 = vpow.pop %v1272
        %v1274 = vmul.f32 %v1136, 1.442695
        %v1275 = vpow.pop %v1274
        %v1276 = vmul.f32 %v1137, 1.442695
        %v1277 = vpow.pop %v1276
        %v1278 = vmul.f32 %v1138, 1.442695
        %v1279 = vpow.pop %v1278
        %v1280 = vmul.f32 %v1139, 1.442695
        %v1281 = vpow.pop %v1280
        %v1282 = vmul.f32 %v1140, 1.442695
        %v1283 = vpow.pop %v1282
        %v1284 = vmul.f32 %v1141, 1.442695
        %v1285 = vpow.pop %v1284
        %v1286 = vmul.f32 %v1142, 1.442695
        %v1287 = vpow.pop %v1286
        %v1288 = vmul.f32 %v1143, 1.442695
        %v1289 = vpow.pop %v1288
        %v1290 = vmul.f32 %v1144, 1.442695
        %v1291 = vpow.pop %v1290
        %v1292 = vmul.f32 %v1145, 1.442695
        %v1293 = vpow.pop %v1292
        %v1294 = vmul.f32 %v1146, 1.442695
        %v1295 = vpow.pop %v1294
        %v1296 = vmul.f32 %v1147, 1.442695
        %v1297 = vpow.pop %v1296
        %v1298 = vmul.f32 %v1148, 1.442695
        %v1299 = vpow.pop %v1298
        %v1300 = vmul.f32 %v1149, 1.442695
        %v1301 = vpow.pop %v1300
        %v1302 = vmul.f32 %v1150, 1.442695
        %v1303 = vpow.pop %v1302
        %v1304 = vmul.f32 %v1151, 1.442695
        %v1305 = vpow.pop %v1304
        %v1306 = vmul.f32 %v1152, 1.442695
        %v1307 = vpow.pop %v1306
        %v1308 = vmul.f32 %v1153, 1.442695
        %v1309 = vpow.pop %v1308
        %v1310 = vmul.f32 %v1154, 1.442695
        %v1311 = vpow.pop %v1310
        %v1312 = vmul.f32 %v1155, 1.442695
        %v1313 = vpow.pop %v1312
        %v1314 = vmul.f32 %v1156, 1.442695
        %v1315 = vpow.pop %v1314
        %v1316 = vmul.f32 %v1157, 1.442695
        %v1317 = vpow.pop %v1316
        %v1318 = vmul.f32 %v1158, 1.442695
        %v1319 = vpow.pop %v1318
        %v1320 = vmul.f32 %v1159, 1.442695
        %v1321 = vpow.pop %v1320
        %v1322 = vmul.f32 %v1160, 1.442695
        %v1323 = vpow.pop %v1322
        %v1324 = vmul.f32 %v1161, 1.442695
        %v1325 = vpow.pop %v1324
        %v1326 = vmul.f32 %v1162, 1.442695
        %v1327 = vpow.pop %v1326
        %v1328 = vmul.f32 %v1163, 1.442695
        %v1329 = vpow.pop %v1328
        %v1330 = vmul.f32 %v1164, 1.442695
        %v1331 = vpow.pop %v1330
        %v1332 = vmul.f32 %v1165, 1.442695
        %v1333 = vpow.pop %v1332
        %v1334 = vmul.f32 %v1166, 1.442695
        %v1335 = vpow.pop %v1334
        %v1336 = vmul.f32 %v1167, 1.442695
        %v1337 = vpow.pop %v1336
        %v1338 = vmul.f32 %v1168, 1.442695
        %v1339 = vpow.pop %v1338
        %v1340 = vmul.f32 %v1169, 1.442695
        %v1341 = vpow.pop %v1340
        %v1342 = vmul.f32 %v1170, 1.442695
        %v1343 = vpow.pop %v1342
        %v1344 = vmul.f32 %v1171, 1.442695
        %v1345 = vpow.pop %v1344
        %v1346 = vmul.f32 %v1172, 1.442695
        %v1347 = vpow.pop %v1346
        %v1348 = vmul.f32 %v1173, 1.442695
        %v1349 = vpow.pop %v1348
        %v1350 = vmul.f32 %v1174, 1.442695
        %v1351 = vpow.pop %v1350
        %v1352 = vmul.f32 %v1175, 1.442695
        %v1353 = vpow.pop %v1352
        %v1354 = vmul.f32 %v1176, 1.442695
        %v1355 = vpow.pop %v1354
        %v1356 = vmul.f32 %v1177, 1.442695
        %v1357 = vpow.pop %v1356
        %v1358 = vmul.f32 %v1178, 1.442695
        %v1359 = vpow.pop %v1358
        %v1360 = vmul.f32 %v1179, 1.442695
        %v1361 = vpow.pop %v1360
        %v1362 = vmul.f32 %v1180, 1.442695
        %v1363 = vpow.pop %v1362
        %v1364 = vmul.f32 %v1181, 1.442695
        %v1365 = vpow.pop %v1364
        %v1366 = vmul.f32 %v1182, 1.442695
        %v1367 = vpow.pop %v1366
        %v1368 = vmul.f32 %v1183, 1.442695
        %v1369 = vpow.pop %v1368
        %v1370 = vmul.f32 %v1184, 1.442695
        %v1371 = vpow.pop %v1370
        %v1372 = vmul.f32 %v1185, 1.442695
        %v1373 = vpow.pop %v1372
        %v1374 = vmul.f32 %v1186, 1.442695
        %v1375 = vpow.pop %v1374
        %v1376 = vmul.f32 %v1187, 1.442695
        %v1377 = vpow.pop %v1376
        %v1378 = vmul.f32 %v1188, 1.442695
        %v1379 = vpow.pop %v1378
        %v1380 = vmul.f32 %v1189, 1.442695
        %v1381 = vpow.pop %v1380
        %v1382 = vmul.f32 %v1190, 1.442695
        %v1383 = vpow.pop %v1382
        %v1384 = vmul.f32 %v1191, 1.442695
        %v1385 = vpow.pop %v1384
        %v1386 = vmul.f32 %v1192, 1.442695
        %v1387 = vpow.pop %v1386
        %v1388 = vmul.f32 %v1193, 1.442695
        %v1389 = vpow.pop %v1388
        %v1390 = vmul.f32 %v1194, 1.442695
        %v1391 = vpow.pop %v1390
        %v1392 = vmul.f32 %v1195, 1.442695
        %v1393 = vpow.pop %v1392
        %v1394 = vmul.f32 %v1196, 1.442695
        %v1395 = vpow.pop %v1394
        %v1396 = vmul.f32 %v1197, 1.442695
        %v1397 = vpow.pop %v1396
        %v1398 = vmul.f32 %v1198, 1.442695
        %v1399 = vpow.pop %v1398
        %v1400 = vmul.f32 %v1199, 1.442695
        %v1401 = vpow.pop %v1400
        %v1402 = vmul.f32 %v1200, 1.442695
        %v1403 = vpow.pop %v1402
        %v1404 = vmul.f32 %v1201, 1.442695
        %v1405 = vpow.pop %v1404
        %v1406 = vmul.f32 %v1202, 1.442695
        %v1407 = vpow.pop %v1406
        %v1408 = vmul.f32 %v1203, 1.442695
        %v1409 = vpow.pop %v1408
        %v1410 = vmul.f32 %v1204, 1.442695
        %v1411 = vpow.pop %v1410
        %v1412 = vmul.f32 %v1205, 1.442695
        %v1413 = vpow.pop %v1412
        %v1414 = vmul.f32 %v1206, 1.442695
        %v1415 = vpow.pop %v1414
        %v1416 = vmul.f32 %v1207, 1.442695
        %v1417 = vpow.pop %v1416
        %v1418 = vmul.f32 %v1208, 1.442695
        %v1419 = vpow.pop %v1418
        %v1420 = vmul.f32 %v1209, 1.442695
        %v1421 = vpow.pop %v1420
        %v1422 = vmul.f32 %v1210, 1.442695
        %v1423 = vpow.pop %v1422
        %v1424 = vmul.f32 %v1211, 1.442695
        %v1425 = vpow.pop %v1424
        %v1426 = vmul.f32 %v1212, 1.442695
        %v1427 = vpow.pop %v1426
        %v1428 = vmul.f32 %v1213, 1.442695
        %v1429 = vpow.pop %v1428
        %v1430 = vmul.f32 %v1214, 1.442695
        %v1431 = vpow.pop %v1430
        %v1432 = vmul.f32 %v1215, 1.442695
        %v1433 = vpow.pop %v1432
        %v1434 = vmul.f32 %v1216, 1.442695
        %v1435 = vpow.pop %v1434
        %v1436 = vmul.f32 %v1217, 1.442695
        %v1437 = vpow.pop %v1436
        %v1438 = vmul.f32 %v1218, 1.442695
        %v1439 = vpow.pop %v1438
        %v1440 = vmul.f32 %v1219, 1.442695
        %v1441 = vpow.pop %v1440
        %v1442 = vmul.f32 %v1220, 1.442695
        %v1443 = vpow.pop %v1442
        %v1444 = vmul.f32 %v1221, 1.442695
        %v1445 = vpow.pop %v1444
        %v1446 = vmul.f32 %v1222, 1.442695
        %v1447 = vpow.pop %v1446
        %v1448 = vmul.f32 %v1223, 1.442695
        %v1449 = vpow.pop %v1448
        %v1450 = vmul.f32 %v1224, 1.442695
        %v1451 = vpow.pop %v1450
        %v1452 = vmul.f32 %v1225, 1.442695
        %v1453 = vpow.pop %v1452
        %v1454 = vmul.f32 %v1226, 1.442695
        %v1455 = vpow.pop %v1454
        %v1456 = vmul.f32 %v1227, 1.442695
        %v1457 = vpow.pop %v1456
        %v1458 = vmul.f32 %v1228, 1.442695
        %v1459 = vpow.pop %v1458
        %v1460 = vmul.f32 %v1229, 1.442695
        %v1461 = vpow.pop %v1460
        %v1462 = vmul.f32 %v1230, 1.442695
        %v1463 = vpow.pop %v1462
        %v1464 = vmul.f32 %v1231, 1.442695
        %v1465 = vpow.pop %v1464
        %v1466 = vmul.f32 %v1232, 1.442695
        %v1467 = vpow.pop %v1466
        %v1468 = vmul.f32 %v1233, 1.442695
        %v1469 = vpow.pop %v1468
        %v1470 = vmul.f32 %v1234, 1.442695
        %v1471 = vpow.pop %v1470
        %v1472 = vmul.f32 %v1235, 1.442695
        %v1473 = vpow.pop %v1472
        %v1474 = vmul.f32 %v1236, 1.442695
        %v1475 = vpow.pop %v1474
        %v1476 = vmul.f32 %v1237, 1.442695
        %v1477 = vpow.pop %v1476
        %v1478 = vmul.f32 %v1238, 1.442695
        %v1479 = vpow.pop %v1478
        %v1480 = vmul.f32 %v1239, 1.442695
        %v1481 = vpow.pop %v1480
        %v1482 = vmul.f32 %v1240, 1.442695
        %v1483 = vpow.pop %v1482
        %v1484 = vmul.f32 %v1241, 1.442695
        %v1485 = vpow.pop %v1484
        %v1486 = vmul.f32 %v1242, 1.442695
        %v1487 = vpow.pop %v1486
        %v1488 = vmul.f32 %v1243, 1.442695
        %v1489 = vpow.pop %v1488
        %v1490 = vmul.f32 %v1244, 1.442695
        %v1491 = vpow.pop %v1490
        %v1492 = vmul.f32 %v1245, 1.442695
        %v1493 = vpow.pop %v1492
        %v1494 = vmul.f32 %v1246, 1.442695
        %v1495 = vpow.pop %v1494
        %v1496 = vmul.f32 %v1247, 1.442695
        %v1497 = vpow.pop %v1496
        %v1498 = vmul.f32 %v1248, 1.442695
        %v1499 = vpow.pop %v1498
        %v1500 = vmul.f32 %v1249, 1.442695
        %v1501 = vpow.pop %v1500
        %v1502 = vmul.f32 %v1250, 1.442695
        %v1503 = vpow.pop %v1502
        %v1504 = vmul.f32 %v1251, 1.442695
        %v1505 = vpow.pop %v1504
        %v1506 = vmul.f32 %v1252, 1.442695
        %v1507 = vpow.pop %v1506
        %v1508 = vmul.f32 %v1253, 1.442695
        %v1509 = vpow.pop %v1508
        %v1510 = vadd.f32 %v1255, 1.0
        %v1511 = vlog2.pop %v1510
        %v1512 = vmul.f32 %v1511, 0.6931472
        %v1513 = vmul.f32 -0.5, %v1255
        %v1514 = vadd.f32 %v1513, 1.0
        %v1515 = vmul.f32 %v1514, %v1255
        %v1516 = vand.u32 2147483647, %v1255
        %vm1517 = vcmp.lt.f32.partialorder %v1516, 0.0004427343
        %v1518 = vsel %vm1517, %v1515, %v1512
        %v1519 = vadd.f32 %v1257, 1.0
        %v1520 = vlog2.pop %v1519
        %v1521 = vmul.f32 %v1520, 0.6931472
        %v1522 = vmul.f32 -0.5, %v1257
        %v1523 = vadd.f32 %v1522, 1.0
        %v1524 = vmul.f32 %v1523, %v1257
        %v1525 = vand.u32 2147483647, %v1257
        %vm1526 = vcmp.lt.f32.partialorder %v1525, 0.0004427343
        %v1527 = vsel %vm1526, %v1524, %v1521
        %v1528 = vadd.f32 %v1259, 1.0
        %v1529 = vlog2.pop %v1528
        %v1530 = vmul.f32 %v1529, 0.6931472
        %v1531 = vmul.f32 -0.5, %v1259
        %v1532 = vadd.f32 %v1531, 1.0
        %v1533 = vmul.f32 %v1532, %v1259
        %v1534 = vand.u32 2147483647, %v1259
        %vm1535 = vcmp.lt.f32.partialorder %v1534, 0.0004427343
        %v1536 = vsel %vm1535, %v1533, %v1530
        %v1537 = vadd.f32 %v1261, 1.0
        %v1538 = vlog2.pop %v1537
        %v1539 = vmul.f32 %v1538, 0.6931472
        %v1540 = vmul.f32 -0.5, %v1261
        %v1541 = vadd.f32 %v1540, 1.0
        %v1542 = vmul.f32 %v1541, %v1261
        %v1543 = vand.u32 2147483647, %v1261
        %vm1544 = vcmp.lt.f32.partialorder %v1543, 0.0004427343
        %v1545 = vsel %vm1544, %v1542, %v1539
        %v1546 = vadd.f32 %v1263, 1.0
        %v1547 = vlog2.pop %v1546
        %v1548 = vmul.f32 %v1547, 0.6931472
        %v1549 = vmul.f32 -0.5, %v1263
        %v1550 = vadd.f32 %v1549, 1.0
        %v1551 = vmul.f32 %v1550, %v1263
        %v1552 = vand.u32 2147483647, %v1263
        %vm1553 = vcmp.lt.f32.partialorder %v1552, 0.0004427343
        %v1554 = vsel %vm1553, %v1551, %v1548
        %v1555 = vadd.f32 %v1265, 1.0
        %v1556 = vlog2.pop %v1555
        %v1557 = vmul.f32 %v1556, 0.6931472
        %v1558 = vmul.f32 -0.5, %v1265
        %v1559 = vadd.f32 %v1558, 1.0
        %v1560 = vmul.f32 %v1559, %v1265
        %v1561 = vand.u32 2147483647, %v1265
        %vm1562 = vcmp.lt.f32.partialorder %v1561, 0.0004427343
        %v1563 = vsel %vm1562, %v1560, %v1557
        %v1564 = vadd.f32 %v1267, 1.0
        %v1565 = vlog2.pop %v1564
        %v1566 = vmul.f32 %v1565, 0.6931472
        %v1567 = vmul.f32 -0.5, %v1267
        %v1568 = vadd.f32 %v1567, 1.0
        %v1569 = vmul.f32 %v1568, %v1267
        %v1570 = vand.u32 2147483647, %v1267
        %vm1571 = vcmp.lt.f32.partialorder %v1570, 0.0004427343
        %v1572 = vsel %vm1571, %v1569, %v1566
        %v1573 = vadd.f32 %v1269, 1.0
        %v1574 = vlog2.pop %v1573
        %v1575 = vmul.f32 %v1574, 0.6931472
        %v1576 = vmul.f32 -0.5, %v1269
        %v1577 = vadd.f32 %v1576, 1.0
        %v1578 = vmul.f32 %v1577, %v1269
        %v1579 = vand.u32 2147483647, %v1269
        %vm1580 = vcmp.lt.f32.partialorder %v1579, 0.0004427343
        %v1581 = vsel %vm1580, %v1578, %v1575
        %v1582 = vadd.f32 %v1271, 1.0
        %v1583 = vlog2.pop %v1582
        %v1584 = vmul.f32 %v1583, 0.6931472
        %v1585 = vmul.f32 -0.5, %v1271
        %v1586 = vadd.f32 %v1585, 1.0
        %v1587 = vmul.f32 %v1586, %v1271
        %v1588 = vand.u32 2147483647, %v1271
        %vm1589 = vcmp.lt.f32.partialorder %v1588, 0.0004427343
        %v1590 = vsel %vm1589, %v1587, %v1584
        %v1591 = vadd.f32 %v1273, 1.0
        %v1592 = vlog2.pop %v1591
        %v1593 = vmul.f32 %v1592, 0.6931472
        %v1594 = vmul.f32 -0.5, %v1273
        %v1595 = vadd.f32 %v1594, 1.0
        %v1596 = vmul.f32 %v1595, %v1273
        %v1597 = vand.u32 2147483647, %v1273
        %vm1598 = vcmp.lt.f32.partialorder %v1597, 0.0004427343
        %v1599 = vsel %vm1598, %v1596, %v1593
        %v1600 = vadd.f32 %v1275, 1.0
        %v1601 = vlog2.pop %v1600
        %v1602 = vmul.f32 %v1601, 0.6931472
        %v1603 = vmul.f32 -0.5, %v1275
        %v1604 = vadd.f32 %v1603, 1.0
        %v1605 = vmul.f32 %v1604, %v1275
        %v1606 = vand.u32 2147483647, %v1275
        %vm1607 = vcmp.lt.f32.partialorder %v1606, 0.0004427343
        %v1608 = vsel %vm1607, %v1605, %v1602
        %v1609 = vadd.f32 %v1277, 1.0
        %v1610 = vlog2.pop %v1609
        %v1611 = vmul.f32 %v1610, 0.6931472
        %v1612 = vmul.f32 -0.5, %v1277
        %v1613 = vadd.f32 %v1612, 1.0
        %v1614 = vmul.f32 %v1613, %v1277
        %v1615 = vand.u32 2147483647, %v1277
        %vm1616 = vcmp.lt.f32.partialorder %v1615, 0.0004427343
        %v1617 = vsel %vm1616, %v1614, %v1611
        %v1618 = vadd.f32 %v1279, 1.0
        %v1619 = vlog2.pop %v1618
        %v1620 = vmul.f32 %v1619, 0.6931472
        %v1621 = vmul.f32 -0.5, %v1279
        %v1622 = vadd.f32 %v1621, 1.0
        %v1623 = vmul.f32 %v1622, %v1279
        %v1624 = vand.u32 2147483647, %v1279
        %vm1625 = vcmp.lt.f32.partialorder %v1624, 0.0004427343
        %v1626 = vsel %vm1625, %v1623, %v1620
        %v1627 = vadd.f32 %v1281, 1.0
        %v1628 = vlog2.pop %v1627
        %v1629 = vmul.f32 %v1628, 0.6931472
        %v1630 = vmul.f32 -0.5, %v1281
        %v1631 = vadd.f32 %v1630, 1.0
        %v1632 = vmul.f32 %v1631, %v1281
        %v1633 = vand.u32 2147483647, %v1281
        %vm1634 = vcmp.lt.f32.partialorder %v1633, 0.0004427343
        %v1635 = vsel %vm1634, %v1632, %v1629
        %v1636 = vadd.f32 %v1283, 1.0
        %v1637 = vlog2.pop %v1636
        %v1638 = vmul.f32 %v1637, 0.6931472
        %v1639 = vmul.f32 -0.5, %v1283
        %v1640 = vadd.f32 %v1639, 1.0
        %v1641 = vmul.f32 %v1640, %v1283
        %v1642 = vand.u32 2147483647, %v1283
        %vm1643 = vcmp.lt.f32.partialorder %v1642, 0.0004427343
        %v1644 = vsel %vm1643, %v1641, %v1638
        %v1645 = vadd.f32 %v1285, 1.0
        %v1646 = vlog2.pop %v1645
        %v1647 = vmul.f32 %v1646, 0.6931472
        %v1648 = vmul.f32 -0.5, %v1285
        %v1649 = vadd.f32 %v1648, 1.0
        %v1650 = vmul.f32 %v1649, %v1285
        %v1651 = vand.u32 2147483647, %v1285
        %vm1652 = vcmp.lt.f32.partialorder %v1651, 0.0004427343
        %v1653 = vsel %vm1652, %v1650, %v1647
        %v1654 = vadd.f32 %v1287, 1.0
        %v1655 = vlog2.pop %v1654
        %v1656 = vmul.f32 %v1655, 0.6931472
        %v1657 = vmul.f32 -0.5, %v1287
        %v1658 = vadd.f32 %v1657, 1.0
        %v1659 = vmul.f32 %v1658, %v1287
        %v1660 = vand.u32 2147483647, %v1287
        %vm1661 = vcmp.lt.f32.partialorder %v1660, 0.0004427343
        %v1662 = vsel %vm1661, %v1659, %v1656
        %v1663 = vadd.f32 %v1289, 1.0
        %v1664 = vlog2.pop %v1663
        %v1665 = vmul.f32 %v1664, 0.6931472
        %v1666 = vmul.f32 -0.5, %v1289
        %v1667 = vadd.f32 %v1666, 1.0
        %v1668 = vmul.f32 %v1667, %v1289
        %v1669 = vand.u32 2147483647, %v1289
        %vm1670 = vcmp.lt.f32.partialorder %v1669, 0.0004427343
        %v1671 = vsel %vm1670, %v1668, %v1665
        %v1672 = vadd.f32 %v1291, 1.0
        %v1673 = vlog2.pop %v1672
        %v1674 = vmul.f32 %v1673, 0.6931472
        %v1675 = vmul.f32 -0.5, %v1291
        %v1676 = vadd.f32 %v1675, 1.0
        %v1677 = vmul.f32 %v1676, %v1291
        %v1678 = vand.u32 2147483647, %v1291
        %vm1679 = vcmp.lt.f32.partialorder %v1678, 0.0004427343
        %v1680 = vsel %vm1679, %v1677, %v1674
        %v1681 = vadd.f32 %v1293, 1.0
        %v1682 = vlog2.pop %v1681
        %v1683 = vmul.f32 %v1682, 0.6931472
        %v1684 = vmul.f32 -0.5, %v1293
        %v1685 = vadd.f32 %v1684, 1.0
        %v1686 = vmul.f32 %v1685, %v1293
        %v1687 = vand.u32 2147483647, %v1293
        %vm1688 = vcmp.lt.f32.partialorder %v1687, 0.0004427343
        %v1689 = vsel %vm1688, %v1686, %v1683
        %v1690 = vadd.f32 %v1295, 1.0
        %v1691 = vlog2.pop %v1690
        %v1692 = vmul.f32 %v1691, 0.6931472
        %v1693 = vmul.f32 -0.5, %v1295
        %v1694 = vadd.f32 %v1693, 1.0
        %v1695 = vmul.f32 %v1694, %v1295
        %v1696 = vand.u32 2147483647, %v1295
        %vm1697 = vcmp.lt.f32.partialorder %v1696, 0.0004427343
        %v1698 = vsel %vm1697, %v1695, %v1692
        %v1699 = vadd.f32 %v1297, 1.0
        %v1700 = vlog2.pop %v1699
        %v1701 = vmul.f32 %v1700, 0.6931472
        %v1702 = vmul.f32 -0.5, %v1297
        %v1703 = vadd.f32 %v1702, 1.0
        %v1704 = vmul.f32 %v1703, %v1297
        %v1705 = vand.u32 2147483647, %v1297
        %vm1706 = vcmp.lt.f32.partialorder %v1705, 0.0004427343
        %v1707 = vsel %vm1706, %v1704, %v1701
        %v1708 = vadd.f32 %v1299, 1.0
        %v1709 = vlog2.pop %v1708
        %v1710 = vmul.f32 %v1709, 0.6931472
        %v1711 = vmul.f32 -0.5, %v1299
        %v1712 = vadd.f32 %v1711, 1.0
        %v1713 = vmul.f32 %v1712, %v1299
        %v1714 = vand.u32 2147483647, %v1299
        %vm1715 = vcmp.lt.f32.partialorder %v1714, 0.0004427343
        %v1716 = vsel %vm1715, %v1713, %v1710
        %v1717 = vadd.f32 %v1301, 1.0
        %v1718 = vlog2.pop %v1717
        %v1719 = vmul.f32 %v1718, 0.6931472
        %v1720 = vmul.f32 -0.5, %v1301
        %v1721 = vadd.f32 %v1720, 1.0
        %v1722 = vmul.f32 %v1721, %v1301
        %v1723 = vand.u32 2147483647, %v1301
        %vm1724 = vcmp.lt.f32.partialorder %v1723, 0.0004427343
        %v1725 = vsel %vm1724, %v1722, %v1719
        %v1726 = vadd.f32 %v1303, 1.0
        %v1727 = vlog2.pop %v1726
        %v1728 = vmul.f32 %v1727, 0.6931472
        %v1729 = vmul.f32 -0.5, %v1303
        %v1730 = vadd.f32 %v1729, 1.0
        %v1731 = vmul.f32 %v1730, %v1303
        %v1732 = vand.u32 2147483647, %v1303
        %vm1733 = vcmp.lt.f32.partialorder %v1732, 0.0004427343
        %v1734 = vsel %vm1733, %v1731, %v1728
        %v1735 = vadd.f32 %v1305, 1.0
        %v1736 = vlog2.pop %v1735
        %v1737 = vmul.f32 %v1736, 0.6931472
        %v1738 = vmul.f32 -0.5, %v1305
        %v1739 = vadd.f32 %v1738, 1.0
        %v1740 = vmul.f32 %v1739, %v1305
        %v1741 = vand.u32 2147483647, %v1305
        %vm1742 = vcmp.lt.f32.partialorder %v1741, 0.0004427343
        %v1743 = vsel %vm1742, %v1740, %v1737
        %v1744 = vadd.f32 %v1307, 1.0
        %v1745 = vlog2.pop %v1744
        %v1746 = vmul.f32 %v1745, 0.6931472
        %v1747 = vmul.f32 -0.5, %v1307
        %v1748 = vadd.f32 %v1747, 1.0
        %v1749 = vmul.f32 %v1748, %v1307
        %v1750 = vand.u32 2147483647, %v1307
        %vm1751 = vcmp.lt.f32.partialorder %v1750, 0.0004427343
        %v1752 = vsel %vm1751, %v1749, %v1746
        %v1753 = vadd.f32 %v1309, 1.0
        %v1754 = vlog2.pop %v1753
        %v1755 = vmul.f32 %v1754, 0.6931472
        %v1756 = vmul.f32 -0.5, %v1309
        %v1757 = vadd.f32 %v1756, 1.0
        %v1758 = vmul.f32 %v1757, %v1309
        %v1759 = vand.u32 2147483647, %v1309
        %vm1760 = vcmp.lt.f32.partialorder %v1759, 0.0004427343
        %v1761 = vsel %vm1760, %v1758, %v1755
        %v1762 = vadd.f32 %v1311, 1.0
        %v1763 = vlog2.pop %v1762
        %v1764 = vmul.f32 %v1763, 0.6931472
        %v1765 = vmul.f32 -0.5, %v1311
        %v1766 = vadd.f32 %v1765, 1.0
        %v1767 = vmul.f32 %v1766, %v1311
        %v1768 = vand.u32 2147483647, %v1311
        %vm1769 = vcmp.lt.f32.partialorder %v1768, 0.0004427343
        %v1770 = vsel %vm1769, %v1767, %v1764
        %v1771 = vadd.f32 %v1313, 1.0
        %v1772 = vlog2.pop %v1771
        %v1773 = vmul.f32 %v1772, 0.6931472
        %v1774 = vmul.f32 -0.5, %v1313
        %v1775 = vadd.f32 %v1774, 1.0
        %v1776 = vmul.f32 %v1775, %v1313
        %v1777 = vand.u32 2147483647, %v1313
        %vm1778 = vcmp.lt.f32.partialorder %v1777, 0.0004427343
        %v1779 = vsel %vm1778, %v1776, %v1773
        %v1780 = vadd.f32 %v1315, 1.0
        %v1781 = vlog2.pop %v1780
        %v1782 = vmul.f32 %v1781, 0.6931472
        %v1783 = vmul.f32 -0.5, %v1315
        %v1784 = vadd.f32 %v1783, 1.0
        %v1785 = vmul.f32 %v1784, %v1315
        %v1786 = vand.u32 2147483647, %v1315
        %vm1787 = vcmp.lt.f32.partialorder %v1786, 0.0004427343
        %v1788 = vsel %vm1787, %v1785, %v1782
        %v1789 = vadd.f32 %v1317, 1.0
        %v1790 = vlog2.pop %v1789
        %v1791 = vmul.f32 %v1790, 0.6931472
        %v1792 = vmul.f32 -0.5, %v1317
        %v1793 = vadd.f32 %v1792, 1.0
        %v1794 = vmul.f32 %v1793, %v1317
        %v1795 = vand.u32 2147483647, %v1317
        %vm1796 = vcmp.lt.f32.partialorder %v1795, 0.0004427343
        %v1797 = vsel %vm1796, %v1794, %v1791
        %v1798 = vadd.f32 %v1319, 1.0
        %v1799 = vlog2.pop %v1798
        %v1800 = vmul.f32 %v1799, 0.6931472
        %v1801 = vmul.f32 -0.5, %v1319
        %v1802 = vadd.f32 %v1801, 1.0
        %v1803 = vmul.f32 %v1802, %v1319
        %v1804 = vand.u32 2147483647, %v1319
        %vm1805 = vcmp.lt.f32.partialorder %v1804, 0.0004427343
        %v1806 = vsel %vm1805, %v1803, %v1800
        %v1807 = vadd.f32 %v1321, 1.0
        %v1808 = vlog2.pop %v1807
        %v1809 = vmul.f32 %v1808, 0.6931472
        %v1810 = vmul.f32 -0.5, %v1321
        %v1811 = vadd.f32 %v1810, 1.0
        %v1812 = vmul.f32 %v1811, %v1321
        %v1813 = vand.u32 2147483647, %v1321
        %vm1814 = vcmp.lt.f32.partialorder %v1813, 0.0004427343
        %v1815 = vsel %vm1814, %v1812, %v1809
        %v1816 = vadd.f32 %v1323, 1.0
        %v1817 = vlog2.pop %v1816
        %v1818 = vmul.f32 %v1817, 0.6931472
        %v1819 = vmul.f32 -0.5, %v1323
        %v1820 = vadd.f32 %v1819, 1.0
        %v1821 = vmul.f32 %v1820, %v1323
        %v1822 = vand.u32 2147483647, %v1323
        %vm1823 = vcmp.lt.f32.partialorder %v1822, 0.0004427343
        %v1824 = vsel %vm1823, %v1821, %v1818
        %v1825 = vadd.f32 %v1325, 1.0
        %v1826 = vlog2.pop %v1825
        %v1827 = vmul.f32 %v1826, 0.6931472
        %v1828 = vmul.f32 -0.5, %v1325
        %v1829 = vadd.f32 %v1828, 1.0
        %v1830 = vmul.f32 %v1829, %v1325
        %v1831 = vand.u32 2147483647, %v1325
        %vm1832 = vcmp.lt.f32.partialorder %v1831, 0.0004427343
        %v1833 = vsel %vm1832, %v1830, %v1827
        %v1834 = vadd.f32 %v1327, 1.0
        %v1835 = vlog2.pop %v1834
        %v1836 = vmul.f32 %v1835, 0.6931472
        %v1837 = vmul.f32 -0.5, %v1327
        %v1838 = vadd.f32 %v1837, 1.0
        %v1839 = vmul.f32 %v1838, %v1327
        %v1840 = vand.u32 2147483647, %v1327
        %vm1841 = vcmp.lt.f32.partialorder %v1840, 0.0004427343
        %v1842 = vsel %vm1841, %v1839, %v1836
        %v1843 = vadd.f32 %v1329, 1.0
        %v1844 = vlog2.pop %v1843
        %v1845 = vmul.f32 %v1844, 0.6931472
        %v1846 = vmul.f32 -0.5, %v1329
        %v1847 = vadd.f32 %v1846, 1.0
        %v1848 = vmul.f32 %v1847, %v1329
        %v1849 = vand.u32 2147483647, %v1329
        %vm1850 = vcmp.lt.f32.partialorder %v1849, 0.0004427343
        %v1851 = vsel %vm1850, %v1848, %v1845
        %v1852 = vadd.f32 %v1331, 1.0
        %v1853 = vlog2.pop %v1852
        %v1854 = vmul.f32 %v1853, 0.6931472
        %v1855 = vmul.f32 -0.5, %v1331
        %v1856 = vadd.f32 %v1855, 1.0
        %v1857 = vmul.f32 %v1856, %v1331
        %v1858 = vand.u32 2147483647, %v1331
        %vm1859 = vcmp.lt.f32.partialorder %v1858, 0.0004427343
        %v1860 = vsel %vm1859, %v1857, %v1854
        %v1861 = vadd.f32 %v1333, 1.0
        %v1862 = vlog2.pop %v1861
        %v1863 = vmul.f32 %v1862, 0.6931472
        %v1864 = vmul.f32 -0.5, %v1333
        %v1865 = vadd.f32 %v1864, 1.0
        %v1866 = vmul.f32 %v1865, %v1333
        %v1867 = vand.u32 2147483647, %v1333
        %vm1868 = vcmp.lt.f32.partialorder %v1867, 0.0004427343
        %v1869 = vsel %vm1868, %v1866, %v1863
        %v1870 = vadd.f32 %v1335, 1.0
        %v1871 = vlog2.pop %v1870
        %v1872 = vmul.f32 %v1871, 0.6931472
        %v1873 = vmul.f32 -0.5, %v1335
        %v1874 = vadd.f32 %v1873, 1.0
        %v1875 = vmul.f32 %v1874, %v1335
        %v1876 = vand.u32 2147483647, %v1335
        %vm1877 = vcmp.lt.f32.partialorder %v1876, 0.0004427343
        %v1878 = vsel %vm1877, %v1875, %v1872
        %v1879 = vadd.f32 %v1337, 1.0
        %v1880 = vlog2.pop %v1879
        %v1881 = vmul.f32 %v1880, 0.6931472
        %v1882 = vmul.f32 -0.5, %v1337
        %v1883 = vadd.f32 %v1882, 1.0
        %v1884 = vmul.f32 %v1883, %v1337
        %v1885 = vand.u32 2147483647, %v1337
        %vm1886 = vcmp.lt.f32.partialorder %v1885, 0.0004427343
        %v1887 = vsel %vm1886, %v1884, %v1881
        %v1888 = vadd.f32 %v1339, 1.0
        %v1889 = vlog2.pop %v1888
        %v1890 = vmul.f32 %v1889, 0.6931472
        %v1891 = vmul.f32 -0.5, %v1339
        %v1892 = vadd.f32 %v1891, 1.0
        %v1893 = vmul.f32 %v1892, %v1339
        %v1894 = vand.u32 2147483647, %v1339
        %vm1895 = vcmp.lt.f32.partialorder %v1894, 0.0004427343
        %v1896 = vsel %vm1895, %v1893, %v1890
        %v1897 = vadd.f32 %v1341, 1.0
        %v1898 = vlog2.pop %v1897
        %v1899 = vmul.f32 %v1898, 0.6931472
        %v1900 = vmul.f32 -0.5, %v1341
        %v1901 = vadd.f32 %v1900, 1.0
        %v1902 = vmul.f32 %v1901, %v1341
        %v1903 = vand.u32 2147483647, %v1341
        %vm1904 = vcmp.lt.f32.partialorder %v1903, 0.0004427343
        %v1905 = vsel %vm1904, %v1902, %v1899
        %v1906 = vadd.f32 %v1343, 1.0
        %v1907 = vlog2.pop %v1906
        %v1908 = vmul.f32 %v1907, 0.6931472
        %v1909 = vmul.f32 -0.5, %v1343
        %v1910 = vadd.f32 %v1909, 1.0
        %v1911 = vmul.f32 %v1910, %v1343
        %v1912 = vand.u32 2147483647, %v1343
        %vm1913 = vcmp.lt.f32.partialorder %v1912, 0.0004427343
        %v1914 = vsel %vm1913, %v1911, %v1908
        %v1915 = vadd.f32 %v1345, 1.0
        %v1916 = vlog2.pop %v1915
        %v1917 = vmul.f32 %v1916, 0.6931472
        %v1918 = vmul.f32 -0.5, %v1345
        %v1919 = vadd.f32 %v1918, 1.0
        %v1920 = vmul.f32 %v1919, %v1345
        %v1921 = vand.u32 2147483647, %v1345
        %vm1922 = vcmp.lt.f32.partialorder %v1921, 0.0004427343
        %v1923 = vsel %vm1922, %v1920, %v1917
        %v1924 = vadd.f32 %v1347, 1.0
        %v1925 = vlog2.pop %v1924
        %v1926 = vmul.f32 %v1925, 0.6931472
        %v1927 = vmul.f32 -0.5, %v1347
        %v1928 = vadd.f32 %v1927, 1.0
        %v1929 = vmul.f32 %v1928, %v1347
        %v1930 = vand.u32 2147483647, %v1347
        %vm1931 = vcmp.lt.f32.partialorder %v1930, 0.0004427343
        %v1932 = vsel %vm1931, %v1929, %v1926
        %v1933 = vadd.f32 %v1349, 1.0
        %v1934 = vlog2.pop %v1933
        %v1935 = vmul.f32 %v1934, 0.6931472
        %v1936 = vmul.f32 -0.5, %v1349
        %v1937 = vadd.f32 %v1936, 1.0
        %v1938 = vmul.f32 %v1937, %v1349
        %v1939 = vand.u32 2147483647, %v1349
        %vm1940 = vcmp.lt.f32.partialorder %v1939, 0.0004427343
        %v1941 = vsel %vm1940, %v1938, %v1935
        %v1942 = vadd.f32 %v1351, 1.0
        %v1943 = vlog2.pop %v1942
        %v1944 = vmul.f32 %v1943, 0.6931472
        %v1945 = vmul.f32 -0.5, %v1351
        %v1946 = vadd.f32 %v1945, 1.0
        %v1947 = vmul.f32 %v1946, %v1351
        %v1948 = vand.u32 2147483647, %v1351
        %vm1949 = vcmp.lt.f32.partialorder %v1948, 0.0004427343
        %v1950 = vsel %vm1949, %v1947, %v1944
        %v1951 = vadd.f32 %v1353, 1.0
        %v1952 = vlog2.pop %v1951
        %v1953 = vmul.f32 %v1952, 0.6931472
        %v1954 = vmul.f32 -0.5, %v1353
        %v1955 = vadd.f32 %v1954, 1.0
        %v1956 = vmul.f32 %v1955, %v1353
        %v1957 = vand.u32 2147483647, %v1353
        %vm1958 = vcmp.lt.f32.partialorder %v1957, 0.0004427343
        %v1959 = vsel %vm1958, %v1956, %v1953
        %v1960 = vadd.f32 %v1355, 1.0
        %v1961 = vlog2.pop %v1960
        %v1962 = vmul.f32 %v1961, 0.6931472
        %v1963 = vmul.f32 -0.5, %v1355
        %v1964 = vadd.f32 %v1963, 1.0
        %v1965 = vmul.f32 %v1964, %v1355
        %v1966 = vand.u32 2147483647, %v1355
        %vm1967 = vcmp.lt.f32.partialorder %v1966, 0.0004427343
        %v1968 = vsel %vm1967, %v1965, %v1962
        %v1969 = vadd.f32 %v1357, 1.0
        %v1970 = vlog2.pop %v1969
        %v1971 = vmul.f32 %v1970, 0.6931472
        %v1972 = vmul.f32 -0.5, %v1357
        %v1973 = vadd.f32 %v1972, 1.0
        %v1974 = vmul.f32 %v1973, %v1357
        %v1975 = vand.u32 2147483647, %v1357
        %vm1976 = vcmp.lt.f32.partialorder %v1975, 0.0004427343
        %v1977 = vsel %vm1976, %v1974, %v1971
        %v1978 = vadd.f32 %v1359, 1.0
        %v1979 = vlog2.pop %v1978
        %v1980 = vmul.f32 %v1979, 0.6931472
        %v1981 = vmul.f32 -0.5, %v1359
        %v1982 = vadd.f32 %v1981, 1.0
        %v1983 = vmul.f32 %v1982, %v1359
        %v1984 = vand.u32 2147483647, %v1359
        %vm1985 = vcmp.lt.f32.partialorder %v1984, 0.0004427343
        %v1986 = vsel %vm1985, %v1983, %v1980
        %v1987 = vadd.f32 %v1361, 1.0
        %v1988 = vlog2.pop %v1987
        %v1989 = vmul.f32 %v1988, 0.6931472
        %v1990 = vmul.f32 -0.5, %v1361
        %v1991 = vadd.f32 %v1990, 1.0
        %v1992 = vmul.f32 %v1991, %v1361
        %v1993 = vand.u32 2147483647, %v1361
        %vm1994 = vcmp.lt.f32.partialorder %v1993, 0.0004427343
        %v1995 = vsel %vm1994, %v1992, %v1989
        %v1996 = vadd.f32 %v1363, 1.0
        %v1997 = vlog2.pop %v1996
        %v1998 = vmul.f32 %v1997, 0.6931472
        %v1999 = vmul.f32 -0.5, %v1363
        %v2000 = vadd.f32 %v1999, 1.0
        %v2001 = vmul.f32 %v2000, %v1363
        %v2002 = vand.u32 2147483647, %v1363
        %vm2003 = vcmp.lt.f32.partialorder %v2002, 0.0004427343
        %v2004 = vsel %vm2003, %v2001, %v1998
        %v2005 = vadd.f32 %v1365, 1.0
        %v2006 = vlog2.pop %v2005
        %v2007 = vmul.f32 %v2006, 0.6931472
        %v2008 = vmul.f32 -0.5, %v1365
        %v2009 = vadd.f32 %v2008, 1.0
        %v2010 = vmul.f32 %v2009, %v1365
        %v2011 = vand.u32 2147483647, %v1365
        %vm2012 = vcmp.lt.f32.partialorder %v2011, 0.0004427343
        %v2013 = vsel %vm2012, %v2010, %v2007
        %v2014 = vadd.f32 %v1367, 1.0
        %v2015 = vlog2.pop %v2014
        %v2016 = vmul.f32 %v2015, 0.6931472
        %v2017 = vmul.f32 -0.5, %v1367
        %v2018 = vadd.f32 %v2017, 1.0
        %v2019 = vmul.f32 %v2018, %v1367
        %v2020 = vand.u32 2147483647, %v1367
        %vm2021 = vcmp.lt.f32.partialorder %v2020, 0.0004427343
        %v2022 = vsel %vm2021, %v2019, %v2016
        %v2023 = vadd.f32 %v1369, 1.0
        %v2024 = vlog2.pop %v2023
        %v2025 = vmul.f32 %v2024, 0.6931472
        %v2026 = vmul.f32 -0.5, %v1369
        %v2027 = vadd.f32 %v2026, 1.0
        %v2028 = vmul.f32 %v2027, %v1369
        %v2029 = vand.u32 2147483647, %v1369
        %vm2030 = vcmp.lt.f32.partialorder %v2029, 0.0004427343
        %v2031 = vsel %vm2030, %v2028, %v2025
        %v2032 = vadd.f32 %v1371, 1.0
        %v2033 = vlog2.pop %v2032
        %v2034 = vmul.f32 %v2033, 0.6931472
        %v2035 = vmul.f32 -0.5, %v1371
        %v2036 = vadd.f32 %v2035, 1.0
        %v2037 = vmul.f32 %v2036, %v1371
        %v2038 = vand.u32 2147483647, %v1371
        %vm2039 = vcmp.lt.f32.partialorder %v2038, 0.0004427343
        %v2040 = vsel %vm2039, %v2037, %v2034
        %v2041 = vadd.f32 %v1373, 1.0
        %v2042 = vlog2.pop %v2041
        %v2043 = vmul.f32 %v2042, 0.6931472
        %v2044 = vmul.f32 -0.5, %v1373
        %v2045 = vadd.f32 %v2044, 1.0
        %v2046 = vmul.f32 %v2045, %v1373
        %v2047 = vand.u32 2147483647, %v1373
        %vm2048 = vcmp.lt.f32.partialorder %v2047, 0.0004427343
        %v2049 = vsel %vm2048, %v2046, %v2043
        %v2050 = vadd.f32 %v1375, 1.0
        %v2051 = vlog2.pop %v2050
        %v2052 = vmul.f32 %v2051, 0.6931472
        %v2053 = vmul.f32 -0.5, %v1375
        %v2054 = vadd.f32 %v2053, 1.0
        %v2055 = vmul.f32 %v2054, %v1375
        %v2056 = vand.u32 2147483647, %v1375
        %vm2057 = vcmp.lt.f32.partialorder %v2056, 0.0004427343
        %v2058 = vsel %vm2057, %v2055, %v2052
        %v2059 = vadd.f32 %v1377, 1.0
        %v2060 = vlog2.pop %v2059
        %v2061 = vmul.f32 %v2060, 0.6931472
        %v2062 = vmul.f32 -0.5, %v1377
        %v2063 = vadd.f32 %v2062, 1.0
        %v2064 = vmul.f32 %v2063, %v1377
        %v2065 = vand.u32 2147483647, %v1377
        %vm2066 = vcmp.lt.f32.partialorder %v2065, 0.0004427343
        %v2067 = vsel %vm2066, %v2064, %v2061
        %v2068 = vadd.f32 %v1379, 1.0
        %v2069 = vlog2.pop %v2068
        %v2070 = vmul.f32 %v2069, 0.6931472
        %v2071 = vmul.f32 -0.5, %v1379
        %v2072 = vadd.f32 %v2071, 1.0
        %v2073 = vmul.f32 %v2072, %v1379
        %v2074 = vand.u32 2147483647, %v1379
        %vm2075 = vcmp.lt.f32.partialorder %v2074, 0.0004427343
        %v2076 = vsel %vm2075, %v2073, %v2070
        %v2077 = vadd.f32 %v1381, 1.0
        %v2078 = vlog2.pop %v2077
        %v2079 = vmul.f32 %v2078, 0.6931472
        %v2080 = vmul.f32 -0.5, %v1381
        %v2081 = vadd.f32 %v2080, 1.0
        %v2082 = vmul.f32 %v2081, %v1381
        %v2083 = vand.u32 2147483647, %v1381
        %vm2084 = vcmp.lt.f32.partialorder %v2083, 0.0004427343
        %v2085 = vsel %vm2084, %v2082, %v2079
        %v2086 = vadd.f32 %v1383, 1.0
        %v2087 = vlog2.pop %v2086
        %v2088 = vmul.f32 %v2087, 0.6931472
        %v2089 = vmul.f32 -0.5, %v1383
        %v2090 = vadd.f32 %v2089, 1.0
        %v2091 = vmul.f32 %v2090, %v1383
        %v2092 = vand.u32 2147483647, %v1383
        %vm2093 = vcmp.lt.f32.partialorder %v2092, 0.0004427343
        %v2094 = vsel %vm2093, %v2091, %v2088
        %v2095 = vadd.f32 %v1385, 1.0
        %v2096 = vlog2.pop %v2095
        %v2097 = vmul.f32 %v2096, 0.6931472
        %v2098 = vmul.f32 -0.5, %v1385
        %v2099 = vadd.f32 %v2098, 1.0
        %v2100 = vmul.f32 %v2099, %v1385
        %v2101 = vand.u32 2147483647, %v1385
        %vm2102 = vcmp.lt.f32.partialorder %v2101, 0.0004427343
        %v2103 = vsel %vm2102, %v2100, %v2097
        %v2104 = vadd.f32 %v1387, 1.0
        %v2105 = vlog2.pop %v2104
        %v2106 = vmul.f32 %v2105, 0.6931472
        %v2107 = vmul.f32 -0.5, %v1387
        %v2108 = vadd.f32 %v2107, 1.0
        %v2109 = vmul.f32 %v2108, %v1387
        %v2110 = vand.u32 2147483647, %v1387
        %vm2111 = vcmp.lt.f32.partialorder %v2110, 0.0004427343
        %v2112 = vsel %vm2111, %v2109, %v2106
        %v2113 = vadd.f32 %v1389, 1.0
        %v2114 = vlog2.pop %v2113
        %v2115 = vmul.f32 %v2114, 0.6931472
        %v2116 = vmul.f32 -0.5, %v1389
        %v2117 = vadd.f32 %v2116, 1.0
        %v2118 = vmul.f32 %v2117, %v1389
        %v2119 = vand.u32 2147483647, %v1389
        %vm2120 = vcmp.lt.f32.partialorder %v2119, 0.0004427343
        %v2121 = vsel %vm2120, %v2118, %v2115
        %v2122 = vadd.f32 %v1391, 1.0
        %v2123 = vlog2.pop %v2122
        %v2124 = vmul.f32 %v2123, 0.6931472
        %v2125 = vmul.f32 -0.5, %v1391
        %v2126 = vadd.f32 %v2125, 1.0
        %v2127 = vmul.f32 %v2126, %v1391
        %v2128 = vand.u32 2147483647, %v1391
        %vm2129 = vcmp.lt.f32.partialorder %v2128, 0.0004427343
        %v2130 = vsel %vm2129, %v2127, %v2124
        %v2131 = vadd.f32 %v1393, 1.0
        %v2132 = vlog2.pop %v2131
        %v2133 = vmul.f32 %v2132, 0.6931472
        %v2134 = vmul.f32 -0.5, %v1393
        %v2135 = vadd.f32 %v2134, 1.0
        %v2136 = vmul.f32 %v2135, %v1393
        %v2137 = vand.u32 2147483647, %v1393
        %vm2138 = vcmp.lt.f32.partialorder %v2137, 0.0004427343
        %v2139 = vsel %vm2138, %v2136, %v2133
        %v2140 = vadd.f32 %v1395, 1.0
        %v2141 = vlog2.pop %v2140
        %v2142 = vmul.f32 %v2141, 0.6931472
        %v2143 = vmul.f32 -0.5, %v1395
        %v2144 = vadd.f32 %v2143, 1.0
        %v2145 = vmul.f32 %v2144, %v1395
        %v2146 = vand.u32 2147483647, %v1395
        %vm2147 = vcmp.lt.f32.partialorder %v2146, 0.0004427343
        %v2148 = vsel %vm2147, %v2145, %v2142
        %v2149 = vadd.f32 %v1397, 1.0
        %v2150 = vlog2.pop %v2149
        %v2151 = vmul.f32 %v2150, 0.6931472
        %v2152 = vmul.f32 -0.5, %v1397
        %v2153 = vadd.f32 %v2152, 1.0
        %v2154 = vmul.f32 %v2153, %v1397
        %v2155 = vand.u32 2147483647, %v1397
        %vm2156 = vcmp.lt.f32.partialorder %v2155, 0.0004427343
        %v2157 = vsel %vm2156, %v2154, %v2151
        %v2158 = vadd.f32 %v1399, 1.0
        %v2159 = vlog2.pop %v2158
        %v2160 = vmul.f32 %v2159, 0.6931472
        %v2161 = vmul.f32 -0.5, %v1399
        %v2162 = vadd.f32 %v2161, 1.0
        %v2163 = vmul.f32 %v2162, %v1399
        %v2164 = vand.u32 2147483647, %v1399
        %vm2165 = vcmp.lt.f32.partialorder %v2164, 0.0004427343
        %v2166 = vsel %vm2165, %v2163, %v2160
        %v2167 = vadd.f32 %v1401, 1.0
        %v2168 = vlog2.pop %v2167
        %v2169 = vmul.f32 %v2168, 0.6931472
        %v2170 = vmul.f32 -0.5, %v1401
        %v2171 = vadd.f32 %v2170, 1.0
        %v2172 = vmul.f32 %v2171, %v1401
        %v2173 = vand.u32 2147483647, %v1401
        %vm2174 = vcmp.lt.f32.partialorder %v2173, 0.0004427343
        %v2175 = vsel %vm2174, %v2172, %v2169
        %v2176 = vadd.f32 %v1403, 1.0
        %v2177 = vlog2.pop %v2176
        %v2178 = vmul.f32 %v2177, 0.6931472
        %v2179 = vmul.f32 -0.5, %v1403
        %v2180 = vadd.f32 %v2179, 1.0
        %v2181 = vmul.f32 %v2180, %v1403
        %v2182 = vand.u32 2147483647, %v1403
        %vm2183 = vcmp.lt.f32.partialorder %v2182, 0.0004427343
        %v2184 = vsel %vm2183, %v2181, %v2178
        %v2185 = vadd.f32 %v1405, 1.0
        %v2186 = vlog2.pop %v2185
        %v2187 = vmul.f32 %v2186, 0.6931472
        %v2188 = vmul.f32 -0.5, %v1405
        %v2189 = vadd.f32 %v2188, 1.0
        %v2190 = vmul.f32 %v2189, %v1405
        %v2191 = vand.u32 2147483647, %v1405
        %vm2192 = vcmp.lt.f32.partialorder %v2191, 0.0004427343
        %v2193 = vsel %vm2192, %v2190, %v2187
        %v2194 = vadd.f32 %v1407, 1.0
        %v2195 = vlog2.pop %v2194
        %v2196 = vmul.f32 %v2195, 0.6931472
        %v2197 = vmul.f32 -0.5, %v1407
        %v2198 = vadd.f32 %v2197, 1.0
        %v2199 = vmul.f32 %v2198, %v1407
        %v2200 = vand.u32 2147483647, %v1407
        %vm2201 = vcmp.lt.f32.partialorder %v2200, 0.0004427343
        %v2202 = vsel %vm2201, %v2199, %v2196
        %v2203 = vadd.f32 %v1409, 1.0
        %v2204 = vlog2.pop %v2203
        %v2205 = vmul.f32 %v2204, 0.6931472
        %v2206 = vmul.f32 -0.5, %v1409
        %v2207 = vadd.f32 %v2206, 1.0
        %v2208 = vmul.f32 %v2207, %v1409
        %v2209 = vand.u32 2147483647, %v1409
        %vm2210 = vcmp.lt.f32.partialorder %v2209, 0.0004427343
        %v2211 = vsel %vm2210, %v2208, %v2205
        %v2212 = vadd.f32 %v1411, 1.0
        %v2213 = vlog2.pop %v2212
        %v2214 = vmul.f32 %v2213, 0.6931472
        %v2215 = vmul.f32 -0.5, %v1411
        %v2216 = vadd.f32 %v2215, 1.0
        %v2217 = vmul.f32 %v2216, %v1411
        %v2218 = vand.u32 2147483647, %v1411
        %vm2219 = vcmp.lt.f32.partialorder %v2218, 0.0004427343
        %v2220 = vsel %vm2219, %v2217, %v2214
        %v2221 = vadd.f32 %v1413, 1.0
        %v2222 = vlog2.pop %v2221
        %v2223 = vmul.f32 %v2222, 0.6931472
        %v2224 = vmul.f32 -0.5, %v1413
        %v2225 = vadd.f32 %v2224, 1.0
        %v2226 = vmul.f32 %v2225, %v1413
        %v2227 = vand.u32 2147483647, %v1413
        %vm2228 = vcmp.lt.f32.partialorder %v2227, 0.0004427343
        %v2229 = vsel %vm2228, %v2226, %v2223
        %v2230 = vadd.f32 %v1415, 1.0
        %v2231 = vlog2.pop %v2230
        %v2232 = vmul.f32 %v2231, 0.6931472
        %v2233 = vmul.f32 -0.5, %v1415
        %v2234 = vadd.f32 %v2233, 1.0
        %v2235 = vmul.f32 %v2234, %v1415
        %v2236 = vand.u32 2147483647, %v1415
        %vm2237 = vcmp.lt.f32.partialorder %v2236, 0.0004427343
        %v2238 = vsel %vm2237, %v2235, %v2232
        %v2239 = vadd.f32 %v1417, 1.0
        %v2240 = vlog2.pop %v2239
        %v2241 = vmul.f32 %v2240, 0.6931472
        %v2242 = vmul.f32 -0.5, %v1417
        %v2243 = vadd.f32 %v2242, 1.0
        %v2244 = vmul.f32 %v2243, %v1417
        %v2245 = vand.u32 2147483647, %v1417
        %vm2246 = vcmp.lt.f32.partialorder %v2245, 0.0004427343
        %v2247 = vsel %vm2246, %v2244, %v2241
        %v2248 = vadd.f32 %v1419, 1.0
        %v2249 = vlog2.pop %v2248
        %v2250 = vmul.f32 %v2249, 0.6931472
        %v2251 = vmul.f32 -0.5, %v1419
        %v2252 = vadd.f32 %v2251, 1.0
        %v2253 = vmul.f32 %v2252, %v1419
        %v2254 = vand.u32 2147483647, %v1419
        %vm2255 = vcmp.lt.f32.partialorder %v2254, 0.0004427343
        %v2256 = vsel %vm2255, %v2253, %v2250
        %v2257 = vadd.f32 %v1421, 1.0
        %v2258 = vlog2.pop %v2257
        %v2259 = vmul.f32 %v2258, 0.6931472
        %v2260 = vmul.f32 -0.5, %v1421
        %v2261 = vadd.f32 %v2260, 1.0
        %v2262 = vmul.f32 %v2261, %v1421
        %v2263 = vand.u32 2147483647, %v1421
        %vm2264 = vcmp.lt.f32.partialorder %v2263, 0.0004427343
        %v2265 = vsel %vm2264, %v2262, %v2259
        %v2266 = vadd.f32 %v1423, 1.0
        %v2267 = vlog2.pop %v2266
        %v2268 = vmul.f32 %v2267, 0.6931472
        %v2269 = vmul.f32 -0.5, %v1423
        %v2270 = vadd.f32 %v2269, 1.0
        %v2271 = vmul.f32 %v2270, %v1423
        %v2272 = vand.u32 2147483647, %v1423
        %vm2273 = vcmp.lt.f32.partialorder %v2272, 0.0004427343
        %v2274 = vsel %vm2273, %v2271, %v2268
        %v2275 = vadd.f32 %v1425, 1.0
        %v2276 = vlog2.pop %v2275
        %v2277 = vmul.f32 %v2276, 0.6931472
        %v2278 = vmul.f32 -0.5, %v1425
        %v2279 = vadd.f32 %v2278, 1.0
        %v2280 = vmul.f32 %v2279, %v1425
        %v2281 = vand.u32 2147483647, %v1425
        %vm2282 = vcmp.lt.f32.partialorder %v2281, 0.0004427343
        %v2283 = vsel %vm2282, %v2280, %v2277
        %v2284 = vadd.f32 %v1427, 1.0
        %v2285 = vlog2.pop %v2284
        %v2286 = vmul.f32 %v2285, 0.6931472
        %v2287 = vmul.f32 -0.5, %v1427
        %v2288 = vadd.f32 %v2287, 1.0
        %v2289 = vmul.f32 %v2288, %v1427
        %v2290 = vand.u32 2147483647, %v1427
        %vm2291 = vcmp.lt.f32.partialorder %v2290, 0.0004427343
        %v2292 = vsel %vm2291, %v2289, %v2286
        %v2293 = vadd.f32 %v1429, 1.0
        %v2294 = vlog2.pop %v2293
        %v2295 = vmul.f32 %v2294, 0.6931472
        %v2296 = vmul.f32 -0.5, %v1429
        %v2297 = vadd.f32 %v2296, 1.0
        %v2298 = vmul.f32 %v2297, %v1429
        %v2299 = vand.u32 2147483647, %v1429
        %vm2300 = vcmp.lt.f32.partialorder %v2299, 0.0004427343
        %v2301 = vsel %vm2300, %v2298, %v2295
        %v2302 = vadd.f32 %v1431, 1.0
        %v2303 = vlog2.pop %v2302
        %v2304 = vmul.f32 %v2303, 0.6931472
        %v2305 = vmul.f32 -0.5, %v1431
        %v2306 = vadd.f32 %v2305, 1.0
        %v2307 = vmul.f32 %v2306, %v1431
        %v2308 = vand.u32 2147483647, %v1431
        %vm2309 = vcmp.lt.f32.partialorder %v2308, 0.0004427343
        %v2310 = vsel %vm2309, %v2307, %v2304
        %v2311 = vadd.f32 %v1433, 1.0
        %v2312 = vlog2.pop %v2311
        %v2313 = vmul.f32 %v2312, 0.6931472
        %v2314 = vmul.f32 -0.5, %v1433
        %v2315 = vadd.f32 %v2314, 1.0
        %v2316 = vmul.f32 %v2315, %v1433
        %v2317 = vand.u32 2147483647, %v1433
        %vm2318 = vcmp.lt.f32.partialorder %v2317, 0.0004427343
        %v2319 = vsel %vm2318, %v2316, %v2313
        %v2320 = vadd.f32 %v1435, 1.0
        %v2321 = vlog2.pop %v2320
        %v2322 = vmul.f32 %v2321, 0.6931472
        %v2323 = vmul.f32 -0.5, %v1435
        %v2324 = vadd.f32 %v2323, 1.0
        %v2325 = vmul.f32 %v2324, %v1435
        %v2326 = vand.u32 2147483647, %v1435
        %vm2327 = vcmp.lt.f32.partialorder %v2326, 0.0004427343
        %v2328 = vsel %vm2327, %v2325, %v2322
        %v2329 = vadd.f32 %v1437, 1.0
        %v2330 = vlog2.pop %v2329
        %v2331 = vmul.f32 %v2330, 0.6931472
        %v2332 = vmul.f32 -0.5, %v1437
        %v2333 = vadd.f32 %v2332, 1.0
        %v2334 = vmul.f32 %v2333, %v1437
        %v2335 = vand.u32 2147483647, %v1437
        %vm2336 = vcmp.lt.f32.partialorder %v2335, 0.0004427343
        %v2337 = vsel %vm2336, %v2334, %v2331
        %v2338 = vadd.f32 %v1439, 1.0
        %v2339 = vlog2.pop %v2338
        %v2340 = vmul.f32 %v2339, 0.6931472
        %v2341 = vmul.f32 -0.5, %v1439
        %v2342 = vadd.f32 %v2341, 1.0
        %v2343 = vmul.f32 %v2342, %v1439
        %v2344 = vand.u32 2147483647, %v1439
        %vm2345 = vcmp.lt.f32.partialorder %v2344, 0.0004427343
        %v2346 = vsel %vm2345, %v2343, %v2340
        %v2347 = vadd.f32 %v1441, 1.0
        %v2348 = vlog2.pop %v2347
        %v2349 = vmul.f32 %v2348, 0.6931472
        %v2350 = vmul.f32 -0.5, %v1441
        %v2351 = vadd.f32 %v2350, 1.0
        %v2352 = vmul.f32 %v2351, %v1441
        %v2353 = vand.u32 2147483647, %v1441
        %vm2354 = vcmp.lt.f32.partialorder %v2353, 0.0004427343
        %v2355 = vsel %vm2354, %v2352, %v2349
        %v2356 = vadd.f32 %v1443, 1.0
        %v2357 = vlog2.pop %v2356
        %v2358 = vmul.f32 %v2357, 0.6931472
        %v2359 = vmul.f32 -0.5, %v1443
        %v2360 = vadd.f32 %v2359, 1.0
        %v2361 = vmul.f32 %v2360, %v1443
        %v2362 = vand.u32 2147483647, %v1443
        %vm2363 = vcmp.lt.f32.partialorder %v2362, 0.0004427343
        %v2364 = vsel %vm2363, %v2361, %v2358
        %v2365 = vadd.f32 %v1445, 1.0
        %v2366 = vlog2.pop %v2365
        %v2367 = vmul.f32 %v2366, 0.6931472
        %v2368 = vmul.f32 -0.5, %v1445
        %v2369 = vadd.f32 %v2368, 1.0
        %v2370 = vmul.f32 %v2369, %v1445
        %v2371 = vand.u32 2147483647, %v1445
        %vm2372 = vcmp.lt.f32.partialorder %v2371, 0.0004427343
        %v2373 = vsel %vm2372, %v2370, %v2367
        %v2374 = vadd.f32 %v1447, 1.0
        %v2375 = vlog2.pop %v2374
        %v2376 = vmul.f32 %v2375, 0.6931472
        %v2377 = vmul.f32 -0.5, %v1447
        %v2378 = vadd.f32 %v2377, 1.0
        %v2379 = vmul.f32 %v2378, %v1447
        %v2380 = vand.u32 2147483647, %v1447
        %vm2381 = vcmp.lt.f32.partialorder %v2380, 0.0004427343
        %v2382 = vsel %vm2381, %v2379, %v2376
        %v2383 = vadd.f32 %v1449, 1.0
        %v2384 = vlog2.pop %v2383
        %v2385 = vmul.f32 %v2384, 0.6931472
        %v2386 = vmul.f32 -0.5, %v1449
        %v2387 = vadd.f32 %v2386, 1.0
        %v2388 = vmul.f32 %v2387, %v1449
        %v2389 = vand.u32 2147483647, %v1449
        %vm2390 = vcmp.lt.f32.partialorder %v2389, 0.0004427343
        %v2391 = vsel %vm2390, %v2388, %v2385
        %v2392 = vadd.f32 %v1451, 1.0
        %v2393 = vlog2.pop %v2392
        %v2394 = vmul.f32 %v2393, 0.6931472
        %v2395 = vmul.f32 -0.5, %v1451
        %v2396 = vadd.f32 %v2395, 1.0
        %v2397 = vmul.f32 %v2396, %v1451
        %v2398 = vand.u32 2147483647, %v1451
        %vm2399 = vcmp.lt.f32.partialorder %v2398, 0.0004427343
        %v2400 = vsel %vm2399, %v2397, %v2394
        %v2401 = vadd.f32 %v1453, 1.0
        %v2402 = vlog2.pop %v2401
        %v2403 = vmul.f32 %v2402, 0.6931472
        %v2404 = vmul.f32 -0.5, %v1453
        %v2405 = vadd.f32 %v2404, 1.0
        %v2406 = vmul.f32 %v2405, %v1453
        %v2407 = vand.u32 2147483647, %v1453
        %vm2408 = vcmp.lt.f32.partialorder %v2407, 0.0004427343
        %v2409 = vsel %vm2408, %v2406, %v2403
        %v2410 = vadd.f32 %v1455, 1.0
        %v2411 = vlog2.pop %v2410
        %v2412 = vmul.f32 %v2411, 0.6931472
        %v2413 = vmul.f32 -0.5, %v1455
        %v2414 = vadd.f32 %v2413, 1.0
        %v2415 = vmul.f32 %v2414, %v1455
        %v2416 = vand.u32 2147483647, %v1455
        %vm2417 = vcmp.lt.f32.partialorder %v2416, 0.0004427343
        %v2418 = vsel %vm2417, %v2415, %v2412
        %v2419 = vadd.f32 %v1457, 1.0
        %v2420 = vlog2.pop %v2419
        %v2421 = vmul.f32 %v2420, 0.6931472
        %v2422 = vmul.f32 -0.5, %v1457
        %v2423 = vadd.f32 %v2422, 1.0
        %v2424 = vmul.f32 %v2423, %v1457
        %v2425 = vand.u32 2147483647, %v1457
        %vm2426 = vcmp.lt.f32.partialorder %v2425, 0.0004427343
        %v2427 = vsel %vm2426, %v2424, %v2421
        %v2428 = vadd.f32 %v1459, 1.0
        %v2429 = vlog2.pop %v2428
        %v2430 = vmul.f32 %v2429, 0.6931472
        %v2431 = vmul.f32 -0.5, %v1459
        %v2432 = vadd.f32 %v2431, 1.0
        %v2433 = vmul.f32 %v2432, %v1459
        %v2434 = vand.u32 2147483647, %v1459
        %vm2435 = vcmp.lt.f32.partialorder %v2434, 0.0004427343
        %v2436 = vsel %vm2435, %v2433, %v2430
        %v2437 = vadd.f32 %v1461, 1.0
        %v2438 = vlog2.pop %v2437
        %v2439 = vmul.f32 %v2438, 0.6931472
        %v2440 = vmul.f32 -0.5, %v1461
        %v2441 = vadd.f32 %v2440, 1.0
        %v2442 = vmul.f32 %v2441, %v1461
        %v2443 = vand.u32 2147483647, %v1461
        %vm2444 = vcmp.lt.f32.partialorder %v2443, 0.0004427343
        %v2445 = vsel %vm2444, %v2442, %v2439
        %v2446 = vadd.f32 %v1463, 1.0
        %v2447 = vlog2.pop %v2446
        %v2448 = vmul.f32 %v2447, 0.6931472
        %v2449 = vmul.f32 -0.5, %v1463
        %v2450 = vadd.f32 %v2449, 1.0
        %v2451 = vmul.f32 %v2450, %v1463
        %v2452 = vand.u32 2147483647, %v1463
        %vm2453 = vcmp.lt.f32.partialorder %v2452, 0.0004427343
        %v2454 = vsel %vm2453, %v2451, %v2448
        %v2455 = vadd.f32 %v1465, 1.0
        %v2456 = vlog2.pop %v2455
        %v2457 = vmul.f32 %v2456, 0.6931472
        %v2458 = vmul.f32 -0.5, %v1465
        %v2459 = vadd.f32 %v2458, 1.0
        %v2460 = vmul.f32 %v2459, %v1465
        %v2461 = vand.u32 2147483647, %v1465
        %vm2462 = vcmp.lt.f32.partialorder %v2461, 0.0004427343
        %v2463 = vsel %vm2462, %v2460, %v2457
        %v2464 = vadd.f32 %v1467, 1.0
        %v2465 = vlog2.pop %v2464
        %v2466 = vmul.f32 %v2465, 0.6931472
        %v2467 = vmul.f32 -0.5, %v1467
        %v2468 = vadd.f32 %v2467, 1.0
        %v2469 = vmul.f32 %v2468, %v1467
        %v2470 = vand.u32 2147483647, %v1467
        %vm2471 = vcmp.lt.f32.partialorder %v2470, 0.0004427343
        %v2472 = vsel %vm2471, %v2469, %v2466
        %v2473 = vadd.f32 %v1469, 1.0
        %v2474 = vlog2.pop %v2473
        %v2475 = vmul.f32 %v2474, 0.6931472
        %v2476 = vmul.f32 -0.5, %v1469
        %v2477 = vadd.f32 %v2476, 1.0
        %v2478 = vmul.f32 %v2477, %v1469
        %v2479 = vand.u32 2147483647, %v1469
        %vm2480 = vcmp.lt.f32.partialorder %v2479, 0.0004427343
        %v2481 = vsel %vm2480, %v2478, %v2475
        %v2482 = vadd.f32 %v1471, 1.0
        %v2483 = vlog2.pop %v2482
        %v2484 = vmul.f32 %v2483, 0.6931472
        %v2485 = vmul.f32 -0.5, %v1471
        %v2486 = vadd.f32 %v2485, 1.0
        %v2487 = vmul.f32 %v2486, %v1471
        %v2488 = vand.u32 2147483647, %v1471
        %vm2489 = vcmp.lt.f32.partialorder %v2488, 0.0004427343
        %v2490 = vsel %vm2489, %v2487, %v2484
        %v2491 = vadd.f32 %v1473, 1.0
        %v2492 = vlog2.pop %v2491
        %v2493 = vmul.f32 %v2492, 0.6931472
        %v2494 = vmul.f32 -0.5, %v1473
        %v2495 = vadd.f32 %v2494, 1.0
        %v2496 = vmul.f32 %v2495, %v1473
        %v2497 = vand.u32 2147483647, %v1473
        %vm2498 = vcmp.lt.f32.partialorder %v2497, 0.0004427343
        %v2499 = vsel %vm2498, %v2496, %v2493
        %v2500 = vadd.f32 %v1475, 1.0
        %v2501 = vlog2.pop %v2500
        %v2502 = vmul.f32 %v2501, 0.6931472
        %v2503 = vmul.f32 -0.5, %v1475
        %v2504 = vadd.f32 %v2503, 1.0
        %v2505 = vmul.f32 %v2504, %v1475
        %v2506 = vand.u32 2147483647, %v1475
        %vm2507 = vcmp.lt.f32.partialorder %v2506, 0.0004427343
        %v2508 = vsel %vm2507, %v2505, %v2502
        %v2509 = vadd.f32 %v1477, 1.0
        %v2510 = vlog2.pop %v2509
        %v2511 = vmul.f32 %v2510, 0.6931472
        %v2512 = vmul.f32 -0.5, %v1477
        %v2513 = vadd.f32 %v2512, 1.0
        %v2514 = vmul.f32 %v2513, %v1477
        %v2515 = vand.u32 2147483647, %v1477
        %vm2516 = vcmp.lt.f32.partialorder %v2515, 0.0004427343
        %v2517 = vsel %vm2516, %v2514, %v2511
        %v2518 = vadd.f32 %v1479, 1.0
        %v2519 = vlog2.pop %v2518
        %v2520 = vmul.f32 %v2519, 0.6931472
        %v2521 = vmul.f32 -0.5, %v1479
        %v2522 = vadd.f32 %v2521, 1.0
        %v2523 = vmul.f32 %v2522, %v1479
        %v2524 = vand.u32 2147483647, %v1479
        %vm2525 = vcmp.lt.f32.partialorder %v2524, 0.0004427343
        %v2526 = vsel %vm2525, %v2523, %v2520
        %v2527 = vadd.f32 %v1481, 1.0
        %v2528 = vlog2.pop %v2527
        %v2529 = vmul.f32 %v2528, 0.6931472
        %v2530 = vmul.f32 -0.5, %v1481
        %v2531 = vadd.f32 %v2530, 1.0
        %v2532 = vmul.f32 %v2531, %v1481
        %v2533 = vand.u32 2147483647, %v1481
        %vm2534 = vcmp.lt.f32.partialorder %v2533, 0.0004427343
        %v2535 = vsel %vm2534, %v2532, %v2529
        %v2536 = vadd.f32 %v1483, 1.0
        %v2537 = vlog2.pop %v2536
        %v2538 = vmul.f32 %v2537, 0.6931472
        %v2539 = vmul.f32 -0.5, %v1483
        %v2540 = vadd.f32 %v2539, 1.0
        %v2541 = vmul.f32 %v2540, %v1483
        %v2542 = vand.u32 2147483647, %v1483
        %vm2543 = vcmp.lt.f32.partialorder %v2542, 0.0004427343
        %v2544 = vsel %vm2543, %v2541, %v2538
        %v2545 = vadd.f32 %v1485, 1.0
        %v2546 = vlog2.pop %v2545
        %v2547 = vmul.f32 %v2546, 0.6931472
        %v2548 = vmul.f32 -0.5, %v1485
        %v2549 = vadd.f32 %v2548, 1.0
        %v2550 = vmul.f32 %v2549, %v1485
        %v2551 = vand.u32 2147483647, %v1485
        %vm2552 = vcmp.lt.f32.partialorder %v2551, 0.0004427343
        %v2553 = vsel %vm2552, %v2550, %v2547
        %v2554 = vadd.f32 %v1487, 1.0
        %v2555 = vlog2.pop %v2554
        %v2556 = vmul.f32 %v2555, 0.6931472
        %v2557 = vmul.f32 -0.5, %v1487
        %v2558 = vadd.f32 %v2557, 1.0
        %v2559 = vmul.f32 %v2558, %v1487
        %v2560 = vand.u32 2147483647, %v1487
        %vm2561 = vcmp.lt.f32.partialorder %v2560, 0.0004427343
        %v2562 = vsel %vm2561, %v2559, %v2556
        %v2563 = vadd.f32 %v1489, 1.0
        %v2564 = vlog2.pop %v2563
        %v2565 = vmul.f32 %v2564, 0.6931472
        %v2566 = vmul.f32 -0.5, %v1489
        %v2567 = vadd.f32 %v2566, 1.0
        %v2568 = vmul.f32 %v2567, %v1489
        %v2569 = vand.u32 2147483647, %v1489
        %vm2570 = vcmp.lt.f32.partialorder %v2569, 0.0004427343
        %v2571 = vsel %vm2570, %v2568, %v2565
        %v2572 = vadd.f32 %v1491, 1.0
        %v2573 = vlog2.pop %v2572
        %v2574 = vmul.f32 %v2573, 0.6931472
        %v2575 = vmul.f32 -0.5, %v1491
        %v2576 = vadd.f32 %v2575, 1.0
        %v2577 = vmul.f32 %v2576, %v1491
        %v2578 = vand.u32 2147483647, %v1491
        %vm2579 = vcmp.lt.f32.partialorder %v2578, 0.0004427343
        %v2580 = vsel %vm2579, %v2577, %v2574
        %v2581 = vadd.f32 %v1493, 1.0
        %v2582 = vlog2.pop %v2581
        %v2583 = vmul.f32 %v2582, 0.6931472
        %v2584 = vmul.f32 -0.5, %v1493
        %v2585 = vadd.f32 %v2584, 1.0
        %v2586 = vmul.f32 %v2585, %v1493
        %v2587 = vand.u32 2147483647, %v1493
        %vm2588 = vcmp.lt.f32.partialorder %v2587, 0.0004427343
        %v2589 = vsel %vm2588, %v2586, %v2583
        %v2590 = vadd.f32 %v1495, 1.0
        %v2591 = vlog2.pop %v2590
        %v2592 = vmul.f32 %v2591, 0.6931472
        %v2593 = vmul.f32 -0.5, %v1495
        %v2594 = vadd.f32 %v2593, 1.0
        %v2595 = vmul.f32 %v2594, %v1495
        %v2596 = vand.u32 2147483647, %v1495
        %vm2597 = vcmp.lt.f32.partialorder %v2596, 0.0004427343
        %v2598 = vsel %vm2597, %v2595, %v2592
        %v2599 = vadd.f32 %v1497, 1.0
        %v2600 = vlog2.pop %v2599
        %v2601 = vmul.f32 %v2600, 0.6931472
        %v2602 = vmul.f32 -0.5, %v1497
        %v2603 = vadd.f32 %v2602, 1.0
        %v2604 = vmul.f32 %v2603, %v1497
        %v2605 = vand.u32 2147483647, %v1497
        %vm2606 = vcmp.lt.f32.partialorder %v2605, 0.0004427343
        %v2607 = vsel %vm2606, %v2604, %v2601
        %v2608 = vadd.f32 %v1499, 1.0
        %v2609 = vlog2.pop %v2608
        %v2610 = vmul.f32 %v2609, 0.6931472
        %v2611 = vmul.f32 -0.5, %v1499
        %v2612 = vadd.f32 %v2611, 1.0
        %v2613 = vmul.f32 %v2612, %v1499
        %v2614 = vand.u32 2147483647, %v1499
        %vm2615 = vcmp.lt.f32.partialorder %v2614, 0.0004427343
        %v2616 = vsel %vm2615, %v2613, %v2610
        %v2617 = vadd.f32 %v1501, 1.0
        %v2618 = vlog2.pop %v2617
        %v2619 = vmul.f32 %v2618, 0.6931472
        %v2620 = vmul.f32 -0.5, %v1501
        %v2621 = vadd.f32 %v2620, 1.0
        %v2622 = vmul.f32 %v2621, %v1501
        %v2623 = vand.u32 2147483647, %v1501
        %vm2624 = vcmp.lt.f32.partialorder %v2623, 0.0004427343
        %v2625 = vsel %vm2624, %v2622, %v2619
        %v2626 = vadd.f32 %v1503, 1.0
        %v2627 = vlog2.pop %v2626
        %v2628 = vmul.f32 %v2627, 0.6931472
        %v2629 = vmul.f32 -0.5, %v1503
        %v2630 = vadd.f32 %v2629, 1.0
        %v2631 = vmul.f32 %v2630, %v1503
        %v2632 = vand.u32 2147483647, %v1503
        %vm2633 = vcmp.lt.f32.partialorder %v2632, 0.0004427343
        %v2634 = vsel %vm2633, %v2631, %v2628
        %v2635 = vadd.f32 %v1505, 1.0
        %v2636 = vlog2.pop %v2635
        %v2637 = vmul.f32 %v2636, 0.6931472
        %v2638 = vmul.f32 -0.5, %v1505
        %v2639 = vadd.f32 %v2638, 1.0
        %v2640 = vmul.f32 %v2639, %v1505
        %v2641 = vand.u32 2147483647, %v1505
        %vm2642 = vcmp.lt.f32.partialorder %v2641, 0.0004427343
        %v2643 = vsel %vm2642, %v2640, %v2637
        %v2644 = vadd.f32 %v1507, 1.0
        %v2645 = vlog2.pop %v2644
        %v2646 = vmul.f32 %v2645, 0.6931472
        %v2647 = vmul.f32 -0.5, %v1507
        %v2648 = vadd.f32 %v2647, 1.0
        %v2649 = vmul.f32 %v2648, %v1507
        %v2650 = vand.u32 2147483647, %v1507
        %vm2651 = vcmp.lt.f32.partialorder %v2650, 0.0004427343
        %v2652 = vsel %vm2651, %v2649, %v2646
        %v2653 = vadd.f32 %v1509, 1.0
        %v2654 = vlog2.pop %v2653
        %v2655 = vmul.f32 %v2654, 0.6931472
        %v2656 = vmul.f32 -0.5, %v1509
        %v2657 = vadd.f32 %v2656, 1.0
        %v2658 = vmul.f32 %v2657, %v1509
        %v2659 = vand.u32 2147483647, %v1509
        %vm2660 = vcmp.lt.f32.partialorder %v2659, 0.0004427343
        %v2661 = vsel %vm2660, %v2658, %v2655
        %v2662 = vadd.f32 %v870, %v1518
        %v2663 = vadd.f32 %v871, %v1527
        %v2664 = vadd.f32 %v872, %v1536
        %v2665 = vadd.f32 %v873, %v1545
        %v2666 = vadd.f32 %v874, %v1554
        %v2667 = vadd.f32 %v875, %v1563
        %v2668 = vadd.f32 %v876, %v1572
        %v2669 = vadd.f32 %v877, %v1581
        %v2670 = vadd.f32 %v878, %v1590
        %v2671 = vadd.f32 %v879, %v1599
        %v2672 = vadd.f32 %v880, %v1608
        %v2673 = vadd.f32 %v881, %v1617
        %v2674 = vadd.f32 %v882, %v1626
        %v2675 = vadd.f32 %v883, %v1635
        %v2676 = vadd.f32 %v884, %v1644
        %v2677 = vadd.f32 %v885, %v1653
        %v2678 = vadd.f32 %v886, %v1662
        %v2679 = vadd.f32 %v887, %v1671
        %v2680 = vadd.f32 %v888, %v1680
        %v2681 = vadd.f32 %v889, %v1689
        %v2682 = vadd.f32 %v890, %v1698
        %v2683 = vadd.f32 %v891, %v1707
        %v2684 = vadd.f32 %v892, %v1716
        %v2685 = vadd.f32 %v893, %v1725
        %v2686 = vadd.f32 %v894, %v1734
        %v2687 = vadd.f32 %v895, %v1743
        %v2688 = vadd.f32 %v896, %v1752
        %v2689 = vadd.f32 %v897, %v1761
        %v2690 = vadd.f32 %v898, %v1770
        %v2691 = vadd.f32 %v899, %v1779
        %v2692 = vadd.f32 %v900, %v1788
        %v2693 = vadd.f32 %v901, %v1797
        %v2694 = vadd.f32 %v902, %v1806
        %v2695 = vadd.f32 %v903, %v1815
        %v2696 = vadd.f32 %v904, %v1824
        %v2697 = vadd.f32 %v905, %v1833
        %v2698 = vadd.f32 %v906, %v1842
        %v2699 = vadd.f32 %v907, %v1851
        %v2700 = vadd.f32 %v908, %v1860
        %v2701 = vadd.f32 %v909, %v1869
        %v2702 = vadd.f32 %v910, %v1878
        %v2703 = vadd.f32 %v911, %v1887
        %v2704 = vadd.f32 %v912, %v1896
        %v2705 = vadd.f32 %v913, %v1905
        %v2706 = vadd.f32 %v914, %v1914
        %v2707 = vadd.f32 %v915, %v1923
        %v2708 = vadd.f32 %v916, %v1932
        %v2709 = vadd.f32 %v917, %v1941
        %v2710 = vadd.f32 %v918, %v1950
        %v2711 = vadd.f32 %v919, %v1959
        %v2712 = vadd.f32 %v920, %v1968
        %v2713 = vadd.f32 %v921, %v1977
        %v2714 = vadd.f32 %v922, %v1986
        %v2715 = vadd.f32 %v923, %v1995
        %v2716 = vadd.f32 %v924, %v2004
        %v2717 = vadd.f32 %v925, %v2013
        %v2718 = vadd.f32 %v926, %v2022
        %v2719 = vadd.f32 %v927, %v2031
        %v2720 = vadd.f32 %v928, %v2040
        %v2721 = vadd.f32 %v929, %v2049
        %v2722 = vadd.f32 %v930, %v2058
        %v2723 = vadd.f32 %v931, %v2067
        %v2724 = vadd.f32 %v932, %v2076
        %v2725 = vadd.f32 %v933, %v2085
        %v2726 = vadd.f32 %v934, %v2094
        %v2727 = vadd.f32 %v935, %v2103
        %v2728 = vadd.f32 %v936, %v2112
        %v2729 = vadd.f32 %v937, %v2121
        %v2730 = vadd.f32 %v938, %v2130
        %v2731 = vadd.f32 %v939, %v2139
        %v2732 = vadd.f32 %v940, %v2148
        %v2733 = vadd.f32 %v941, %v2157
        %v2734 = vadd.f32 %v942, %v2166
        %v2735 = vadd.f32 %v943, %v2175
        %v2736 = vadd.f32 %v944, %v2184
        %v2737 = vadd.f32 %v945, %v2193
        %v2738 = vadd.f32 %v946, %v2202
        %v2739 = vadd.f32 %v947, %v2211
        %v2740 = vadd.f32 %v948, %v2220
        %v2741 = vadd.f32 %v949, %v2229
        %v2742 = vadd.f32 %v950, %v2238
        %v2743 = vadd.f32 %v951, %v2247
        %v2744 = vadd.f32 %v952, %v2256
        %v2745 = vadd.f32 %v953, %v2265
        %v2746 = vadd.f32 %v954, %v2274
        %v2747 = vadd.f32 %v955, %v2283
        %v2748 = vadd.f32 %v956, %v2292
        %v2749 = vadd.f32 %v957, %v2301
        %v2750 = vadd.f32 %v958, %v2310
        %v2751 = vadd.f32 %v959, %v2319
        %v2752 = vadd.f32 %v960, %v2328
        %v2753 = vadd.f32 %v961, %v2337
        %v2754 = vadd.f32 %v962, %v2346
        %v2755 = vadd.f32 %v963, %v2355
        %v2756 = vadd.f32 %v964, %v2364
        %v2757 = vadd.f32 %v965, %v2373
        %v2758 = vadd.f32 %v966, %v2382
        %v2759 = vadd.f32 %v967, %v2391
        %v2760 = vadd.f32 %v968, %v2400
        %v2761 = vadd.f32 %v969, %v2409
        %v2762 = vadd.f32 %v970, %v2418
        %v2763 = vadd.f32 %v971, %v2427
        %v2764 = vadd.f32 %v972, %v2436
        %v2765 = vadd.f32 %v973, %v2445
        %v2766 = vadd.f32 %v974, %v2454
        %v2767 = vadd.f32 %v975, %v2463
        %v2768 = vadd.f32 %v976, %v2472
        %v2769 = vadd.f32 %v977, %v2481
        %v2770 = vadd.f32 %v978, %v2490
        %v2771 = vadd.f32 %v979, %v2499
        %v2772 = vadd.f32 %v980, %v2508
        %v2773 = vadd.f32 %v981, %v2517
        %v2774 = vadd.f32 %v982, %v2526
        %v2775 = vadd.f32 %v983, %v2535
        %v2776 = vadd.f32 %v984, %v2544
        %v2777 = vadd.f32 %v985, %v2553
        %v2778 = vadd.f32 %v986, %v2562
        %v2779 = vadd.f32 %v987, %v2571
        %v2780 = vadd.f32 %v988, %v2580
        %v2781 = vadd.f32 %v989, %v2589
        %v2782 = vadd.f32 %v990, %v2598
        %v2783 = vadd.f32 %v991, %v2607
        %v2784 = vadd.f32 %v992, %v2616
        %v2785 = vadd.f32 %v993, %v2625
        %v2786 = vadd.f32 %v994, %v2634
        %v2787 = vadd.f32 %v995, %v2643
        %v2788 = vadd.f32 %v996, %v2652
        %v2789 = vadd.f32 %v997, %v2661
        %v2790 = vmul.f32 %v614, %v2662
        %v2791 = vmul.f32 %v615, %v2663
        %v2792 = vmul.f32 %v616, %v2664
        %v2793 = vmul.f32 %v617, %v2665
        %v2794 = vmul.f32 %v618, %v2666
        %v2795 = vmul.f32 %v619, %v2667
        %v2796 = vmul.f32 %v620, %v2668
        %v2797 = vmul.f32 %v621, %v2669
        %v2798 = vmul.f32 %v622, %v2670
        %v2799 = vmul.f32 %v623, %v2671
        %v2800 = vmul.f32 %v624, %v2672
        %v2801 = vmul.f32 %v625, %v2673
        %v2802 = vmul.f32 %v626, %v2674
        %v2803 = vmul.f32 %v627, %v2675
        %v2804 = vmul.f32 %v628, %v2676
        %v2805 = vmul.f32 %v629, %v2677
        %v2806 = vmul.f32 %v630, %v2678
        %v2807 = vmul.f32 %v631, %v2679
        %v2808 = vmul.f32 %v632, %v2680
        %v2809 = vmul.f32 %v633, %v2681
        %v2810 = vmul.f32 %v634, %v2682
        %v2811 = vmul.f32 %v635, %v2683
        %v2812 = vmul.f32 %v636, %v2684
        %v2813 = vmul.f32 %v637, %v2685
        %v2814 = vmul.f32 %v638, %v2686
        %v2815 = vmul.f32 %v639, %v2687
        %v2816 = vmul.f32 %v640, %v2688
        %v2817 = vmul.f32 %v641, %v2689
        %v2818 = vmul.f32 %v642, %v2690
        %v2819 = vmul.f32 %v643, %v2691
        %v2820 = vmul.f32 %v644, %v2692
        %v2821 = vmul.f32 %v645, %v2693
        %v2822 = vmul.f32 %v646, %v2694
        %v2823 = vmul.f32 %v647, %v2695
        %v2824 = vmul.f32 %v648, %v2696
        %v2825 = vmul.f32 %v649, %v2697
        %v2826 = vmul.f32 %v650, %v2698
        %v2827 = vmul.f32 %v651, %v2699
        %v2828 = vmul.f32 %v652, %v2700
        %v2829 = vmul.f32 %v653, %v2701
        %v2830 = vmul.f32 %v654, %v2702
        %v2831 = vmul.f32 %v655, %v2703
        %v2832 = vmul.f32 %v656, %v2704
        %v2833 = vmul.f32 %v657, %v2705
        %v2834 = vmul.f32 %v658, %v2706
        %v2835 = vmul.f32 %v659, %v2707
        %v2836 = vmul.f32 %v660, %v2708
        %v2837 = vmul.f32 %v661, %v2709
        %v2838 = vmul.f32 %v662, %v2710
        %v2839 = vmul.f32 %v663, %v2711
        %v2840 = vmul.f32 %v664, %v2712
        %v2841 = vmul.f32 %v665, %v2713
        %v2842 = vmul.f32 %v666, %v2714
        %v2843 = vmul.f32 %v667, %v2715
        %v2844 = vmul.f32 %v668, %v2716
        %v2845 = vmul.f32 %v669, %v2717
        %v2846 = vmul.f32 %v670, %v2718
        %v2847 = vmul.f32 %v671, %v2719
        %v2848 = vmul.f32 %v672, %v2720
        %v2849 = vmul.f32 %v673, %v2721
        %v2850 = vmul.f32 %v674, %v2722
        %v2851 = vmul.f32 %v675, %v2723
        %v2852 = vmul.f32 %v676, %v2724
        %v2853 = vmul.f32 %v677, %v2725
        %v2854 = vmul.f32 %v678, %v2726
        %v2855 = vmul.f32 %v679, %v2727
        %v2856 = vmul.f32 %v680, %v2728
        %v2857 = vmul.f32 %v681, %v2729
        %v2858 = vmul.f32 %v682, %v2730
        %v2859 = vmul.f32 %v683, %v2731
        %v2860 = vmul.f32 %v684, %v2732
        %v2861 = vmul.f32 %v685, %v2733
        %v2862 = vmul.f32 %v686, %v2734
        %v2863 = vmul.f32 %v687, %v2735
        %v2864 = vmul.f32 %v688, %v2736
        %v2865 = vmul.f32 %v689, %v2737
        %v2866 = vmul.f32 %v690, %v2738
        %v2867 = vmul.f32 %v691, %v2739
        %v2868 = vmul.f32 %v692, %v2740
        %v2869 = vmul.f32 %v693, %v2741
        %v2870 = vmul.f32 %v694, %v2742
        %v2871 = vmul.f32 %v695, %v2743
        %v2872 = vmul.f32 %v696, %v2744
        %v2873 = vmul.f32 %v697, %v2745
        %v2874 = vmul.f32 %v698, %v2746
        %v2875 = vmul.f32 %v699, %v2747
        %v2876 = vmul.f32 %v700, %v2748
        %v2877 = vmul.f32 %v701, %v2749
        %v2878 = vmul.f32 %v702, %v2750
        %v2879 = vmul.f32 %v703, %v2751
        %v2880 = vmul.f32 %v704, %v2752
        %v2881 = vmul.f32 %v705, %v2753
        %v2882 = vmul.f32 %v706, %v2754
        %v2883 = vmul.f32 %v707, %v2755
        %v2884 = vmul.f32 %v708, %v2756
        %v2885 = vmul.f32 %v709, %v2757
        %v2886 = vmul.f32 %v710, %v2758
        %v2887 = vmul.f32 %v711, %v2759
        %v2888 = vmul.f32 %v712, %v2760
        %v2889 = vmul.f32 %v713, %v2761
        %v2890 = vmul.f32 %v714, %v2762
        %v2891 = vmul.f32 %v715, %v2763
        %v2892 = vmul.f32 %v716, %v2764
        %v2893 = vmul.f32 %v717, %v2765
        %v2894 = vmul.f32 %v718, %v2766
        %v2895 = vmul.f32 %v719, %v2767
        %v2896 = vmul.f32 %v720, %v2768
        %v2897 = vmul.f32 %v721, %v2769
        %v2898 = vmul.f32 %v722, %v2770
        %v2899 = vmul.f32 %v723, %v2771
        %v2900 = vmul.f32 %v724, %v2772
        %v2901 = vmul.f32 %v725, %v2773
        %v2902 = vmul.f32 %v726, %v2774
        %v2903 = vmul.f32 %v727, %v2775
        %v2904 = vmul.f32 %v728, %v2776
        %v2905 = vmul.f32 %v729, %v2777
        %v2906 = vmul.f32 %v730, %v2778
        %v2907 = vmul.f32 %v731, %v2779
        %v2908 = vmul.f32 %v732, %v2780
        %v2909 = vmul.f32 %v733, %v2781
        %v2910 = vmul.f32 %v734, %v2782
        %v2911 = vmul.f32 %v735, %v2783
        %v2912 = vmul.f32 %v736, %v2784
        %v2913 = vmul.f32 %v737, %v2785
        %v2914 = vmul.f32 %v738, %v2786
        %v2915 = vmul.f32 %v739, %v2787
        %v2916 = vmul.f32 %v740, %v2788
        %v2917 = vmul.f32 %v741, %v2789
        %v2918 = vadd.f32 %v486, %v2790
        %v2919 = vadd.f32 %v487, %v2791
        %v2920 = vadd.f32 %v488, %v2792
        %v2921 = vadd.f32 %v489, %v2793
        %v2922 = vadd.f32 %v490, %v2794
        %v2923 = vadd.f32 %v491, %v2795
        %v2924 = vadd.f32 %v492, %v2796
        %v2925 = vadd.f32 %v493, %v2797
        %v2926 = vadd.f32 %v494, %v2798
        %v2927 = vadd.f32 %v495, %v2799
        %v2928 = vadd.f32 %v496, %v2800
        %v2929 = vadd.f32 %v497, %v2801
        %v2930 = vadd.f32 %v498, %v2802
        %v2931 = vadd.f32 %v499, %v2803
        %v2932 = vadd.f32 %v500, %v2804
        %v2933 = vadd.f32 %v501, %v2805
        %v2934 = vadd.f32 %v502, %v2806
        %v2935 = vadd.f32 %v503, %v2807
        %v2936 = vadd.f32 %v504, %v2808
        %v2937 = vadd.f32 %v505, %v2809
        %v2938 = vadd.f32 %v506, %v2810
        %v2939 = vadd.f32 %v507, %v2811
        %v2940 = vadd.f32 %v508, %v2812
        %v2941 = vadd.f32 %v509, %v2813
        %v2942 = vadd.f32 %v510, %v2814
        %v2943 = vadd.f32 %v511, %v2815
        %v2944 = vadd.f32 %v512, %v2816
        %v2945 = vadd.f32 %v513, %v2817
        %v2946 = vadd.f32 %v514, %v2818
        %v2947 = vadd.f32 %v515, %v2819
        %v2948 = vadd.f32 %v516, %v2820
        %v2949 = vadd.f32 %v517, %v2821
        %v2950 = vadd.f32 %v518, %v2822
        %v2951 = vadd.f32 %v519, %v2823
        %v2952 = vadd.f32 %v520, %v2824
        %v2953 = vadd.f32 %v521, %v2825
        %v2954 = vadd.f32 %v522, %v2826
        %v2955 = vadd.f32 %v523, %v2827
        %v2956 = vadd.f32 %v524, %v2828
        %v2957 = vadd.f32 %v525, %v2829
        %v2958 = vadd.f32 %v526, %v2830
        %v2959 = vadd.f32 %v527, %v2831
        %v2960 = vadd.f32 %v528, %v2832
        %v2961 = vadd.f32 %v529, %v2833
        %v2962 = vadd.f32 %v530, %v2834
        %v2963 = vadd.f32 %v531, %v2835
        %v2964 = vadd.f32 %v532, %v2836
        %v2965 = vadd.f32 %v533, %v2837
        %v2966 = vadd.f32 %v534, %v2838
        %v2967 = vadd.f32 %v535, %v2839
        %v2968 = vadd.f32 %v536, %v2840
        %v2969 = vadd.f32 %v537, %v2841
        %v2970 = vadd.f32 %v538, %v2842
        %v2971 = vadd.f32 %v539, %v2843
        %v2972 = vadd.f32 %v540, %v2844
        %v2973 = vadd.f32 %v541, %v2845
        %v2974 = vadd.f32 %v542, %v2846
        %v2975 = vadd.f32 %v543, %v2847
        %v2976 = vadd.f32 %v544, %v2848
        %v2977 = vadd.f32 %v545, %v2849
        %v2978 = vadd.f32 %v546, %v2850
        %v2979 = vadd.f32 %v547, %v2851
        %v2980 = vadd.f32 %v548, %v2852
        %v2981 = vadd.f32 %v549, %v2853
        %v2982 = vadd.f32 %v550, %v2854
        %v2983 = vadd.f32 %v551, %v2855
        %v2984 = vadd.f32 %v552, %v2856
        %v2985 = vadd.f32 %v553, %v2857
        %v2986 = vadd.f32 %v554, %v2858
        %v2987 = vadd.f32 %v555, %v2859
        %v2988 = vadd.f32 %v556, %v2860
        %v2989 = vadd.f32 %v557, %v2861
        %v2990 = vadd.f32 %v558, %v2862
        %v2991 = vadd.f32 %v559, %v2863
        %v2992 = vadd.f32 %v560, %v2864
        %v2993 = vadd.f32 %v561, %v2865
        %v2994 = vadd.f32 %v562, %v2866
        %v2995 = vadd.f32 %v563, %v2867
        %v2996 = vadd.f32 %v564, %v2868
        %v2997 = vadd.f32 %v565, %v2869
        %v2998 = vadd.f32 %v566, %v2870
        %v2999 = vadd.f32 %v567, %v2871
        %v3000 = vadd.f32 %v568, %v2872
        %v3001 = vadd.f32 %v569, %v2873
        %v3002 = vadd.f32 %v570, %v2874
        %v3003 = vadd.f32 %v571, %v2875
        %v3004 = vadd.f32 %v572, %v2876
        %v3005 = vadd.f32 %v573, %v2877
        %v3006 = vadd.f32 %v574, %v2878
        %v3007 = vadd.f32 %v575, %v2879
        %v3008 = vadd.f32 %v576, %v2880
        %v3009 = vadd.f32 %v577, %v2881
        %v3010 = vadd.f32 %v578, %v2882
        %v3011 = vadd.f32 %v579, %v2883
        %v3012 = vadd.f32 %v580, %v2884
        %v3013 = vadd.f32 %v581, %v2885
        %v3014 = vadd.f32 %v582, %v2886
        %v3015 = vadd.f32 %v583, %v2887
        %v3016 = vadd.f32 %v584, %v2888
        %v3017 = vadd.f32 %v585, %v2889
        %v3018 = vadd.f32 %v586, %v2890
        %v3019 = vadd.f32 %v587, %v2891
        %v3020 = vadd.f32 %v588, %v2892
        %v3021 = vadd.f32 %v589, %v2893
        %v3022 = vadd.f32 %v590, %v2894
        %v3023 = vadd.f32 %v591, %v2895
        %v3024 = vadd.f32 %v592, %v2896
        %v3025 = vadd.f32 %v593, %v2897
        %v3026 = vadd.f32 %v594, %v2898
        %v3027 = vadd.f32 %v595, %v2899
        %v3028 = vadd.f32 %v596, %v2900
        %v3029 = vadd.f32 %v597, %v2901
        %v3030 = vadd.f32 %v598, %v2902
        %v3031 = vadd.f32 %v599, %v2903
        %v3032 = vadd.f32 %v600, %v2904
        %v3033 = vadd.f32 %v601, %v2905
        %v3034 = vadd.f32 %v602, %v2906
        %v3035 = vadd.f32 %v603, %v2907
        %v3036 = vadd.f32 %v604, %v2908
        %v3037 = vadd.f32 %v605, %v2909
        %v3038 = vadd.f32 %v606, %v2910
        %v3039 = vadd.f32 %v607, %v2911
        %v3040 = vadd.f32 %v608, %v2912
        %v3041 = vadd.f32 %v609, %v2913
        %v3042 = vadd.f32 %v610, %v2914
        %v3043 = vadd.f32 %v611, %v2915
        %v3044 = vadd.f32 %v612, %v2916
        %v3045 = vadd.f32 %v613, %v2917
        %v3046 = vld [vmem:[%s462] sm:$0x3]
        %v3047 = vld [vmem:[%s472] sm:$0x3]
        %v3048 = vld [vmem:[%s467] sm:$0x3]
        %v3049 = vmax.f32 %v3048, 0.0
        %v3050 = vand.u32 2147483647, %v3048
        %v3051 = vsub.f32 0.0, %v3050
        %v3052 = vmul.f32 %v3051, 1.442695
        %v3053 = vpow.pop %v3052
        %v3054 = vadd.f32 %v3053, 1.0
        %v3055 = vlog2.pop %v3054
        %v3056 = vmul.f32 %v3055, 0.6931472
        %v3057 = vmul.f32 -0.5, %v3053
        %v3058 = vadd.f32 %v3057, 1.0
        %v3059 = vmul.f32 %v3058, %v3053
        %v3060 = vand.u32 2147483647, %v3053
        %vm3061 = vcmp.lt.f32.partialorder %v3060, 0.0004427343
        %v3062 = vsel %vm3061, %v3059, %v3056
        %v3063 = vadd.f32 %v3049, %v3062
        %v3064 = vmul.f32 %v3047, %v3063
        %v3065 = vadd.f32 %v3046, %v3064
        %v3066 = vld [vmem:[%s0] sm:$0xff]
        %v3067 = vld [vmem:[%s0 + $0x8] sm:$0xff]
        %v3068 = vld [vmem:[%s0 + $0x10] sm:$0xff]
        %v3069 = vld [vmem:[%s0 + $0x18] sm:$0xff]
        %v3070 = vld [vmem:[%s0 + $0x20] sm:$0xff]
        %v3071 = vld [vmem:[%s0 + $0x28] sm:$0xff]
        %v3072 = vld [vmem:[%s0 + $0x30] sm:$0xff]
        %v3073 = vld [vmem:[%s0 + $0x38] sm:$0xff]
        %3074 = vmatprep.subr.mxu0 %v2949
        %3075 = vmatpush1.msra.mxu0 %v2948
        %3076 = vmatprep.subr.mxu0 %v2947
        %3077 = vmatpush1.msra.mxu0 %v2946
        %3078 = vmatprep.subr.mxu0 %v2945
        %3079 = vmatpush1.msra.mxu0 %v2944
        %3080 = vmatprep.subr.mxu0 %v2943
        %3081 = vmatpush1.msra.mxu0 %v2942
        %3082 = vmatprep.subr.mxu0 %v2941
        %3083 = vmatpush1.msra.mxu0 %v2940
        %3084 = vmatprep.subr.mxu0 %v2939
        %3085 = vmatpush1.msra.mxu0 %v2938
        %3086 = vmatprep.subr.mxu0 %v2937
        %3087 = vmatpush1.msra.mxu0 %v2936
        %3088 = vmatprep.subr.mxu0 %v2935
        %3089 = vmatpush1.msra.mxu0 %v2934
        %3090 = vmatprep.subr.mxu0 %v2933
        %3091 = vmatpush1.msra.mxu0 %v2932
        %3092 = vmatprep.subr.mxu0 %v2931
        %3093 = vmatpush1.msra.mxu0 %v2930
        %3094 = vmatprep.subr.mxu0 %v2929
        %3095 = vmatpush1.msra.mxu0 %v2928
        %3096 = vmatprep.subr.mxu0 %v2927
        %3097 = vmatpush1.msra.mxu0 %v2926
        %3098 = vmatprep.subr.mxu0 %v2925
        %3099 = vmatpush1.msra.mxu0 %v2924
        %3100 = vmatprep.subr.mxu0 %v2923
        %3101 = vmatpush1.msra.mxu0 %v2922
        %3102 = vmatprep.subr.mxu0 %v2921
        %3103 = vmatpush1.msra.mxu0 %v2920
        %3104 = vmatprep.subr.mxu0 %v2919
        %3105 = vmatpush1.msra.mxu0 %v2918
        %3106 = vmatprep.subr.mxu0 %v2981
        %3107 = vmatpush2.msra.mxu0 %v2980
        %3108 = vmatprep.subr.mxu0 %v2979
        %3109 = vmatpush2.msra.mxu0 %v2978
        %3110 = vmatprep.subr.mxu0 %v2977
        %3111 = vmatpush2.msra.mxu0 %v2976
        %3112 = vmatprep.subr.mxu0 %v2975
        %3113 = vmatpush2.msra.mxu0 %v2974
        %3114 = vmatprep.subr.mxu0 %v2973
        %3115 = vmatpush2.msra.mxu0 %v2972
        %3116 = vmatprep.subr.mxu0 %v2971
        %3117 = vmatpush2.msra.mxu0 %v2970
        %3118 = vmatprep.subr.mxu0 %v2969
        %3119 = vmatpush2.msra.mxu0 %v2968
        %3120 = vmatprep.subr.mxu0 %v2967
        %3121 = vmatpush2.msra.mxu0 %v2966
        %3122 = vmatprep.subr.mxu0 %v2965
        %3123 = vmatpush2.msra.mxu0 %v2964
        %3124 = vmatprep.subr.mxu0 %v2963
        %3125 = vmatpush2.msra.mxu0 %v2962
        %3126 = vmatprep.subr.mxu0 %v2961
        %3127 = vmatpush2.msra.mxu0 %v2960
        %3128 = vmatprep.subr.mxu0 %v2959
        %3129 = vmatpush2.msra.mxu0 %v2958
        %3130 = vmatprep.subr.mxu0 %v2957
        %3131 = vmatpush2.msra.mxu0 %v2956
        %3132 = vmatprep.subr.mxu0 %v2955
        %3133 = vmatpush2.msra.mxu0 %v2954
        %3134 = vmatprep.subr.mxu0 %v2953
        %3135 = vmatpush2.msra.mxu0 %v2952
        %3136 = vmatprep.subr.mxu0 %v2951
        %3137 = vmatpush2.msra.mxu0 %v2950
        %3138 = vmatprep.mubr.f32.mxu0 %v3067
        %3139 = vmatmul.mubr.f32.gmra.mxu0 %v3066
        %v3140 = vpop.f32.mrf.mxu0
        %v3141 = vadd.f32 0.0, %v3140
        %v3142 = vpop.f32.mrf.mxu0
        %v3143 = vadd.f32 0.0, %v3142
        %3144 = vmatprep.mubr.f32.mxu0 %v3071
        %3145 = vmatmul.mubr.f32.gmra.mxu0 %v3070
        %v3146 = vpop.f32.mrf.mxu0
        %v3147 = vadd.f32 0.0, %v3146
        %v3148 = vpop.f32.mrf.mxu0
        %v3149 = vadd.f32 0.0, %v3148
        %3150 = vdwg.mxu0
        %3151 = vmatprep.subr.mxu0 %v3013
        %3152 = vmatpush1.msra.mxu0 %v3012
        %3153 = vmatprep.subr.mxu0 %v3011
        %3154 = vmatpush1.msra.mxu0 %v3010
        %3155 = vmatprep.subr.mxu0 %v3009
        %3156 = vmatpush1.msra.mxu0 %v3008
        %3157 = vmatprep.subr.mxu0 %v3007
        %3158 = vmatpush1.msra.mxu0 %v3006
        %3159 = vmatprep.subr.mxu0 %v3005
        %3160 = vmatpush1.msra.mxu0 %v3004
        %3161 = vmatprep.subr.mxu0 %v3003
        %3162 = vmatpush1.msra.mxu0 %v3002
        %3163 = vmatprep.subr.mxu0 %v3001
        %3164 = vmatpush1.msra.mxu0 %v3000
        %3165 = vmatprep.subr.mxu0 %v2999
        %3166 = vmatpush1.msra.mxu0 %v2998
        %3167 = vmatprep.subr.mxu0 %v2997
        %3168 = vmatpush1.msra.mxu0 %v2996
        %3169 = vmatprep.subr.mxu0 %v2995
        %3170 = vmatpush1.msra.mxu0 %v2994
        %3171 = vmatprep.subr.mxu0 %v2993
        %3172 = vmatpush1.msra.mxu0 %v2992
        %3173 = vmatprep.subr.mxu0 %v2991
        %3174 = vmatpush1.msra.mxu0 %v2990
        %3175 = vmatprep.subr.mxu0 %v2989
        %3176 = vmatpush1.msra.mxu0 %v2988
        %3177 = vmatprep.subr.mxu0 %v2987
        %3178 = vmatpush1.msra.mxu0 %v2986
        %3179 = vmatprep.subr.mxu0 %v2985
        %3180 = vmatpush1.msra.mxu0 %v2984
        %3181 = vmatprep.subr.mxu0 %v2983
        %3182 = vmatpush1.msra.mxu0 %v2982
        %3183 = vmatprep.subr.mxu0 %v3045
        %3184 = vmatpush2.msra.mxu0 %v3044
        %3185 = vmatprep.subr.mxu0 %v3043
        %3186 = vmatpush2.msra.mxu0 %v3042
        %3187 = vmatprep.subr.mxu0 %v3041
        %3188 = vmatpush2.msra.mxu0 %v3040
        %3189 = vmatprep.subr.mxu0 %v3039
        %3190 = vmatpush2.msra.mxu0 %v3038
        %3191 = vmatprep.subr.mxu0 %v3037
        %3192 = vmatpush2.msra.mxu0 %v3036
        %3193 = vmatprep.subr.mxu0 %v3035
        %3194 = vmatpush2.msra.mxu0 %v3034
        %3195 = vmatprep.subr.mxu0 %v3033
        %3196 = vmatpush2.msra.mxu0 %v3032
        %3197 = vmatprep.subr.mxu0 %v3031
        %3198 = vmatpush2.msra.mxu0 %v3030
        %3199 = vmatprep.subr.mxu0 %v3029
        %3200 = vmatpush2.msra.mxu0 %v3028
        %3201 = vmatprep.subr.mxu0 %v3027
        %3202 = vmatpush2.msra.mxu0 %v3026
        %3203 = vmatprep.subr.mxu0 %v3025
        %3204 = vmatpush2.msra.mxu0 %v3024
        %3205 = vmatprep.subr.mxu0 %v3023
        %3206 = vmatpush2.msra.mxu0 %v3022
        %3207 = vmatprep.subr.mxu0 %v3021
        %3208 = vmatpush2.msra.mxu0 %v3020
        %3209 = vmatprep.subr.mxu0 %v3019
        %3210 = vmatpush2.msra.mxu0 %v3018
        %3211 = vmatprep.subr.mxu0 %v3017
        %3212 = vmatpush2.msra.mxu0 %v3016
        %3213 = vmatprep.subr.mxu0 %v3015
        %3214 = vmatpush2.msra.mxu0 %v3014
        %3215 = vmatprep.mubr.f32.mxu0 %v3069
        %3216 = vmatmul.mubr.f32.gmra.mxu0 %v3068
        %v3217 = vpop.f32.mrf.mxu0
        %v3218 = vadd.f32 %v3141, %v3217
        %v3219 = vpop.f32.mrf.mxu0
        %v3220 = vadd.f32 %v3143, %v3219
        %3221 = vmatprep.mubr.f32.mxu0 %v3073
        %3222 = vmatmul.mubr.f32.gmra.mxu0 %v3072
        %v3223 = vpop.f32.mrf.mxu0
        %v3224 = vadd.f32 %v3147, %v3223
        %v3225 = vpop.f32.mrf.mxu0
        %v3226 = vadd.f32 %v3149, %v3225
        %3227 = vdwg.mxu0
        %v3229 = vlaneseq
        %v3230 = vshrl.u32 %v3229, 7
        %v3231 = vsub.s32 0, %v3230
        %v3232 = vrot.slane %v3065, %v3231
        %v3233 = vlaneseq
        %v3234 = vshrl.u32 %v3233, 7
        %v3235 = vsub.s32 1, %v3234
        %v3236 = vrot.slane %v3065, %v3235
        %v3239 = vadd.f32 %v3218, %v3232
        %v3240 = vadd.f32 %v3220, %v3236
        %v3241 = vld [vmem:[%s478] sm:$0xff]
        %v3242 = vld [vmem:[%s478 + $0x8] sm:$0xff]
        %v3243 = vmul.f32 %v3224, %v3241
        %v3244 = vmul.f32 %v3226, %v3242
        %v3245 = vadd.f32 %v3239, %v3243
        %v3246 = vadd.f32 %v3240, %v3244
        %3247 = vst [vmem:[%s484] sm:$0xff] %v3245
        %3248 = vst [vmem:[%s484 + $0x8] sm:$0xff] %v3246
        %s3249 = smul.u32 2, %s25
        %p3250 = scmp.lt.s32.totalorder %s3249, 3
        %s3251 = scalar_select %p3250, %s3249, 3
        %s3252 = smul.addr %s3251, 8
        %s3253 = scalar_lea.vmem %s8, %s3252
        // Predicated region
        $region65: #{fwd.2} parent=51 // pred_check
          %p3254 = pneg %p246
        $region66: #{fwd.2} parent=51 // pred_check_branch
          %3256 = sbr.rel (%p3254) target = $region68
        $region67: #{fwd.2} parent=51 // pred_region
          %s3257 = smul.u32 2, %s25
        $region68: #{fwd.2} parent=51 // pred_fallthru
          _
      $region52: #{fwd.2} parent=5 // pred_fallthru
        _
      %p3258 = scmp.le.s32.totalorder 2, %s20
      // Predicated region
      $region69: #{fwd.2} parent=5 // pred_check
        %p3259 = pneg %p3258
      $region70: #{fwd.2} parent=5 // pred_check_branch
        %3261 = sbr.rel (%p3259) target = $region72
      $region71: #{fwd.2} parent=5 // pred_region
        %s3262 = ssub.s32 %s20, 2
        // Predicated region
        $region73: #{fwd.2} parent=71 // pred_check
          %p3263 = pneg %p252
        $region74: #{fwd.2} parent=71 // pred_check_branch
          %3265 = sbr.rel (%p3263) target = $region76
        $region75: #{fwd.2} parent=71 // pred_region
          %s3266 = smul.u32 2, %s26
          %p3267 = scmp.lt.s32.totalorder %s3266, 3
          %s3268 = scalar_select %p3267, %s3266, 3
          %s3269 = smul.addr %s3268, 8
          %s3270 = scalar_lea.vmem %s8, %s3269
        $region76: #{fwd.2} parent=71 // pred_fallthru
          _
      $region72: #{fwd.2} parent=5 // pred_fallthru
        _
    $region6: #{fwd.2} parent=1 // loop_footer
      %s24 = sadd.s32 1, %s20
    $region7: #{fwd.2} parent=1 // loop_footer_branch
      %19 = sbr.rel target = $region3
    $region8: #{fwd.2} parent=1 // loop_exit
      _
    %3271 = vsyncpa [#allocation3], 1
    %s3272 = scalar_lea.sflag [#allocation3], 1
    %3273 = vsyncpa %s3272, 1
    %3274 = vsyncpa [#allocation5], 1
    %s3275 = scalar_lea.sflag [#allocation5], 1
    %3276 = vsyncpa %s3275, 1

</llo_original>
